<compile_context>
chip_gen: v5e
topology: v5e:2x2
jax: 0.10.0
libtpu: 0.0.40
codegen_flags: <defaults>
</compile_context>

<pallas_src>
import functools

import jax
import jax.numpy as jnp
from jax.experimental import pallas as pl
from jax.experimental.pallas import tpu as pltpu


def _round_up(x, m):
    return -(-x // m) * m


# ----------------------------------------------------------------------------
# Pallas kernels
# ----------------------------------------------------------------------------
def _conv_bn_relu_kernel(x_ref, w_ref, g_ref, b_ref, o_ref,
                         sum_ref, sq_ref, *, inv_m):
    """Fused im2col-GEMM + BatchNorm(training stats) + ReLU.

    grid = (2, n_m_tiles).  Pass 0 accumulates per-channel sum / sum-of-
    squares of the conv output in VMEM scratch; pass 1 recomputes the GEMM
    tile and applies normalization + ReLU.  Conv bias omitted (cancelled by
    the BatchNorm mean subtraction).
    """
    p = pl.program_id(0)
    i = pl.program_id(1)

    # bf16 operands, f32 accumulation on the MXU.
    acc = jnp.dot(x_ref[...], w_ref[...], preferred_element_type=jnp.float32)

    @pl.when((p == 0) & (i == 0))
    def _init():
        sum_ref[...] = jnp.zeros_like(sum_ref)
        sq_ref[...] = jnp.zeros_like(sq_ref)

    @pl.when(p == 0)
    def _stats():
        # Zero-padded rows / K-columns / OC-columns contribute exactly 0
        # (no bias), so sums over padded tiles equal sums over real rows.
        sum_ref[...] += jnp.sum(acc, axis=0, keepdims=True)
        sq_ref[...] += jnp.sum(acc * acc, axis=0, keepdims=True)
        o_ref[...] = jnp.zeros_like(o_ref)   # placeholder; overwritten pass 1

    @pl.when(p == 1)
    def _apply():
        mean = sum_ref[...] * inv_m
        var = jnp.maximum(sq_ref[...] * inv_m - mean * mean, 0.0)
        inv = jax.lax.rsqrt(var + 1e-5)      # EUP; BN math stays f32
        y = (acc - mean) * (inv * g_ref[...]) + b_ref[...]
        o_ref[...] = jnp.maximum(y, 0.0)


def _fc_kernel(x_ref, w_ref, b_ref, o_ref):
    # 1-wide linear head: broadcast multiply + row reduction (VPU + XLU),
    # not an MXU matmul (output lane width 1 would waste the MXU).
    prod = x_ref[...] * w_ref[...]
    o_ref[...] = jnp.sum(prod, axis=-1, keepdims=True) + b_ref[...]


# ----------------------------------------------------------------------------
# Pallas wrappers
# ----------------------------------------------------------------------------
def pallas_conv_bn_relu(patches, w_mat, gamma, beta, m_true, tm_cap=512):
    """patches: (M, K) bf16, w_mat: (K, OC) bf16, gamma/beta: (OC,) f32."""
    M, K = patches.shape
    _, OC = w_mat.shape

    K_pad = _round_up(K, 128)
    OC_pad = _round_up(OC, 128)
    tm = min(tm_cap, _round_up(M, 8))
    M_pad = _round_up(M, tm)
    n_tiles = M_pad // tm

    x = jnp.pad(patches, ((0, M_pad - M), (0, K_pad - K)))
    w = jnp.pad(w_mat, ((0, K_pad - K), (0, OC_pad - OC)))
    g = jnp.pad(gamma.reshape(1, OC).astype(jnp.float32),
                ((0, 0), (0, OC_pad - OC)))
    b = jnp.pad(beta.reshape(1, OC).astype(jnp.float32),
                ((0, 0), (0, OC_pad - OC)))

    kernel = functools.partial(_conv_bn_relu_kernel, inv_m=1.0 / float(m_true))

    out = pl.pallas_call(
        kernel,
        out_shape=jax.ShapeDtypeStruct((M_pad, OC_pad), jnp.float32),
        grid_spec=pltpu.PrefetchScalarGridSpec(
            num_scalar_prefetch=0,
            grid=(2, n_tiles),
            in_specs=[
                pl.BlockSpec((tm, K_pad), lambda p, i: (i, 0)),
                pl.BlockSpec((K_pad, OC_pad), lambda p, i: (0, 0)),
                pl.BlockSpec((1, OC_pad), lambda p, i: (0, 0)),
                pl.BlockSpec((1, OC_pad), lambda p, i: (0, 0)),
            ],
            out_specs=pl.BlockSpec((tm, OC_pad), lambda p, i: (i, 0)),
            scratch_shapes=[pltpu.VMEM((1, OC_pad), jnp.float32),
                            pltpu.VMEM((1, OC_pad), jnp.float32)],
        ),
        compiler_params=pltpu.CompilerParams(
            # Stats accumulate across both grid axes -> keep sequential.
            dimension_semantics=("arbitrary", "arbitrary"),
            vmem_limit_bytes=48 * 1024 * 1024,
        ),
    )(x, w, g, b)
    return out[:M, :OC]


def pallas_fc(x, w_row, bias):
    """x: (N, F) f32, w_row: (1, F) f32, bias: (1, 1) f32 -> (N, 1) f32."""
    n, _ = x.shape
    return pl.pallas_call(
        _fc_kernel,
        out_shape=jax.ShapeDtypeStruct((n, 1), jnp.float32),
    )(x, w_row, bias)


# ----------------------------------------------------------------------------
# Glue: NHWC im2col, spectral norm
# ----------------------------------------------------------------------------
def im2col_nhwc(x, k=5, stride=2, pad=2):
    """x: (N, H, W, C) -> (patches (N*OH*OW, k*k*C) bf16, OH, OW).

    Column order is (kh, kw, c), matching a conv weight permuted to
    (KH, KW, C, OC) and flattened.  No activation transpose needed.
    """
    n, h, w, c = x.shape
    oh = (h + 2 * pad - k) // stride + 1
    ow = (w + 2 * pad - k) // stride + 1
    xp = jnp.pad(x.astype(jnp.bfloat16),
                 ((0, 0), (pad, pad), (pad, pad), (0, 0)))
    cols = []
    for kh in range(k):
        for kw in range(k):
            cols.append(xp[:, kh:kh + stride * oh:stride,
                              kw:kw + stride * ow:stride, :])
    p = jnp.concatenate(cols, axis=-1)          # (N, OH, OW, k*k*C)
    return p.reshape(n * oh * ow, k * k * c), oh, ow


def spectral_normalize(w, key, n_iter=30):
    """Divide conv weight by its largest singular value (SN semantics)."""
    w_mat = w.reshape(w.shape[0], -1)
    u = jax.random.normal(key, (w_mat.shape[0],), dtype=jnp.float32)
    u = u / (jnp.linalg.norm(u) + 1e-12)
    v = None
    for _ in range(n_iter):
        v = w_mat.T @ u
        v = v / (jnp.linalg.norm(v) + 1e-12)
        u = w_mat @ v
        u = u / (jnp.linalg.norm(u) + 1e-12)
    sigma = u @ (w_mat @ v)
    return w / sigma


# ----------------------------------------------------------------------------
# Discriminator params + forward
# ----------------------------------------------------------------------------
def init_params(key, in_size):
    in_c = in_size[0]
    channels = [64, 128, 256]
    keys = jax.random.split(key, 8)
    params = {"convs": []}
    prev_c = in_c
    ki = 0
    for oc in channels:
        w = 0.05 * jax.random.normal(keys[ki], (oc, prev_c, 5, 5), jnp.float32)
        w = spectral_normalize(w, keys[ki + 1])
        # Conv bias dropped: cancelled exactly by the training-mode BatchNorm.
        gamma = jnp.ones((oc,), jnp.float32)
        beta = jnp.zeros((oc,), jnp.float32)
        params["convs"].append((w, gamma, beta))
        prev_c = oc
        ki += 2
    # spatial size after three stride-2 convs with padding=2, k=5
    h, w_ = in_size[1], in_size[2]
    for _ in range(3):
        h = (h + 2 * 2 - 5) // 2 + 1
        w_ = (w_ + 2 * 2 - 5) // 2 + 1
    num_features = channels[-1] * h * w_
    params["fc_w"] = 0.05 * jax.random.normal(
        keys[ki], (1, num_features), jnp.float32)
    params["fc_b"] = 0.01 * jax.random.normal(keys[ki + 1], (1,), jnp.float32)
    return params


@jax.jit
def discriminator_forward(x, params):
    n = x.shape[0]
    z = jnp.transpose(x, (0, 2, 3, 1))              # NCHW -> NHWC once
    for (w, gamma, beta) in params["convs"]:
        oc = w.shape[0]
        patches, oh, ow = im2col_nhwc(z)            # (M, k*k*C) bf16
        # (OC, C, KH, KW) -> (KH, KW, C, OC) -> (K, OC); weight permuted once
        w_mat = w.transpose(2, 3, 1, 0).reshape(-1, oc).astype(jnp.bfloat16)
        out = pallas_conv_bn_relu(patches, w_mat, gamma, beta,
                                  m_true=patches.shape[0])
        z = out.reshape(n, oh, ow, oc)              # stays NHWC, no transpose
    # FC head: permute the (tiny) FC weight from PyTorch NCHW-flatten order
    # to NHWC-flatten order instead of transposing the activation.
    _, oh, ow, oc = z.shape
    flat = z.reshape(n, -1)
    fc_w = params["fc_w"].reshape(1, oc, oh, ow)
    fc_w = fc_w.transpose(0, 2, 3, 1).reshape(1, -1)
    y = pallas_fc(flat, fc_w, params["fc_b"].reshape(1, 1))
    return y


if __name__ == "__main__":
    key = jax.random.PRNGKey(0)
    k_param, k_x = jax.random.split(key)

    in_size = (4, 16, 16)   # (C, H, W)
    batch = 2
    params = init_params(k_param, in_size)
    x = jax.random.normal(k_x, (batch,) + in_size, dtype=jnp.float32)

    y = discriminator_forward(x, params)
    y = jax.block_until_ready(y)
    assert y.shape == (batch, 1), y.shape
    assert bool(jnp.all(jnp.isfinite(y)))
    print("KERNEL_OK")
</pallas_src>

<mosaic_0001>
module attributes {stable_mosaic.version = 11 : i64} {
  func.func @_conv_bn_relu_kernel(%arg0: i32, %arg1: i32, %arg2: memref<128x128xbf16, #tpu.memory_space<vmem>>, %arg3: memref<128x128xbf16, #tpu.memory_space<vmem>>, %arg4: memref<1x128xf32, #tpu.memory_space<vmem>>, %arg5: memref<1x128xf32, #tpu.memory_space<vmem>>, %arg6: memref<128x128xf32, #tpu.memory_space<vmem>>, %arg7: memref<1x128xf32, #tpu.memory_space<vmem>>, %arg8: memref<1x128xf32, #tpu.memory_space<vmem>>) attributes {dimension_semantics = [#tpu.dimension_semantics<arbitrary>, #tpu.dimension_semantics<arbitrary>], iteration_bounds = array<i64: 2, 1>, scalar_prefetch = 0 : i64, scratch_operands = 2 : i64, tpu.core_type = #tpu.core_type<tc>, window_params = [{transform_indices = @transform_0, window_bounds = array<i64: 128, 128>}, {pipeline_mode = #tpu.pipeline_mode<synchronous>, transform_indices = @transform_1, window_bounds = array<i64: 128, 128>}, {pipeline_mode = #tpu.pipeline_mode<synchronous>, transform_indices = @transform_2, window_bounds = array<i64: 1, 128>}, {pipeline_mode = #tpu.pipeline_mode<synchronous>, transform_indices = @transform_3, window_bounds = array<i64: 1, 128>}, {transform_indices = @transform_4, window_bounds = array<i64: 128, 128>}]} {
    %c0 = arith.constant 0 : index
    %c0_0 = arith.constant 0 : index
    %0 = vector.load %arg2[%c0, %c0_0] : memref<128x128xbf16, #tpu.memory_space<vmem>>, vector<128x128xbf16>
    %c0_1 = arith.constant 0 : index
    %c0_2 = arith.constant 0 : index
    %1 = vector.load %arg3[%c0_1, %c0_2] : memref<128x128xbf16, #tpu.memory_space<vmem>>, vector<128x128xbf16>
    %cst = arith.constant dense<0.000000e+00> : vector<128x128xf32>
    %2 = tpu.matmul %0, %1, %cst {dimension_numbers = #tpu.dot_dimension_numbers<[1], [0], [0], [1], [0, 0, 1, 1], [], []>} : vector<128x128xbf16>, vector<128x128xbf16>, vector<128x128xf32> -> vector<128x128xf32>
    %c0_i32 = arith.constant 0 : i32
    %3 = arith.cmpi eq, %arg0, %c0_i32 : i32
    %c0_i32_3 = arith.constant 0 : i32
    %4 = arith.cmpi eq, %arg1, %c0_i32_3 : i32
    %5 = arith.andi %3, %4 : i1
    %6 = arith.extui %5 : i1 to i32
    %c0_i32_4 = arith.constant 0 : i32
    %7 = arith.cmpi ne, %6, %c0_i32_4 : i32
    scf.if %7 {
      %cst_8 = arith.constant 0.000000e+00 : f32
      %14 = vector.broadcast %cst_8 : f32 to vector<1x128xf32>
      %c0_9 = arith.constant 0 : index
      %c0_10 = arith.constant 0 : index
      %15 = vector.load %arg7[%c0_9, %c0_10] : memref<1x128xf32, #tpu.memory_space<vmem>>, vector<1x128xf32>
      tpu.vector_store %arg7[%c0_9, %c0_10], %14 {strides = array<i32>} : memref<1x128xf32, #tpu.memory_space<vmem>>, vector<1x128xf32>,
      %cst_11 = arith.constant 0.000000e+00 : f32
      %16 = vector.broadcast %cst_11 : f32 to vector<1x128xf32>
      %c0_12 = arith.constant 0 : index
      %c0_13 = arith.constant 0 : index
      %17 = vector.load %arg8[%c0_12, %c0_13] : memref<1x128xf32, #tpu.memory_space<vmem>>, vector<1x128xf32>
      tpu.vector_store %arg8[%c0_12, %c0_13], %16 {strides = array<i32>} : memref<1x128xf32, #tpu.memory_space<vmem>>, vector<1x128xf32>,
    } else {
    }
    %c0_i32_5 = arith.constant 0 : i32
    %8 = arith.cmpi eq, %arg0, %c0_i32_5 : i32
    %9 = arith.extui %8 : i1 to i32
    %c0_i32_6 = arith.constant 0 : i32
    %10 = arith.cmpi ne, %9, %c0_i32_6 : i32
    scf.if %10 {
      %c0_8 = arith.constant 0 : index
      %c0_9 = arith.constant 0 : index
      %14 = vector.load %arg7[%c0_8, %c0_9] : memref<1x128xf32, #tpu.memory_space<vmem>>, vector<1x128xf32>
      %cst_10 = arith.constant dense<0.000000e+00> : vector<128xf32>
      %15 = vector.multi_reduction <add>, %2, %cst_10 [0] : vector<128x128xf32> to vector<128xf32>
      %16 = vector.shape_cast %15 : vector<128xf32> to vector<1x128xf32>
      %17 = arith.addf %14, %16 : vector<1x128xf32>
      %c0_11 = arith.constant 0 : index
      %c0_12 = arith.constant 0 : index
      %18 = vector.load %arg7[%c0_11, %c0_12] : memref<1x128xf32, #tpu.memory_space<vmem>>, vector<1x128xf32>
      tpu.vector_store %arg7[%c0_11, %c0_12], %17 {strides = array<i32>} : memref<1x128xf32, #tpu.memory_space<vmem>>, vector<1x128xf32>,
      %c0_13 = arith.constant 0 : index
      %c0_14 = arith.constant 0 : index
      %19 = vector.load %arg8[%c0_13, %c0_14] : memref<1x128xf32, #tpu.memory_space<vmem>>, vector<1x128xf32>
      %20 = arith.mulf %2, %2 : vector<128x128xf32>
      %cst_15 = arith.constant dense<0.000000e+00> : vector<128xf32>
      %21 = vector.multi_reduction <add>, %20, %cst_15 [0] : vector<128x128xf32> to vector<128xf32>
      %22 = vector.shape_cast %21 : vector<128xf32> to vector<1x128xf32>
      %23 = arith.addf %19, %22 : vector<1x128xf32>
      %c0_16 = arith.constant 0 : index
      %c0_17 = arith.constant 0 : index
      %24 = vector.load %arg8[%c0_16, %c0_17] : memref<1x128xf32, #tpu.memory_space<vmem>>, vector<1x128xf32>
      tpu.vector_store %arg8[%c0_16, %c0_17], %23 {strides = array<i32>} : memref<1x128xf32, #tpu.memory_space<vmem>>, vector<1x128xf32>,
      %cst_18 = arith.constant 0.000000e+00 : f32
      %25 = vector.broadcast %cst_18 : f32 to vector<128x128xf32>
      %c0_19 = arith.constant 0 : index
      %c0_20 = arith.constant 0 : index
      %26 = vector.load %arg6[%c0_19, %c0_20] : memref<128x128xf32, #tpu.memory_space<vmem>>, vector<128x128xf32>
      tpu.vector_store %arg6[%c0_19, %c0_20], %25 {strides = array<i32>} : memref<128x128xf32, #tpu.memory_space<vmem>>, vector<128x128xf32>,
    } else {
    }
    %c1_i32 = arith.constant 1 : i32
    %11 = arith.cmpi eq, %arg0, %c1_i32 : i32
    %12 = arith.extui %11 : i1 to i32
    %c0_i32_7 = arith.constant 0 : i32
    %13 = arith.cmpi ne, %12, %c0_i32_7 : i32
    scf.if %13 {
      %c0_8 = arith.constant 0 : index
      %c0_9 = arith.constant 0 : index
      %14 = vector.load %arg7[%c0_8, %c0_9] : memref<1x128xf32, #tpu.memory_space<vmem>>, vector<1x128xf32>
      %cst_10 = arith.constant 7.812500e-03 : f32
      %15 = vector.broadcast %cst_10 : f32 to vector<1x128xf32>
      %16 = arith.mulf %14, %15 : vector<1x128xf32>
      %c0_11 = arith.constant 0 : index
      %c0_12 = arith.constant 0 : index
      %17 = vector.load %arg8[%c0_11, %c0_12] : memref<1x128xf32, #tpu.memory_space<vmem>>, vector<1x128xf32>
      %cst_13 = arith.constant 7.812500e-03 : f32
      %18 = vector.broadcast %cst_13 : f32 to vector<1x128xf32>
      %19 = arith.mulf %17, %18 : vector<1x128xf32>
      %20 = arith.mulf %16, %16 : vector<1x128xf32>
      %21 = arith.subf %19, %20 : vector<1x128xf32>
      %cst_14 = arith.constant 0.000000e+00 : f32
      %22 = vector.broadcast %cst_14 : f32 to vector<1x128xf32>
      %23 = arith.maximumf %21, %22 : vector<1x128xf32>
      %cst_15 = arith.constant 9.99999974E-6 : f32
      %24 = vector.broadcast %cst_15 : f32 to vector<1x128xf32>
      %25 = arith.addf %23, %24 : vector<1x128xf32>
      %26 = math.rsqrt %25 : vector<1x128xf32>
      %27 = vector.broadcast %16 : vector<1x128xf32> to vector<128x128xf32>
      %28 = arith.subf %2, %27 : vector<128x128xf32>
      %c0_16 = arith.constant 0 : index
      %c0_17 = arith.constant 0 : index
      %29 = vector.load %arg4[%c0_16, %c0_17] : memref<1x128xf32, #tpu.memory_space<vmem>>, vector<1x128xf32>
      %30 = arith.mulf %26, %29 : vector<1x128xf32>
      %31 = vector.broadcast %30 : vector<1x128xf32> to vector<128x128xf32>
      %32 = arith.mulf %28, %31 : vector<128x128xf32>
      %c0_18 = arith.constant 0 : index
      %c0_19 = arith.constant 0 : index
      %33 = vector.load %arg5[%c0_18, %c0_19] : memref<1x128xf32, #tpu.memory_space<vmem>>, vector<1x128xf32>
      %34 = vector.broadcast %33 : vector<1x128xf32> to vector<128x128xf32>
      %35 = arith.addf %32, %34 : vector<128x128xf32>
      %cst_20 = arith.constant 0.000000e+00 : f32
      %36 = vector.broadcast %cst_20 : f32 to vector<128x128xf32>
      %37 = arith.maximumf %35, %36 : vector<128x128xf32>
      %c0_21 = arith.constant 0 : index
      %c0_22 = arith.constant 0 : index
      %38 = vector.load %arg6[%c0_21, %c0_22] : memref<128x128xf32, #tpu.memory_space<vmem>>, vector<128x128xf32>
      tpu.vector_store %arg6[%c0_21, %c0_22], %37 {strides = array<i32>} : memref<128x128xf32, #tpu.memory_space<vmem>>, vector<128x128xf32>,
    } else {
    }
    return
  }
  func.func @transform_0(%arg0: i32, %arg1: i32) -> (i32, i32) {
    %c0_i32 = arith.constant 0 : i32
    %c0_i32_0 = arith.constant 0 : i32
    return %arg1, %c0_i32 : i32, i32
  }
  func.func @transform_1(%arg0: i32, %arg1: i32) -> (i32, i32) {
    %c0_i32 = arith.constant 0 : i32
    %c0_i32_0 = arith.constant 0 : i32
    %c0_i32_1 = arith.constant 0 : i32
    return %c0_i32, %c0_i32_0 : i32, i32
  }
  func.func @transform_2(%arg0: i32, %arg1: i32) -> (i32, i32) {
    %c0_i32 = arith.constant 0 : i32
    %c0_i32_0 = arith.constant 0 : i32
    %c0_i32_1 = arith.constant 0 : i32
    return %c0_i32, %c0_i32_0 : i32, i32
  }
  func.func @transform_3(%arg0: i32, %arg1: i32) -> (i32, i32) {
    %c0_i32 = arith.constant 0 : i32
    %c0_i32_0 = arith.constant 0 : i32
    %c0_i32_1 = arith.constant 0 : i32
    return %c0_i32, %c0_i32_0 : i32, i32
  }
  func.func @transform_4(%arg0: i32, %arg1: i32) -> (i32, i32) {
    %c0_i32 = arith.constant 0 : i32
    %c0_i32_0 = arith.constant 0 : i32
    return %arg1, %c0_i32 : i32, i32
  }
}

module attributes {stable_mosaic.version = 11 : i64} {
  func.func @_conv_bn_relu_kernel(%arg0: i32, %arg1: i32, %arg2: memref<32x1664xbf16, #tpu.memory_space<vmem>>, %arg3: memref<1664x128xbf16, #tpu.memory_space<vmem>>, %arg4: memref<1x128xf32, #tpu.memory_space<vmem>>, %arg5: memref<1x128xf32, #tpu.memory_space<vmem>>, %arg6: memref<32x128xf32, #tpu.memory_space<vmem>>, %arg7: memref<1x128xf32, #tpu.memory_space<vmem>>, %arg8: memref<1x128xf32, #tpu.memory_space<vmem>>) attributes {dimension_semantics = [#tpu.dimension_semantics<arbitrary>, #tpu.dimension_semantics<arbitrary>], iteration_bounds = array<i64: 2, 1>, scalar_prefetch = 0 : i64, scratch_operands = 2 : i64, tpu.core_type = #tpu.core_type<tc>, window_params = [{transform_indices = @transform_0, window_bounds = array<i64: 32, 1664>}, {pipeline_mode = #tpu.pipeline_mode<synchronous>, transform_indices = @transform_1, window_bounds = array<i64: 1664, 128>}, {pipeline_mode = #tpu.pipeline_mode<synchronous>, transform_indices = @transform_2, window_bounds = array<i64: 1, 128>}, {pipeline_mode = #tpu.pipeline_mode<synchronous>, transform_indices = @transform_3, window_bounds = array<i64: 1, 128>}, {transform_indices = @transform_4, window_bounds = array<i64: 32, 128>}]} {
    %c0 = arith.constant 0 : index
    %c0_0 = arith.constant 0 : index
    %0 = vector.load %arg2[%c0, %c0_0] : memref<32x1664xbf16, #tpu.memory_space<vmem>>, vector<32x1664xbf16>
    %c0_1 = arith.constant 0 : index
    %c0_2 = arith.constant 0 : index
    %1 = vector.load %arg3[%c0_1, %c0_2] : memref<1664x128xbf16, #tpu.memory_space<vmem>>, vector<1664x128xbf16>
    %cst = arith.constant dense<0.000000e+00> : vector<32x128xf32>
    %2 = tpu.matmul %0, %1, %cst {dimension_numbers = #tpu.dot_dimension_numbers<[1], [0], [0], [1], [0, 0, 1, 1], [], []>} : vector<32x1664xbf16>, vector<1664x128xbf16>, vector<32x128xf32> -> vector<32x128xf32>
    %c0_i32 = arith.constant 0 : i32
    %3 = arith.cmpi eq, %arg0, %c0_i32 : i32
    %c0_i32_3 = arith.constant 0 : i32
    %4 = arith.cmpi eq, %arg1, %c0_i32_3 : i32
    %5 = arith.andi %3, %4 : i1
    %6 = arith.extui %5 : i1 to i32
    %c0_i32_4 = arith.constant 0 : i32
    %7 = arith.cmpi ne, %6, %c0_i32_4 : i32
    scf.if %7 {
      %cst_8 = arith.constant 0.000000e+00 : f32
      %14 = vector.broadcast %cst_8 : f32 to vector<1x128xf32>
      %c0_9 = arith.constant 0 : index
      %c0_10 = arith.constant 0 : index
      %15 = vector.load %arg7[%c0_9, %c0_10] : memref<1x128xf32, #tpu.memory_space<vmem>>, vector<1x128xf32>
      tpu.vector_store %arg7[%c0_9, %c0_10], %14 {strides = array<i32>} : memref<1x128xf32, #tpu.memory_space<vmem>>, vector<1x128xf32>,
      %cst_11 = arith.constant 0.000000e+00 : f32
      %16 = vector.broadcast %cst_11 : f32 to vector<1x128xf32>
      %c0_12 = arith.constant 0 : index
      %c0_13 = arith.constant 0 : index
      %17 = vector.load %arg8[%c0_12, %c0_13] : memref<1x128xf32, #tpu.memory_space<vmem>>, vector<1x128xf32>
      tpu.vector_store %arg8[%c0_12, %c0_13], %16 {strides = array<i32>} : memref<1x128xf32, #tpu.memory_space<vmem>>, vector<1x128xf32>,
    } else {
    }
    %c0_i32_5 = arith.constant 0 : i32
    %8 = arith.cmpi eq, %arg0, %c0_i32_5 : i32
    %9 = arith.extui %8 : i1 to i32
    %c0_i32_6 = arith.constant 0 : i32
    %10 = arith.cmpi ne, %9, %c0_i32_6 : i32
    scf.if %10 {
      %c0_8 = arith.constant 0 : index
      %c0_9 = arith.constant 0 : index
      %14 = vector.load %arg7[%c0_8, %c0_9] : memref<1x128xf32, #tpu.memory_space<vmem>>, vector<1x128xf32>
      %cst_10 = arith.constant dense<0.000000e+00> : vector<128xf32>
      %15 = vector.multi_reduction <add>, %2, %cst_10 [0] : vector<32x128xf32> to vector<128xf32>
      %16 = vector.shape_cast %15 : vector<128xf32> to vector<1x128xf32>
      %17 = arith.addf %14, %16 : vector<1x128xf32>
      %c0_11 = arith.constant 0 : index
      %c0_12 = arith.constant 0 : index
      %18 = vector.load %arg7[%c0_11, %c0_12] : memref<1x128xf32, #tpu.memory_space<vmem>>, vector<1x128xf32>
      tpu.vector_store %arg7[%c0_11, %c0_12], %17 {strides = array<i32>} : memref<1x128xf32, #tpu.memory_space<vmem>>, vector<1x128xf32>,
      %c0_13 = arith.constant 0 : index
      %c0_14 = arith.constant 0 : index
      %19 = vector.load %arg8[%c0_13, %c0_14] : memref<1x128xf32, #tpu.memory_space<vmem>>, vector<1x128xf32>
      %20 = arith.mulf %2, %2 : vector<32x128xf32>
      %cst_15 = arith.constant dense<0.000000e+00> : vector<128xf32>
      %21 = vector.multi_reduction <add>, %20, %cst_15 [0] : vector<32x128xf32> to vector<128xf32>
      %22 = vector.shape_cast %21 : vector<128xf32> to vector<1x128xf32>
      %23 = arith.addf %19, %22 : vector<1x128xf32>
      %c0_16 = arith.constant 0 : index
      %c0_17 = arith.constant 0 : index
      %24 = vector.load %arg8[%c0_16, %c0_17] : memref<1x128xf32, #tpu.memory_space<vmem>>, vector<1x128xf32>
      tpu.vector_store %arg8[%c0_16, %c0_17], %23 {strides = array<i32>} : memref<1x128xf32, #tpu.memory_space<vmem>>, vector<1x128xf32>,
      %cst_18 = arith.constant 0.000000e+00 : f32
      %25 = vector.broadcast %cst_18 : f32 to vector<32x128xf32>
      %c0_19 = arith.constant 0 : index
      %c0_20 = arith.constant 0 : index
      %26 = vector.load %arg6[%c0_19, %c0_20] : memref<32x128xf32, #tpu.memory_space<vmem>>, vector<32x128xf32>
      tpu.vector_store %arg6[%c0_19, %c0_20], %25 {strides = array<i32>} : memref<32x128xf32, #tpu.memory_space<vmem>>, vector<32x128xf32>,
    } else {
    }
    %c1_i32 = arith.constant 1 : i32
    %11 = arith.cmpi eq, %arg0, %c1_i32 : i32
    %12 = arith.extui %11 : i1 to i32
    %c0_i32_7 = arith.constant 0 : i32
    %13 = arith.cmpi ne, %12, %c0_i32_7 : i32
    scf.if %13 {
      %c0_8 = arith.constant 0 : index
      %c0_9 = arith.constant 0 : index
      %14 = vector.load %arg7[%c0_8, %c0_9] : memref<1x128xf32, #tpu.memory_space<vmem>>, vector<1x128xf32>
      %cst_10 = arith.constant 3.125000e-02 : f32
      %15 = vector.broadcast %cst_10 : f32 to vector<1x128xf32>
      %16 = arith.mulf %14, %15 : vector<1x128xf32>
      %c0_11 = arith.constant 0 : index
      %c0_12 = arith.constant 0 : index
      %17 = vector.load %arg8[%c0_11, %c0_12] : memref<1x128xf32, #tpu.memory_space<vmem>>, vector<1x128xf32>
      %cst_13 = arith.constant 3.125000e-02 : f32
      %18 = vector.broadcast %cst_13 : f32 to vector<1x128xf32>
      %19 = arith.mulf %17, %18 : vector<1x128xf32>
      %20 = arith.mulf %16, %16 : vector<1x128xf32>
      %21 = arith.subf %19, %20 : vector<1x128xf32>
      %cst_14 = arith.constant 0.000000e+00 : f32
      %22 = vector.broadcast %cst_14 : f32 to vector<1x128xf32>
      %23 = arith.maximumf %21, %22 : vector<1x128xf32>
      %cst_15 = arith.constant 9.99999974E-6 : f32
      %24 = vector.broadcast %cst_15 : f32 to vector<1x128xf32>
      %25 = arith.addf %23, %24 : vector<1x128xf32>
      %26 = math.rsqrt %25 : vector<1x128xf32>
      %27 = vector.broadcast %16 : vector<1x128xf32> to vector<32x128xf32>
      %28 = arith.subf %2, %27 : vector<32x128xf32>
      %c0_16 = arith.constant 0 : index
      %c0_17 = arith.constant 0 : index
      %29 = vector.load %arg4[%c0_16, %c0_17] : memref<1x128xf32, #tpu.memory_space<vmem>>, vector<1x128xf32>
      %30 = arith.mulf %26, %29 : vector<1x128xf32>
      %31 = vector.broadcast %30 : vector<1x128xf32> to vector<32x128xf32>
      %32 = arith.mulf %28, %31 : vector<32x128xf32>
      %c0_18 = arith.constant 0 : index
      %c0_19 = arith.constant 0 : index
      %33 = vector.load %arg5[%c0_18, %c0_19] : memref<1x128xf32, #tpu.memory_space<vmem>>, vector<1x128xf32>
      %34 = vector.broadcast %33 : vector<1x128xf32> to vector<32x128xf32>
      %35 = arith.addf %32, %34 : vector<32x128xf32>
      %cst_20 = arith.constant 0.000000e+00 : f32
      %36 = vector.broadcast %cst_20 : f32 to vector<32x128xf32>
      %37 = arith.maximumf %35, %36 : vector<32x128xf32>
      %c0_21 = arith.constant 0 : index
      %c0_22 = arith.constant 0 : index
      %38 = vector.load %arg6[%c0_21, %c0_22] : memref<32x128xf32, #tpu.memory_space<vmem>>, vector<32x128xf32>
      tpu.vector_store %arg6[%c0_21, %c0_22], %37 {strides = array<i32>} : memref<32x128xf32, #tpu.memory_space<vmem>>, vector<32x128xf32>,
    } else {
    }
    return
  }
  func.func @transform_0(%arg0: i32, %arg1: i32) -> (i32, i32) {
    %c0_i32 = arith.constant 0 : i32
    %c0_i32_0 = arith.constant 0 : i32
    return %arg1, %c0_i32 : i32, i32
  }
  func.func @transform_1(%arg0: i32, %arg1: i32) -> (i32, i32) {
    %c0_i32 = arith.constant 0 : i32
    %c0_i32_0 = arith.constant 0 : i32
    %c0_i32_1 = arith.constant 0 : i32
    return %c0_i32, %c0_i32_0 : i32, i32
  }
  func.func @transform_2(%arg0: i32, %arg1: i32) -> (i32, i32) {
    %c0_i32 = arith.constant 0 : i32
    %c0_i32_0 = arith.constant 0 : i32
    %c0_i32_1 = arith.constant 0 : i32
    return %c0_i32, %c0_i32_0 : i32, i32
  }
  func.func @transform_3(%arg0: i32, %arg1: i32) -> (i32, i32) {
    %c0_i32 = arith.constant 0 : i32
    %c0_i32_0 = arith.constant 0 : i32
    %c0_i32_1 = arith.constant 0 : i32
    return %c0_i32, %c0_i32_0 : i32, i32
  }
  func.func @transform_4(%arg0: i32, %arg1: i32) -> (i32, i32) {
    %c0_i32 = arith.constant 0 : i32
    %c0_i32_0 = arith.constant 0 : i32
    return %arg1, %c0_i32 : i32, i32
  }
}

module attributes {stable_mosaic.version = 11 : i64} {
  func.func @_conv_bn_relu_kernel(%arg0: i32, %arg1: i32, %arg2: memref<8x3200xbf16, #tpu.memory_space<vmem>>, %arg3: memref<3200x256xbf16, #tpu.memory_space<vmem>>, %arg4: memref<1x256xf32, #tpu.memory_space<vmem>>, %arg5: memref<1x256xf32, #tpu.memory_space<vmem>>, %arg6: memref<8x256xf32, #tpu.memory_space<vmem>>, %arg7: memref<1x256xf32, #tpu.memory_space<vmem>>, %arg8: memref<1x256xf32, #tpu.memory_space<vmem>>) attributes {dimension_semantics = [#tpu.dimension_semantics<arbitrary>, #tpu.dimension_semantics<arbitrary>], iteration_bounds = array<i64: 2, 1>, scalar_prefetch = 0 : i64, scratch_operands = 2 : i64, tpu.core_type = #tpu.core_type<tc>, window_params = [{transform_indices = @transform_0, window_bounds = array<i64: 8, 3200>}, {pipeline_mode = #tpu.pipeline_mode<synchronous>, transform_indices = @transform_1, window_bounds = array<i64: 3200, 256>}, {pipeline_mode = #tpu.pipeline_mode<synchronous>, transform_indices = @transform_2, window_bounds = array<i64: 1, 256>}, {pipeline_mode = #tpu.pipeline_mode<synchronous>, transform_indices = @transform_3, window_bounds = array<i64: 1, 256>}, {transform_indices = @transform_4, window_bounds = array<i64: 8, 256>}]} {
    %c0 = arith.constant 0 : index
    %c0_0 = arith.constant 0 : index
    %0 = vector.load %arg2[%c0, %c0_0] : memref<8x3200xbf16, #tpu.memory_space<vmem>>, vector<8x3200xbf16>
    %c0_1 = arith.constant 0 : index
    %c0_2 = arith.constant 0 : index
    %1 = vector.load %arg3[%c0_1, %c0_2] : memref<3200x256xbf16, #tpu.memory_space<vmem>>, vector<3200x256xbf16>
    %cst = arith.constant dense<0.000000e+00> : vector<8x256xf32>
    %2 = tpu.matmul %0, %1, %cst {dimension_numbers = #tpu.dot_dimension_numbers<[1], [0], [0], [1], [0, 0, 1, 1], [], []>} : vector<8x3200xbf16>, vector<3200x256xbf16>, vector<8x256xf32> -> vector<8x256xf32>
    %c0_i32 = arith.constant 0 : i32
    %3 = arith.cmpi eq, %arg0, %c0_i32 : i32
    %c0_i32_3 = arith.constant 0 : i32
    %4 = arith.cmpi eq, %arg1, %c0_i32_3 : i32
    %5 = arith.andi %3, %4 : i1
    %6 = arith.extui %5 : i1 to i32
    %c0_i32_4 = arith.constant 0 : i32
    %7 = arith.cmpi ne, %6, %c0_i32_4 : i32
    scf.if %7 {
      %cst_8 = arith.constant 0.000000e+00 : f32
      %14 = vector.broadcast %cst_8 : f32 to vector<1x256xf32>
      %c0_9 = arith.constant 0 : index
      %c0_10 = arith.constant 0 : index
      %15 = vector.load %arg7[%c0_9, %c0_10] : memref<1x256xf32, #tpu.memory_space<vmem>>, vector<1x256xf32>
      tpu.vector_store %arg7[%c0_9, %c0_10], %14 {strides = array<i32>} : memref<1x256xf32, #tpu.memory_space<vmem>>, vector<1x256xf32>,
      %cst_11 = arith.constant 0.000000e+00 : f32
      %16 = vector.broadcast %cst_11 : f32 to vector<1x256xf32>
      %c0_12 = arith.constant 0 : index
      %c0_13 = arith.constant 0 : index
      %17 = vector.load %arg8[%c0_12, %c0_13] : memref<1x256xf32, #tpu.memory_space<vmem>>, vector<1x256xf32>
      tpu.vector_store %arg8[%c0_12, %c0_13], %16 {strides = array<i32>} : memref<1x256xf32, #tpu.memory_space<vmem>>, vector<1x256xf32>,
    } else {
    }
    %c0_i32_5 = arith.constant 0 : i32
    %8 = arith.cmpi eq, %arg0, %c0_i32_5 : i32
    %9 = arith.extui %8 : i1 to i32
    %c0_i32_6 = arith.constant 0 : i32
    %10 = arith.cmpi ne, %9, %c0_i32_6 : i32
    scf.if %10 {
      %c0_8 = arith.constant 0 : index
      %c0_9 = arith.constant 0 : index
      %14 = vector.load %arg7[%c0_8, %c0_9] : memref<1x256xf32, #tpu.memory_space<vmem>>, vector<1x256xf32>
      %cst_10 = arith.constant dense<0.000000e+00> : vector<256xf32>
      %15 = vector.multi_reduction <add>, %2, %cst_10 [0] : vector<8x256xf32> to vector<256xf32>
      %16 = vector.shape_cast %15 : vector<256xf32> to vector<1x256xf32>
      %17 = arith.addf %14, %16 : vector<1x256xf32>
      %c0_11 = arith.constant 0 : index
      %c0_12 = arith.constant 0 : index
      %18 = vector.load %arg7[%c0_11, %c0_12] : memref<1x256xf32, #tpu.memory_space<vmem>>, vector<1x256xf32>
      tpu.vector_store %arg7[%c0_11, %c0_12], %17 {strides = array<i32>} : memref<1x256xf32, #tpu.memory_space<vmem>>, vector<1x256xf32>,
      %c0_13 = arith.constant 0 : index
      %c0_14 = arith.constant 0 : index
      %19 = vector.load %arg8[%c0_13, %c0_14] : memref<1x256xf32, #tpu.memory_space<vmem>>, vector<1x256xf32>
      %20 = arith.mulf %2, %2 : vector<8x256xf32>
      %cst_15 = arith.constant dense<0.000000e+00> : vector<256xf32>
      %21 = vector.multi_reduction <add>, %20, %cst_15 [0] : vector<8x256xf32> to vector<256xf32>
      %22 = vector.shape_cast %21 : vector<256xf32> to vector<1x256xf32>
      %23 = arith.addf %19, %22 : vector<1x256xf32>
      %c0_16 = arith.constant 0 : index
      %c0_17 = arith.constant 0 : index
      %24 = vector.load %arg8[%c0_16, %c0_17] : memref<1x256xf32, #tpu.memory_space<vmem>>, vector<1x256xf32>
      tpu.vector_store %arg8[%c0_16, %c0_17], %23 {strides = array<i32>} : memref<1x256xf32, #tpu.memory_space<vmem>>, vector<1x256xf32>,
      %cst_18 = arith.constant 0.000000e+00 : f32
      %25 = vector.broadcast %cst_18 : f32 to vector<8x256xf32>
      %c0_19 = arith.constant 0 : index
      %c0_20 = arith.constant 0 : index
      %26 = vector.load %arg6[%c0_19, %c0_20] : memref<8x256xf32, #tpu.memory_space<vmem>>, vector<8x256xf32>
      tpu.vector_store %arg6[%c0_19, %c0_20], %25 {strides = array<i32>} : memref<8x256xf32, #tpu.memory_space<vmem>>, vector<8x256xf32>,
    } else {
    }
    %c1_i32 = arith.constant 1 : i32
    %11 = arith.cmpi eq, %arg0, %c1_i32 : i32
    %12 = arith.extui %11 : i1 to i32
    %c0_i32_7 = arith.constant 0 : i32
    %13 = arith.cmpi ne, %12, %c0_i32_7 : i32
    scf.if %13 {
      %c0_8 = arith.constant 0 : index
      %c0_9 = arith.constant 0 : index
      %14 = vector.load %arg7[%c0_8, %c0_9] : memref<1x256xf32, #tpu.memory_space<vmem>>, vector<1x256xf32>
      %cst_10 = arith.constant 1.250000e-01 : f32
      %15 = vector.broadcast %cst_10 : f32 to vector<1x256xf32>
      %16 = arith.mulf %14, %15 : vector<1x256xf32>
      %c0_11 = arith.constant 0 : index
      %c0_12 = arith.constant 0 : index
      %17 = vector.load %arg8[%c0_11, %c0_12] : memref<1x256xf32, #tpu.memory_space<vmem>>, vector<1x256xf32>
      %cst_13 = arith.constant 1.250000e-01 : f32
      %18 = vector.broadcast %cst_13 : f32 to vector<1x256xf32>
      %19 = arith.mulf %17, %18 : vector<1x256xf32>
      %20 = arith.mulf %16, %16 : vector<1x256xf32>
      %21 = arith.subf %19, %20 : vector<1x256xf32>
      %cst_14 = arith.constant 0.000000e+00 : f32
      %22 = vector.broadcast %cst_14 : f32 to vector<1x256xf32>
      %23 = arith.maximumf %21, %22 : vector<1x256xf32>
      %cst_15 = arith.constant 9.99999974E-6 : f32
      %24 = vector.broadcast %cst_15 : f32 to vector<1x256xf32>
      %25 = arith.addf %23, %24 : vector<1x256xf32>
      %26 = math.rsqrt %25 : vector<1x256xf32>
      %27 = vector.broadcast %16 : vector<1x256xf32> to vector<8x256xf32>
      %28 = arith.subf %2, %27 : vector<8x256xf32>
      %c0_16 = arith.constant 0 : index
      %c0_17 = arith.constant 0 : index
      %29 = vector.load %arg4[%c0_16, %c0_17] : memref<1x256xf32, #tpu.memory_space<vmem>>, vector<1x256xf32>
      %30 = arith.mulf %26, %29 : vector<1x256xf32>
      %31 = vector.broadcast %30 : vector<1x256xf32> to vector<8x256xf32>
      %32 = arith.mulf %28, %31 : vector<8x256xf32>
      %c0_18 = arith.constant 0 : index
      %c0_19 = arith.constant 0 : index
      %33 = vector.load %arg5[%c0_18, %c0_19] : memref<1x256xf32, #tpu.memory_space<vmem>>, vector<1x256xf32>
      %34 = vector.broadcast %33 : vector<1x256xf32> to vector<8x256xf32>
      %35 = arith.addf %32, %34 : vector<8x256xf32>
      %cst_20 = arith.constant 0.000000e+00 : f32
      %36 = vector.broadcast %cst_20 : f32 to vector<8x256xf32>
      %37 = arith.maximumf %35, %36 : vector<8x256xf32>
      %c0_21 = arith.constant 0 : index
      %c0_22 = arith.constant 0 : index
      %38 = vector.load %arg6[%c0_21, %c0_22] : memref<8x256xf32, #tpu.memory_space<vmem>>, vector<8x256xf32>
      tpu.vector_store %arg6[%c0_21, %c0_22], %37 {strides = array<i32>} : memref<8x256xf32, #tpu.memory_space<vmem>>, vector<8x256xf32>,
    } else {
    }
    return
  }
  func.func @transform_0(%arg0: i32, %arg1: i32) -> (i32, i32) {
    %c0_i32 = arith.constant 0 : i32
    %c0_i32_0 = arith.constant 0 : i32
    return %arg1, %c0_i32 : i32, i32
  }
  func.func @transform_1(%arg0: i32, %arg1: i32) -> (i32, i32) {
    %c0_i32 = arith.constant 0 : i32
    %c0_i32_0 = arith.constant 0 : i32
    %c0_i32_1 = arith.constant 0 : i32
    return %c0_i32, %c0_i32_0 : i32, i32
  }
  func.func @transform_2(%arg0: i32, %arg1: i32) -> (i32, i32) {
    %c0_i32 = arith.constant 0 : i32
    %c0_i32_0 = arith.constant 0 : i32
    %c0_i32_1 = arith.constant 0 : i32
    return %c0_i32, %c0_i32_0 : i32, i32
  }
  func.func @transform_3(%arg0: i32, %arg1: i32) -> (i32, i32) {
    %c0_i32 = arith.constant 0 : i32
    %c0_i32_0 = arith.constant 0 : i32
    %c0_i32_1 = arith.constant 0 : i32
    return %c0_i32, %c0_i32_0 : i32, i32
  }
  func.func @transform_4(%arg0: i32, %arg1: i32) -> (i32, i32) {
    %c0_i32 = arith.constant 0 : i32
    %c0_i32_0 = arith.constant 0 : i32
    return %arg1, %c0_i32 : i32, i32
  }
}

module attributes {stable_mosaic.version = 11 : i64} {
  func.func @_fc_kernel(%arg0: memref<2x1024xf32, #tpu.memory_space<vmem>>, %arg1: memref<1x1024xf32, #tpu.memory_space<vmem>>, %arg2: memref<1x1xf32, #tpu.memory_space<vmem>>, %arg3: memref<2x1xf32, #tpu.memory_space<vmem>>) attributes {dimension_semantics = [], scalar_prefetch = 0 : i64, scratch_operands = 0 : i64, tpu.core_type = #tpu.core_type<tc>} {
    %c0 = arith.constant 0 : index
    %c0_0 = arith.constant 0 : index
    %0 = vector.load %arg0[%c0, %c0_0] : memref<2x1024xf32, #tpu.memory_space<vmem>>, vector<2x1024xf32>
    %c0_1 = arith.constant 0 : index
    %c0_2 = arith.constant 0 : index
    %1 = vector.load %arg1[%c0_1, %c0_2] : memref<1x1024xf32, #tpu.memory_space<vmem>>, vector<1x1024xf32>
    %2 = vector.broadcast %1 : vector<1x1024xf32> to vector<2x1024xf32>
    %3 = arith.mulf %0, %2 : vector<2x1024xf32>
    %cst = arith.constant dense<0.000000e+00> : vector<2xf32>
    %4 = vector.multi_reduction <add>, %3, %cst [1] : vector<2x1024xf32> to vector<2xf32>
    %5 = vector.shape_cast %4 : vector<2xf32> to vector<2x1xf32>
    %c0_3 = arith.constant 0 : index
    %c0_4 = arith.constant 0 : index
    %6 = vector.load %arg2[%c0_3, %c0_4] : memref<1x1xf32, #tpu.memory_space<vmem>>, vector<1x1xf32>
    %7 = vector.broadcast %6 : vector<1x1xf32> to vector<2x1xf32>
    %8 = arith.addf %5, %7 : vector<2x1xf32>
    %c0_5 = arith.constant 0 : index
    %c0_6 = arith.constant 0 : index
    %9 = vector.load %arg3[%c0_5, %c0_6] : memref<2x1xf32, #tpu.memory_space<vmem>>, vector<2x1xf32>
    tpu.vector_store %arg3[%c0_5, %c0_6], %8 {strides = array<i32>} : memref<2x1xf32, #tpu.memory_space<vmem>>, vector<2x1xf32>,
    return
  }
}

</mosaic_0001>

<llo_original>
// kernel: discriminator_forward.4
$region0: #{discriminator_forward.4}
  #allocation0 [shape = 'u32[]', space=smem, size = 0x4, offset = 0x4, fixed_abs, tag = 'smem constant byte address 0x4 - core index']
  #allocation1 [shape = 'u32[72,128]{1,0:T(1,128)}', space=vmem, size = 0x9000, scoped, tag = 'internal scratch']
  #allocation2 [shape = 'f32[1,128]{1,0:T(1,128)}', space=vmem, size = 0x200, scoped, tag = 'scratch operand']
  #allocation3 [shape = 'f32[1,128]{1,0:T(1,128)}', space=vmem, size = 0x200, scoped, tag = 'scratch operand']
  %s0 = inlined_call_operand.vmem [shape: bf16[128,128], index: 0, kind: input, shape index: {}]
  %s1 = inlined_call_operand.vmem [shape: bf16[128,128], index: 1, kind: input, shape index: {}]
  %s2 = inlined_call_operand.vmem [shape: f32[1,128], index: 2, kind: input, shape index: {}]
  %s3 = inlined_call_operand.vmem [shape: f32[1,128], index: 3, kind: input, shape index: {}]
  %s4 = inlined_call_operand.vmem [shape: f32[128,128], index: 4, kind: output, shape index: {}]
  %s5 = sld [smem:[#allocation0]]
  $region61: #{discriminator_forward.4} parent=0
    _
  %s7 = ssub.s32 1, %s5
  %s8 = scalar_select 0, %s7, %s5
  loop: start=0, step=1, limit=4
  $region2: #{discriminator_forward.4} parent=0 // loop_pre_header
    _
  $region3: #{discriminator_forward.4} parent=0 // loop_header
    %s10 = sphi 0, %s14
    %p11 = scmp.ge.s32.totalorder %s10, 4
    %s17 = sphi 0, %s29
    %s18 = sphi 0, %s25
    %s19 = sphi 0, %s17
    %s20 = sphi 0, %s18
    %s21 = sphi 0, %s19
    %s22 = sphi 0, %s20
    %s32 = sphi 0, %s34
    %s35 = sphi 0, %s32
    %s36 = sphi 0, %s35
    %s52 = sphi 0, %s36
    %s56 = sphi 0, %s56
    %s58 = sphi 0, %s56
    %s59 = sphi 0, %s58
    %s73 = sphi 0, %s59
    %s77 = sphi 0, %s77
    %s79 = sphi 0, %s77
    %s80 = sphi 0, %s79
    %s94 = sphi 0, %s80
    %s98 = sphi 0, %s98
    %s100 = sphi 0, %s98
    %s101 = sphi 0, %s100
    %s115 = sphi 0, %s101
    %s121 = sphi 0, %s123
    %s124 = sphi 0, %s121
    %s125 = sphi 0, %s124
    %s141 = sphi 0, %s125
  $region4: #{discriminator_forward.4} parent=0 // loop_header_branch
    %13 = sbr.rel (%p11) target = $region8
  $region5: #{discriminator_forward.4} parent=0 // loop_body
    %s15 = ssub.s32 %s10, 1
    %s16 = ssub.s32 %s10, 2
    %s23 = sadd.s32 1, %s18
    %p24 = scmp.ge.s32.totalorder %s23, 1
    %s25 = scalar_select %p24, 0, %s23
    %s26 = sadd.s32 1, %s17
    %s27 = scalar_select %p24, %s26, %s17
    %p28 = scmp.ge.s32.totalorder %s27, 2
    %s29 = scalar_select %p28, 0, %s27
    %s30 = ssub.s32 %s18, %s25
    %p31 = scmp.eq.s32.totalorder %s30, 0
    %s33 = sadd.s32 %s32, 1
    %s34 = scalar_select %p31, %s32, %s33
    %p37 = pneg %p31
    %p38 = scmp.eq.s32.totalorder %s10, 1
    %p39 = por %p37, %p38
    %p40 = scmp.ne.s32.totalorder %s32, %s35
    %p41 = scmp.eq.s32.totalorder %s10, 0
    %p42 = por %p40, %p41
    %p43 = scmp.ne.s32.totalorder %s32, %s35
    %p44 = scmp.eq.s32.totalorder %s15, 1
    %p45 = por %p43, %p44
    %p46 = scmp.ne.s32.totalorder %s35, %s36
    %p47 = scmp.eq.s32.totalorder %s15, 0
    %p48 = por %p46, %p47
    %p49 = scmp.ne.s32.totalorder %s35, %s36
    %p50 = scmp.eq.s32.totalorder %s16, 1
    %p51 = por %p49, %p50
    %p53 = scmp.ne.s32.totalorder %s36, %s52
    %p54 = scmp.eq.s32.totalorder %s16, 0
    %p55 = por %p53, %p54
    %s57 = sadd.s32 %s56, 1
    %p60 = scmp.eq.s32.totalorder %s10, 1
    %p61 = scmp.ne.s32.totalorder %s56, %s58
    %p62 = scmp.eq.s32.totalorder %s10, 0
    %p63 = por %p61, %p62
    %p64 = scmp.ne.s32.totalorder %s56, %s58
    %p65 = scmp.eq.s32.totalorder %s15, 1
    %p66 = por %p64, %p65
    %p67 = scmp.ne.s32.totalorder %s58, %s59
    %p68 = scmp.eq.s32.totalorder %s15, 0
    %p69 = por %p67, %p68
    %p70 = scmp.ne.s32.totalorder %s58, %s59
    %p71 = scmp.eq.s32.totalorder %s16, 1
    %p72 = por %p70, %p71
    %p74 = scmp.ne.s32.totalorder %s59, %s73
    %p75 = scmp.eq.s32.totalorder %s16, 0
    %p76 = por %p74, %p75
    %s78 = sadd.s32 %s77, 1
    %p81 = scmp.eq.s32.totalorder %s10, 1
    %p82 = scmp.ne.s32.totalorder %s77, %s79
    %p83 = scmp.eq.s32.totalorder %s10, 0
    %p84 = por %p82, %p83
    %p85 = scmp.ne.s32.totalorder %s77, %s79
    %p86 = scmp.eq.s32.totalorder %s15, 1
    %p87 = por %p85, %p86
    %p88 = scmp.ne.s32.totalorder %s79, %s80
    %p89 = scmp.eq.s32.totalorder %s15, 0
    %p90 = por %p88, %p89
    %p91 = scmp.ne.s32.totalorder %s79, %s80
    %p92 = scmp.eq.s32.totalorder %s16, 1
    %p93 = por %p91, %p92
    %p95 = scmp.ne.s32.totalorder %s80, %s94
    %p96 = scmp.eq.s32.totalorder %s16, 0
    %p97 = por %p95, %p96
    %s99 = sadd.s32 %s98, 1
    %p102 = scmp.eq.s32.totalorder %s10, 1
    %p103 = scmp.ne.s32.totalorder %s98, %s100
    %p104 = scmp.eq.s32.totalorder %s10, 0
    %p105 = por %p103, %p104
    %p106 = scmp.ne.s32.totalorder %s98, %s100
    %p107 = scmp.eq.s32.totalorder %s15, 1
    %p108 = por %p106, %p107
    %p109 = scmp.ne.s32.totalorder %s100, %s101
    %p110 = scmp.eq.s32.totalorder %s15, 0
    %p111 = por %p109, %p110
    %p112 = scmp.ne.s32.totalorder %s100, %s101
    %p113 = scmp.eq.s32.totalorder %s16, 1
    %p114 = por %p112, %p113
    %p116 = scmp.ne.s32.totalorder %s101, %s115
    %p117 = scmp.eq.s32.totalorder %s16, 0
    %p118 = por %p116, %p117
    %s119 = ssub.s32 %s18, %s25
    %p120 = scmp.eq.s32.totalorder %s119, 0
    %s122 = sadd.s32 %s121, 1
    %s123 = scalar_select %p120, %s121, %s122
    %p126 = pneg %p120
    %p127 = scmp.eq.s32.totalorder %s10, 1
    %p128 = por %p126, %p127
    %p129 = scmp.ne.s32.totalorder %s121, %s124
    %p130 = scmp.eq.s32.totalorder %s10, 0
    %p131 = por %p129, %p130
    %p132 = scmp.ne.s32.totalorder %s121, %s124
    %p133 = scmp.eq.s32.totalorder %s15, 1
    %p134 = por %p132, %p133
    %p135 = scmp.ne.s32.totalorder %s124, %s125
    %p136 = scmp.eq.s32.totalorder %s15, 0
    %p137 = por %p135, %p136
    %p138 = scmp.ne.s32.totalorder %s124, %s125
    %p139 = scmp.eq.s32.totalorder %s16, 1
    %p140 = por %p138, %p139
    %p142 = scmp.ne.s32.totalorder %s125, %s141
    %p143 = scmp.eq.s32.totalorder %s16, 0
    %p144 = por %p142, %p143
    %p145 = scmp.le.s32.totalorder 1, %s10
    %p146 = scmp.lt.s32.totalorder %s10, 3
    %p147 = pnand %p145, %p146
    %p148 = pneg %p147
    // Predicated region
    $region9: #{discriminator_forward.4} parent=5 // pred_check
      _
    $region10: #{discriminator_forward.4} parent=5 // pred_check_branch
      %150 = sbr.rel (%p147) target = $region12
    $region11: #{discriminator_forward.4} parent=5 // pred_region
      %s151 = ssub.s32 %s10, 1
      // Predicated region
      $region13: #{discriminator_forward.4} parent=11 // pred_check
        %p152 = pneg %p48
      $region14: #{discriminator_forward.4} parent=11 // pred_check_branch
        %154 = sbr.rel (%p152) target = $region16
      $region15: #{discriminator_forward.4} parent=11 // pred_region
        %s155 = smul.u32 16, %s20
        %p156 = scmp.lt.s32.totalorder %s155, 15
        %s157 = scalar_select %p156, %s155, 15
        %s158 = smul.addr %s157, 4
        %s159 = scalar_lea.vmem %s0, %s158
        %s160 = smul.u32 16, %s20
      $region16: #{discriminator_forward.4} parent=11 // pred_fallthru
        _
      // Predicated region
      $region17: #{discriminator_forward.4} parent=11 // pred_check
        %p161 = pneg %p69
      $region18: #{discriminator_forward.4} parent=11 // pred_check_branch
        %163 = sbr.rel (%p161) target = $region20
      $region19: #{discriminator_forward.4} parent=11 // pred_region
        _
      $region20: #{discriminator_forward.4} parent=11 // pred_fallthru
        _
      // Predicated region
      $region21: #{discriminator_forward.4} parent=11 // pred_check
        %p164 = pneg %p90
      $region22: #{discriminator_forward.4} parent=11 // pred_check_branch
        %166 = sbr.rel (%p164) target = $region24
      $region23: #{discriminator_forward.4} parent=11 // pred_region
        _
      $region24: #{discriminator_forward.4} parent=11 // pred_fallthru
        _
      // Predicated region
      $region25: #{discriminator_forward.4} parent=11 // pred_check
        %p167 = pneg %p111
      $region26: #{discriminator_forward.4} parent=11 // pred_check_branch
        %169 = sbr.rel (%p167) target = $region28
      $region27: #{discriminator_forward.4} parent=11 // pred_region
        _
      $region28: #{discriminator_forward.4} parent=11 // pred_fallthru
        _
    $region12: #{discriminator_forward.4} parent=5 // pred_fallthru
      _
    %p170 = scmp.lt.s32.totalorder %s10, 2
    // Predicated region
    $region29: #{discriminator_forward.4} parent=5 // pred_check
      %p171 = pneg %p170
    $region30: #{discriminator_forward.4} parent=5 // pred_check_branch
      %173 = sbr.rel (%p171) target = $region32
    $region31: #{discriminator_forward.4} parent=5 // pred_region
      _
    $region32: #{discriminator_forward.4} parent=5 // pred_fallthru
      _
    %p174 = scmp.le.s32.totalorder 1, %s10
    %p175 = scmp.lt.s32.totalorder %s10, 3
    %p176 = pnand %p174, %p175
    %p177 = pneg %p176
    // Predicated region
    $region33: #{discriminator_forward.4} parent=5 // pred_check
      _
    $region34: #{discriminator_forward.4} parent=5 // pred_check_branch
      %179 = sbr.rel (%p176) target = $region36
    $region35: #{discriminator_forward.4} parent=5 // pred_region
      %s180 = ssub.s32 %s10, 1
      %s181 = smul.u32 16, %s20
      %p182 = scmp.lt.s32.totalorder %s181, 15
      %s183 = scalar_select %p182, %s181, 15
      %s184 = smul.addr %s183, 4
      %s185 = scalar_lea.vmem %s0, %s184
      %p186 = pneg %p48
      %p187 = pneg %p45
      %p188 = pneg %p69
      %p189 = pneg %p66
      %p190 = pneg %p90
      %p191 = pneg %p87
      %p192 = pneg %p111
      %p193 = pneg %p108
      %p194 = pneg %p137
      %p195 = pneg %p134
      %s196 = smul.u32 16, %s20
      %p197 = scmp.lt.s32.totalorder %s196, 15
      %s198 = scalar_select %p197, %s196, 15
      %s199 = smul.addr %s198, 8
      %s200 = scalar_lea.vmem %s4, %s199
      %s201 = smul.u32 16, %s20
      %p202 = scmp.lt.s32.totalorder %s201, 15
      %s203 = scalar_select %p202, %s201, 15
      %s204 = smul.addr %s203, 4
      %s205 = scalar_lea.vmem %s0, %s204
      %s206 = smul.u32 16, %s20
      %s207 = smul.u32 16, %s20
      %p208 = scmp.lt.s32.totalorder %s207, 15
      %s209 = scalar_select %p208, %s207, 15
      %s210 = smul.addr %s209, 8
      %s211 = scalar_lea.vmem %s4, %s210
      %s212 = smul.u32 16, %s20
      %v213 = vld [vmem:[%s205] sm:$0xf]
      %v214 = vld [vmem:[%s205 + $0x4] sm:$0xf]
      %v215 = vld [vmem:[%s205 + $0x8] sm:$0xf]
      %v216 = vld [vmem:[%s205 + $0xc] sm:$0xf]
      %v217 = vld [vmem:[%s205 + $0x10] sm:$0xf]
      %v218 = vld [vmem:[%s205 + $0x14] sm:$0xf]
      %v219 = vld [vmem:[%s205 + $0x18] sm:$0xf]
      %v220 = vld [vmem:[%s205 + $0x1c] sm:$0xf]
      %v221 = vld [vmem:[%s205 + $0x20] sm:$0xf]
      %v222 = vld [vmem:[%s205 + $0x24] sm:$0xf]
      %v223 = vld [vmem:[%s205 + $0x28] sm:$0xf]
      %v224 = vld [vmem:[%s205 + $0x2c] sm:$0xf]
      %v225 = vld [vmem:[%s205 + $0x30] sm:$0xf]
      %v226 = vld [vmem:[%s205 + $0x34] sm:$0xf]
      %v227 = vld [vmem:[%s205 + $0x38] sm:$0xf]
      %v228 = vld [vmem:[%s205 + $0x3c] sm:$0xf]
      %v229 = vld [vmem:[%s1] sm:$0xf]
      %v230 = vld [vmem:[%s1 + $0x4] sm:$0xf]
      %v231 = vld [vmem:[%s1 + $0x8] sm:$0xf]
      %v232 = vld [vmem:[%s1 + $0xc] sm:$0xf]
      %v233 = vld [vmem:[%s1 + $0x10] sm:$0xf]
      %v234 = vld [vmem:[%s1 + $0x14] sm:$0xf]
      %v235 = vld [vmem:[%s1 + $0x18] sm:$0xf]
      %v236 = vld [vmem:[%s1 + $0x1c] sm:$0xf]
      %v237 = vld [vmem:[%s1 + $0x20] sm:$0xf]
      %v238 = vld [vmem:[%s1 + $0x24] sm:$0xf]
      %v239 = vld [vmem:[%s1 + $0x28] sm:$0xf]
      %v240 = vld [vmem:[%s1 + $0x2c] sm:$0xf]
      %v241 = vld [vmem:[%s1 + $0x30] sm:$0xf]
      %v242 = vld [vmem:[%s1 + $0x34] sm:$0xf]
      %v243 = vld [vmem:[%s1 + $0x38] sm:$0xf]
      %v244 = vld [vmem:[%s1 + $0x3c] sm:$0xf]
      %v261 = vunpack.c.l.b16 %v213
      %v262 = vunpack.c.l.b16 %v214
      %v263 = vunpack.c.l.b16 %v215
      %v264 = vunpack.c.l.b16 %v216
      %v265 = vunpack.c.l.b16 %v217
      %v266 = vunpack.c.l.b16 %v218
      %v267 = vunpack.c.l.b16 %v219
      %v268 = vunpack.c.l.b16 %v220
      %v269 = vunpack.c.l.b16 %v221
      %v270 = vunpack.c.l.b16 %v222
      %v271 = vunpack.c.l.b16 %v223
      %v272 = vunpack.c.l.b16 %v224
      %v273 = vunpack.c.l.b16 %v225
      %v274 = vunpack.c.l.b16 %v226
      %v275 = vunpack.c.l.b16 %v227
      %v276 = vunpack.c.l.b16 %v228
      %v277 = vpack.c.b16 %v262, %v261
      %v278 = vpack.c.b16 %v264, %v263
      %v279 = vpack.c.b16 %v266, %v265
      %v280 = vpack.c.b16 %v268, %v267
      %v281 = vpack.c.b16 %v270, %v269
      %v282 = vpack.c.b16 %v272, %v271
      %v283 = vpack.c.b16 %v274, %v273
      %v284 = vpack.c.b16 %v276, %v275
      %v309 = vunpack.c.l.b16 %v229
      %v310 = vunpack.c.l.b16 %v230
      %v311 = vunpack.c.l.b16 %v231
      %v312 = vunpack.c.l.b16 %v232
      %v313 = vunpack.c.l.b16 %v233
      %v314 = vunpack.c.l.b16 %v234
      %v315 = vunpack.c.l.b16 %v235
      %v316 = vunpack.c.l.b16 %v236
      %v317 = vunpack.c.l.b16 %v237
      %v318 = vunpack.c.l.b16 %v238
      %v319 = vunpack.c.l.b16 %v239
      %v320 = vunpack.c.l.b16 %v240
      %v321 = vunpack.c.l.b16 %v241
      %v322 = vunpack.c.l.b16 %v242
      %v323 = vunpack.c.l.b16 %v243
      %v324 = vunpack.c.l.b16 %v244
      %v325 = vpack.c.b16 %v310, %v309
      %v326 = vpack.c.b16 %v312, %v311
      %v327 = vpack.c.b16 %v314, %v313
      %v328 = vpack.c.b16 %v316, %v315
      %v329 = vpack.c.b16 %v318, %v317
      %v330 = vpack.c.b16 %v320, %v319
      %v331 = vpack.c.b16 %v322, %v321
      %v332 = vpack.c.b16 %v324, %v323
      %341 = vmatpush.bf16.msra.mxu0 %v332
      %342 = vmatpush.bf16.msra.mxu0 %v331
      %343 = vmatpush.bf16.msra.mxu0 %v330
      %344 = vmatpush.bf16.msra.mxu0 %v329
      %345 = vmatpush.bf16.msra.mxu0 %v328
      %346 = vmatpush.bf16.msra.mxu0 %v327
      %347 = vmatpush.bf16.msra.mxu0 %v326
      %348 = vmatpush.bf16.msra.mxu0 %v325
      %349 = vmatmul.bf16.gmra.mxu0 %v277
      %v350 = vpop.f32.mrf.mxu0
      %v351 = vadd.f32 0.0, %v350
      %v352 = vpop.f32.mrf.mxu0
      %v353 = vadd.f32 0.0, %v352
      %354 = vmatmul.bf16.gmra.mxu0 %v278
      %v355 = vpop.f32.mrf.mxu0
      %v356 = vadd.f32 0.0, %v355
      %v357 = vpop.f32.mrf.mxu0
      %v358 = vadd.f32 0.0, %v357
      %359 = vmatmul.bf16.gmra.mxu0 %v279
      %v360 = vpop.f32.mrf.mxu0
      %v361 = vadd.f32 0.0, %v360
      %v362 = vpop.f32.mrf.mxu0
      %v363 = vadd.f32 0.0, %v362
      %364 = vmatmul.bf16.gmra.mxu0 %v280
      %v365 = vpop.f32.mrf.mxu0
      %v366 = vadd.f32 0.0, %v365
      %v367 = vpop.f32.mrf.mxu0
      %v368 = vadd.f32 0.0, %v367
      %369 = vmatmul.bf16.gmra.mxu0 %v281
      %v370 = vpop.f32.mrf.mxu0
      %v371 = vadd.f32 0.0, %v370
      %v372 = vpop.f32.mrf.mxu0
      %v373 = vadd.f32 0.0, %v372
      %374 = vmatmul.bf16.gmra.mxu0 %v282
      %v375 = vpop.f32.mrf.mxu0
      %v376 = vadd.f32 0.0, %v375
      %v377 = vpop.f32.mrf.mxu0
      %v378 = vadd.f32 0.0, %v377
      %379 = vmatmul.bf16.gmra.mxu0 %v283
      %v380 = vpop.f32.mrf.mxu0
      %v381 = vadd.f32 0.0, %v380
      %v382 = vpop.f32.mrf.mxu0
      %v383 = vadd.f32 0.0, %v382
      %384 = vmatmul.bf16.gmra.mxu0 %v284
      %v385 = vpop.f32.mrf.mxu0
      %v386 = vadd.f32 0.0, %v385
      %v387 = vpop.f32.mrf.mxu0
      %v388 = vadd.f32 0.0, %v387
      %389 = vdwg.mxu0
      %p390 = scmp.eq.s32.totalorder %s19, 0
      %p391 = scmp.eq.s32.totalorder %s20, 0
      %p392 = pnand %p390, %p391
      %p393 = pneg %p392
      // Predicated region
      $region37: #{discriminator_forward.4} parent=35 // pred_check
        _
      $region38: #{discriminator_forward.4} parent=35 // pred_check_branch
        %395 = sbr.rel (%p392) target = $region40
      $region39: #{discriminator_forward.4} parent=35 // pred_region
        %396 = vst [vmem:[#allocation2] sm:$0x1] 0.0
        %397 = vst [vmem:[#allocation3] sm:$0x1] 0.0
      $region40: #{discriminator_forward.4} parent=35 // pred_fallthru
        _
      // Predicated region
      $region41: #{discriminator_forward.4} parent=35 // pred_check
        %p398 = pneg %p390
      $region42: #{discriminator_forward.4} parent=35 // pred_check_branch
        %400 = sbr.rel (%p398) target = $region44
      $region43: #{discriminator_forward.4} parent=35 // pred_region
        %v401 = vld [vmem:[#allocation2] sm:$0x1]
        %v402 = vadd.f32 %v351, %v353
        %v403 = vadd.f32 %v402, %v356
        %v404 = vadd.f32 %v403, %v358
        %v405 = vadd.f32 %v404, %v361
        %v406 = vadd.f32 %v405, %v363
        %v407 = vadd.f32 %v406, %v366
        %v408 = vadd.f32 %v407, %v368
        %v409 = vadd.f32 %v408, %v371
        %v410 = vadd.f32 %v409, %v373
        %v411 = vadd.f32 %v410, %v376
        %v412 = vadd.f32 %v411, %v378
        %v413 = vadd.f32 %v412, %v381
        %v414 = vadd.f32 %v413, %v383
        %v415 = vadd.f32 %v414, %v386
        %v416 = vadd.f32 %v415, %v388
        %v417 = vrot.slane %v416, 4
        %v418 = vadd.f32 %v416, %v417
        %v419 = vrot.slane %v418, 2
        %v420 = vadd.f32 %v418, %v419
        %v421 = vrot.slane %v420, 1
        %v422 = vadd.f32 %v420, %v421
        %v423 = vadd.f32 %v401, %v422
        %424 = vst [vmem:[#allocation2] sm:$0x1] %v423
        %v425 = vld [vmem:[#allocation3] sm:$0x1]
        %v426 = vmul.f32 %v351, %v351
        %v427 = vmul.f32 %v353, %v353
        %v428 = vmul.f32 %v356, %v356
        %v429 = vmul.f32 %v358, %v358
        %v430 = vmul.f32 %v361, %v361
        %v431 = vmul.f32 %v363, %v363
        %v432 = vmul.f32 %v366, %v366
        %v433 = vmul.f32 %v368, %v368
        %v434 = vmul.f32 %v371, %v371
        %v435 = vmul.f32 %v373, %v373
        %v436 = vmul.f32 %v376, %v376
        %v437 = vmul.f32 %v378, %v378
        %v438 = vmul.f32 %v381, %v381
        %v439 = vmul.f32 %v383, %v383
        %v440 = vmul.f32 %v386, %v386
        %v441 = vmul.f32 %v388, %v388
        %v442 = vadd.f32 %v426, %v427
        %v443 = vadd.f32 %v442, %v428
        %v444 = vadd.f32 %v443, %v429
        %v445 = vadd.f32 %v444, %v430
        %v446 = vadd.f32 %v445, %v431
        %v447 = vadd.f32 %v446, %v432
        %v448 = vadd.f32 %v447, %v433
        %v449 = vadd.f32 %v448, %v434
        %v450 = vadd.f32 %v449, %v435
        %v451 = vadd.f32 %v450, %v436
        %v452 = vadd.f32 %v451, %v437
        %v453 = vadd.f32 %v452, %v438
        %v454 = vadd.f32 %v453, %v439
        %v455 = vadd.f32 %v454, %v440
        %v456 = vadd.f32 %v455, %v441
        %v457 = vrot.slane %v456, 4
        %v458 = vadd.f32 %v456, %v457
        %v459 = vrot.slane %v458, 2
        %v460 = vadd.f32 %v458, %v459
        %v461 = vrot.slane %v460, 1
        %v462 = vadd.f32 %v460, %v461
        %v463 = vadd.f32 %v425, %v462
        %464 = vst [vmem:[#allocation3] sm:$0x1] %v463
        %465 = vst [vmem:[%s211] sm:$0xff] 0.0
        %466 = vst [vmem:[%s211 + $0x8] sm:$0xff] 0.0
        %467 = vst [vmem:[%s211 + $0x10] sm:$0xff] 0.0
        %468 = vst [vmem:[%s211 + $0x18] sm:$0xff] 0.0
        %469 = vst [vmem:[%s211 + $0x20] sm:$0xff] 0.0
        %470 = vst [vmem:[%s211 + $0x28] sm:$0xff] 0.0
        %471 = vst [vmem:[%s211 + $0x30] sm:$0xff] 0.0
        %472 = vst [vmem:[%s211 + $0x38] sm:$0xff] 0.0
        %473 = vst [vmem:[%s211 + $0x40] sm:$0xff] 0.0
        %474 = vst [vmem:[%s211 + $0x48] sm:$0xff] 0.0
        %475 = vst [vmem:[%s211 + $0x50] sm:$0xff] 0.0
        %476 = vst [vmem:[%s211 + $0x58] sm:$0xff] 0.0
        %477 = vst [vmem:[%s211 + $0x60] sm:$0xff] 0.0
        %478 = vst [vmem:[%s211 + $0x68] sm:$0xff] 0.0
        %479 = vst [vmem:[%s211 + $0x70] sm:$0xff] 0.0
        %480 = vst [vmem:[%s211 + $0x78] sm:$0xff] 0.0
      $region44: #{discriminator_forward.4} parent=35 // pred_fallthru
        _
      %p481 = scmp.eq.s32.totalorder %s19, 1
      // Predicated region
      $region45: #{discriminator_forward.4} parent=35 // pred_check
        %p482 = pneg %p481
      $region46: #{discriminator_forward.4} parent=35 // pred_check_branch
        %484 = sbr.rel (%p482) target = $region48
      $region47: #{discriminator_forward.4} parent=35 // pred_region
        %v485 = vld [vmem:[#allocation2] sm:$0x1]
        %v486 = vmul.f32 %v485, 0.0078125
        %v487 = vld [vmem:[#allocation3] sm:$0x1]
        %v488 = vmul.f32 %v487, 0.0078125
        %v489 = vmul.f32 %v486, %v486
        %v490 = vsub.f32 %v488, %v489
        %v491 = vmax.f32 %v490, 0.0
        %v492 = vadd.f32 %v491, 1e-05
        %v493 = vrsqrt.pop %v492
        %v494 = vmul.f32 %v493, %v492
        %v495 = vmul.f32 %v494, %v493
        %v496 = vmul.f32 0.5, %v495
        %v497 = vsub.f32 1.5, %v496
        %v498 = vmul.f32 %v493, %v497
        %vm499 = vweird.f32 %v492
        %vm500 = vweird.f32 %v493
        %vm501 = vmor %vm499, %vm500
        %v502 = vsel %vm501, %v493, %v498
        %v504 = vperm.slane %v486, 0
        %v506 = vsub.f32 %v351, %v504
        %v507 = vsub.f32 %v353, %v504
        %v508 = vsub.f32 %v356, %v504
        %v509 = vsub.f32 %v358, %v504
        %v510 = vsub.f32 %v361, %v504
        %v511 = vsub.f32 %v363, %v504
        %v512 = vsub.f32 %v366, %v504
        %v513 = vsub.f32 %v368, %v504
        %v514 = vsub.f32 %v371, %v504
        %v515 = vsub.f32 %v373, %v504
        %v516 = vsub.f32 %v376, %v504
        %v517 = vsub.f32 %v378, %v504
        %v518 = vsub.f32 %v381, %v504
        %v519 = vsub.f32 %v383, %v504
        %v520 = vsub.f32 %v386, %v504
        %v521 = vsub.f32 %v388, %v504
        %v522 = vld [vmem:[%s2] sm:$0x1]
        %v523 = vmul.f32 %v502, %v522
        %v525 = vperm.slane %v523, 0
        %v527 = vmul.f32 %v506, %v525
        %v528 = vmul.f32 %v507, %v525
        %v529 = vmul.f32 %v508, %v525
        %v530 = vmul.f32 %v509, %v525
        %v531 = vmul.f32 %v510, %v525
        %v532 = vmul.f32 %v511, %v525
        %v533 = vmul.f32 %v512, %v525
        %v534 = vmul.f32 %v513, %v525
        %v535 = vmul.f32 %v514, %v525
        %v536 = vmul.f32 %v515, %v525
        %v537 = vmul.f32 %v516, %v525
        %v538 = vmul.f32 %v517, %v525
        %v539 = vmul.f32 %v518, %v525
        %v540 = vmul.f32 %v519, %v525
        %v541 = vmul.f32 %v520, %v525
        %v542 = vmul.f32 %v521, %v525
        %v543 = vld [vmem:[%s3] sm:$0x1]
        %v545 = vperm.slane %v543, 0
        %v547 = vadd.f32 %v527, %v545
        %v548 = vadd.f32 %v528, %v545
        %v549 = vadd.f32 %v529, %v545
        %v550 = vadd.f32 %v530, %v545
        %v551 = vadd.f32 %v531, %v545
        %v552 = vadd.f32 %v532, %v545
        %v553 = vadd.f32 %v533, %v545
        %v554 = vadd.f32 %v534, %v545
        %v555 = vadd.f32 %v535, %v545
        %v556 = vadd.f32 %v536, %v545
        %v557 = vadd.f32 %v537, %v545
        %v558 = vadd.f32 %v538, %v545
        %v559 = vadd.f32 %v539, %v545
        %v560 = vadd.f32 %v540, %v545
        %v561 = vadd.f32 %v541, %v545
        %v562 = vadd.f32 %v542, %v545
        %v563 = vmax.f32 %v547, 0.0
        %v564 = vmax.f32 %v548, 0.0
        %v565 = vmax.f32 %v549, 0.0
        %v566 = vmax.f32 %v550, 0.0
        %v567 = vmax.f32 %v551, 0.0
        %v568 = vmax.f32 %v552, 0.0
        %v569 = vmax.f32 %v553, 0.0
        %v570 = vmax.f32 %v554, 0.0
        %v571 = vmax.f32 %v555, 0.0
        %v572 = vmax.f32 %v556, 0.0
        %v573 = vmax.f32 %v557, 0.0
        %v574 = vmax.f32 %v558, 0.0
        %v575 = vmax.f32 %v559, 0.0
        %v576 = vmax.f32 %v560, 0.0
        %v577 = vmax.f32 %v561, 0.0
        %v578 = vmax.f32 %v562, 0.0
        %579 = vst [vmem:[%s211] sm:$0xff] %v563
        %580 = vst [vmem:[%s211 + $0x8] sm:$0xff] %v564
        %581 = vst [vmem:[%s211 + $0x10] sm:$0xff] %v565
        %582 = vst [vmem:[%s211 + $0x18] sm:$0xff] %v566
        %583 = vst [vmem:[%s211 + $0x20] sm:$0xff] %v567
        %584 = vst [vmem:[%s211 + $0x28] sm:$0xff] %v568
        %585 = vst [vmem:[%s211 + $0x30] sm:$0xff] %v569
        %586 = vst [vmem:[%s211 + $0x38] sm:$0xff] %v570
        %587 = vst [vmem:[%s211 + $0x40] sm:$0xff] %v571
        %588 = vst [vmem:[%s211 + $0x48] sm:$0xff] %v572
        %589 = vst [vmem:[%s211 + $0x50] sm:$0xff] %v573
        %590 = vst [vmem:[%s211 + $0x58] sm:$0xff] %v574
        %591 = vst [vmem:[%s211 + $0x60] sm:$0xff] %v575
        %592 = vst [vmem:[%s211 + $0x68] sm:$0xff] %v576
        %593 = vst [vmem:[%s211 + $0x70] sm:$0xff] %v577
        %594 = vst [vmem:[%s211 + $0x78] sm:$0xff] %v578
      $region48: #{discriminator_forward.4} parent=35 // pred_fallthru
        _
      %s595 = smul.u32 16, %s20
      %p596 = scmp.lt.s32.totalorder %s595, 15
      %s597 = scalar_select %p596, %s595, 15
      %s598 = smul.addr %s597, 8
      %s599 = scalar_lea.vmem %s4, %s598
      // Predicated region
      $region49: #{discriminator_forward.4} parent=35 // pred_check
        %p600 = pneg %p134
      $region50: #{discriminator_forward.4} parent=35 // pred_check_branch
        %602 = sbr.rel (%p600) target = $region52
      $region51: #{discriminator_forward.4} parent=35 // pred_region
        %s603 = smul.u32 16, %s20
      $region52: #{discriminator_forward.4} parent=35 // pred_fallthru
        _
      // Predicated region
      $region53: #{discriminator_forward.4} parent=35 // pred_check
        %p604 = pneg %p134
      $region54: #{discriminator_forward.4} parent=35 // pred_check_branch
        %606 = sbr.rel (%p604) target = $region56
      $region55: #{discriminator_forward.4} parent=35 // pred_region
        %s607 = smul.u32 16, %s20
        %p608 = scmp.lt.s32.totalorder %s607, 15
        %s609 = scalar_select %p608, %s607, 15
        %s610 = smul.addr %s609, 8
        %s611 = scalar_lea.vmem %s4, %s610
      $region56: #{discriminator_forward.4} parent=35 // pred_fallthru
        _
    $region36: #{discriminator_forward.4} parent=5 // pred_fallthru
      _
    %p612 = scmp.le.s32.totalorder 2, %s10
    // Predicated region
    $region57: #{discriminator_forward.4} parent=5 // pred_check
      %p613 = pneg %p612
    $region58: #{discriminator_forward.4} parent=5 // pred_check_branch
      %615 = sbr.rel (%p613) target = $region60
    $region59: #{discriminator_forward.4} parent=5 // pred_region
      %s616 = ssub.s32 %s10, 2
    $region60: #{discriminator_forward.4} parent=5 // pred_fallthru
      _
  $region6: #{discriminator_forward.4} parent=0 // loop_footer
    %s14 = sadd.s32 1, %s10
  $region7: #{discriminator_forward.4} parent=0 // loop_footer_branch
    %9 = sbr.rel target = $region3
  $region8: #{discriminator_forward.4} parent=0 // loop_exit
    _

// kernel: discriminator_forward.5
$region0: #{discriminator_forward.5}
  #allocation0 [shape = 'u32[]', space=smem, size = 0x4, offset = 0x4, fixed_abs, tag = 'smem constant byte address 0x4 - core index']
  #allocation1 [shape = 'u32[72,128]{1,0:T(1,128)}', space=vmem, size = 0x9000, scoped, tag = 'internal scratch']
  #allocation2 [shape = 'f32[1,128]{1,0:T(1,128)}', space=vmem, size = 0x200, scoped, tag = 'scratch operand']
  #allocation3 [shape = 'f32[1,128]{1,0:T(1,128)}', space=vmem, size = 0x200, scoped, tag = 'scratch operand']
  %s0 = inlined_call_operand.vmem [shape: bf16[32,1664], index: 0, kind: input, shape index: {}]
  %s1 = inlined_call_operand.vmem [shape: bf16[1664,128], index: 1, kind: input, shape index: {}]
  %s2 = inlined_call_operand.vmem [shape: f32[1,128], index: 2, kind: input, shape index: {}]
  %s3 = inlined_call_operand.vmem [shape: f32[1,128], index: 3, kind: input, shape index: {}]
  %s4 = inlined_call_operand.vmem [shape: f32[32,128], index: 4, kind: output, shape index: {}]
  %s5 = sld [smem:[#allocation0]]
  $region61: #{discriminator_forward.5} parent=0
    _
  %s7 = ssub.s32 1, %s5
  %s8 = scalar_select 0, %s7, %s5
  loop: start=0, step=1, limit=4
  $region2: #{discriminator_forward.5} parent=0 // loop_pre_header
    _
  $region3: #{discriminator_forward.5} parent=0 // loop_header
    %s10 = sphi 0, %s14
    %p11 = scmp.ge.s32.totalorder %s10, 4
    %s17 = sphi 0, %s29
    %s18 = sphi 0, %s25
    %s19 = sphi 0, %s17
    %s20 = sphi 0, %s18
    %s21 = sphi 0, %s19
    %s22 = sphi 0, %s20
    %s32 = sphi 0, %s34
    %s35 = sphi 0, %s32
    %s36 = sphi 0, %s35
    %s52 = sphi 0, %s36
    %s56 = sphi 0, %s56
    %s58 = sphi 0, %s56
    %s59 = sphi 0, %s58
    %s73 = sphi 0, %s59
    %s77 = sphi 0, %s77
    %s79 = sphi 0, %s77
    %s80 = sphi 0, %s79
    %s94 = sphi 0, %s80
    %s98 = sphi 0, %s98
    %s100 = sphi 0, %s98
    %s101 = sphi 0, %s100
    %s115 = sphi 0, %s101
    %s121 = sphi 0, %s123
    %s124 = sphi 0, %s121
    %s125 = sphi 0, %s124
    %s141 = sphi 0, %s125
  $region4: #{discriminator_forward.5} parent=0 // loop_header_branch
    %13 = sbr.rel (%p11) target = $region8
  $region5: #{discriminator_forward.5} parent=0 // loop_body
    %s15 = ssub.s32 %s10, 1
    %s16 = ssub.s32 %s10, 2
    %s23 = sadd.s32 1, %s18
    %p24 = scmp.ge.s32.totalorder %s23, 1
    %s25 = scalar_select %p24, 0, %s23
    %s26 = sadd.s32 1, %s17
    %s27 = scalar_select %p24, %s26, %s17
    %p28 = scmp.ge.s32.totalorder %s27, 2
    %s29 = scalar_select %p28, 0, %s27
    %s30 = ssub.s32 %s18, %s25
    %p31 = scmp.eq.s32.totalorder %s30, 0
    %s33 = sadd.s32 %s32, 1
    %s34 = scalar_select %p31, %s32, %s33
    %p37 = pneg %p31
    %p38 = scmp.eq.s32.totalorder %s10, 1
    %p39 = por %p37, %p38
    %p40 = scmp.ne.s32.totalorder %s32, %s35
    %p41 = scmp.eq.s32.totalorder %s10, 0
    %p42 = por %p40, %p41
    %p43 = scmp.ne.s32.totalorder %s32, %s35
    %p44 = scmp.eq.s32.totalorder %s15, 1
    %p45 = por %p43, %p44
    %p46 = scmp.ne.s32.totalorder %s35, %s36
    %p47 = scmp.eq.s32.totalorder %s15, 0
    %p48 = por %p46, %p47
    %p49 = scmp.ne.s32.totalorder %s35, %s36
    %p50 = scmp.eq.s32.totalorder %s16, 1
    %p51 = por %p49, %p50
    %p53 = scmp.ne.s32.totalorder %s36, %s52
    %p54 = scmp.eq.s32.totalorder %s16, 0
    %p55 = por %p53, %p54
    %s57 = sadd.s32 %s56, 1
    %p60 = scmp.eq.s32.totalorder %s10, 1
    %p61 = scmp.ne.s32.totalorder %s56, %s58
    %p62 = scmp.eq.s32.totalorder %s10, 0
    %p63 = por %p61, %p62
    %p64 = scmp.ne.s32.totalorder %s56, %s58
    %p65 = scmp.eq.s32.totalorder %s15, 1
    %p66 = por %p64, %p65
    %p67 = scmp.ne.s32.totalorder %s58, %s59
    %p68 = scmp.eq.s32.totalorder %s15, 0
    %p69 = por %p67, %p68
    %p70 = scmp.ne.s32.totalorder %s58, %s59
    %p71 = scmp.eq.s32.totalorder %s16, 1
    %p72 = por %p70, %p71
    %p74 = scmp.ne.s32.totalorder %s59, %s73
    %p75 = scmp.eq.s32.totalorder %s16, 0
    %p76 = por %p74, %p75
    %s78 = sadd.s32 %s77, 1
    %p81 = scmp.eq.s32.totalorder %s10, 1
    %p82 = scmp.ne.s32.totalorder %s77, %s79
    %p83 = scmp.eq.s32.totalorder %s10, 0
    %p84 = por %p82, %p83
    %p85 = scmp.ne.s32.totalorder %s77, %s79
    %p86 = scmp.eq.s32.totalorder %s15, 1
    %p87 = por %p85, %p86
    %p88 = scmp.ne.s32.totalorder %s79, %s80
    %p89 = scmp.eq.s32.totalorder %s15, 0
    %p90 = por %p88, %p89
    %p91 = scmp.ne.s32.totalorder %s79, %s80
    %p92 = scmp.eq.s32.totalorder %s16, 1
    %p93 = por %p91, %p92
    %p95 = scmp.ne.s32.totalorder %s80, %s94
    %p96 = scmp.eq.s32.totalorder %s16, 0
    %p97 = por %p95, %p96
    %s99 = sadd.s32 %s98, 1
    %p102 = scmp.eq.s32.totalorder %s10, 1
    %p103 = scmp.ne.s32.totalorder %s98, %s100
    %p104 = scmp.eq.s32.totalorder %s10, 0
    %p105 = por %p103, %p104
    %p106 = scmp.ne.s32.totalorder %s98, %s100
    %p107 = scmp.eq.s32.totalorder %s15, 1
    %p108 = por %p106, %p107
    %p109 = scmp.ne.s32.totalorder %s100, %s101
    %p110 = scmp.eq.s32.totalorder %s15, 0
    %p111 = por %p109, %p110
    %p112 = scmp.ne.s32.totalorder %s100, %s101
    %p113 = scmp.eq.s32.totalorder %s16, 1
    %p114 = por %p112, %p113
    %p116 = scmp.ne.s32.totalorder %s101, %s115
    %p117 = scmp.eq.s32.totalorder %s16, 0
    %p118 = por %p116, %p117
    %s119 = ssub.s32 %s18, %s25
    %p120 = scmp.eq.s32.totalorder %s119, 0
    %s122 = sadd.s32 %s121, 1
    %s123 = scalar_select %p120, %s121, %s122
    %p126 = pneg %p120
    %p127 = scmp.eq.s32.totalorder %s10, 1
    %p128 = por %p126, %p127
    %p129 = scmp.ne.s32.totalorder %s121, %s124
    %p130 = scmp.eq.s32.totalorder %s10, 0
    %p131 = por %p129, %p130
    %p132 = scmp.ne.s32.totalorder %s121, %s124
    %p133 = scmp.eq.s32.totalorder %s15, 1
    %p134 = por %p132, %p133
    %p135 = scmp.ne.s32.totalorder %s124, %s125
    %p136 = scmp.eq.s32.totalorder %s15, 0
    %p137 = por %p135, %p136
    %p138 = scmp.ne.s32.totalorder %s124, %s125
    %p139 = scmp.eq.s32.totalorder %s16, 1
    %p140 = por %p138, %p139
    %p142 = scmp.ne.s32.totalorder %s125, %s141
    %p143 = scmp.eq.s32.totalorder %s16, 0
    %p144 = por %p142, %p143
    %p145 = scmp.le.s32.totalorder 1, %s10
    %p146 = scmp.lt.s32.totalorder %s10, 3
    %p147 = pnand %p145, %p146
    %p148 = pneg %p147
    // Predicated region
    $region9: #{discriminator_forward.5} parent=5 // pred_check
      _
    $region10: #{discriminator_forward.5} parent=5 // pred_check_branch
      %150 = sbr.rel (%p147) target = $region12
    $region11: #{discriminator_forward.5} parent=5 // pred_region
      %s151 = ssub.s32 %s10, 1
      // Predicated region
      $region13: #{discriminator_forward.5} parent=11 // pred_check
        %p152 = pneg %p48
      $region14: #{discriminator_forward.5} parent=11 // pred_check_branch
        %154 = sbr.rel (%p152) target = $region16
      $region15: #{discriminator_forward.5} parent=11 // pred_region
        %s155 = smul.u32 4, %s20
        %p156 = scmp.lt.s32.totalorder %s155, 3
        %s157 = scalar_select %p156, %s155, 3
        %s158 = smul.addr %s157, 13
        %s159 = smul.addr %s158, 4
        %s160 = scalar_lea.vmem %s0, %s159
        %s161 = smul.u32 4, %s20
      $region16: #{discriminator_forward.5} parent=11 // pred_fallthru
        _
      // Predicated region
      $region17: #{discriminator_forward.5} parent=11 // pred_check
        %p162 = pneg %p69
      $region18: #{discriminator_forward.5} parent=11 // pred_check_branch
        %164 = sbr.rel (%p162) target = $region20
      $region19: #{discriminator_forward.5} parent=11 // pred_region
        _
      $region20: #{discriminator_forward.5} parent=11 // pred_fallthru
        _
      // Predicated region
      $region21: #{discriminator_forward.5} parent=11 // pred_check
        %p165 = pneg %p90
      $region22: #{discriminator_forward.5} parent=11 // pred_check_branch
        %167 = sbr.rel (%p165) target = $region24
      $region23: #{discriminator_forward.5} parent=11 // pred_region
        _
      $region24: #{discriminator_forward.5} parent=11 // pred_fallthru
        _
      // Predicated region
      $region25: #{discriminator_forward.5} parent=11 // pred_check
        %p168 = pneg %p111
      $region26: #{discriminator_forward.5} parent=11 // pred_check_branch
        %170 = sbr.rel (%p168) target = $region28
      $region27: #{discriminator_forward.5} parent=11 // pred_region
        _
      $region28: #{discriminator_forward.5} parent=11 // pred_fallthru
        _
    $region12: #{discriminator_forward.5} parent=5 // pred_fallthru
      _
    %p171 = scmp.lt.s32.totalorder %s10, 2
    // Predicated region
    $region29: #{discriminator_forward.5} parent=5 // pred_check
      %p172 = pneg %p171
    $region30: #{discriminator_forward.5} parent=5 // pred_check_branch
      %174 = sbr.rel (%p172) target = $region32
    $region31: #{discriminator_forward.5} parent=5 // pred_region
      _
    $region32: #{discriminator_forward.5} parent=5 // pred_fallthru
      _
    %p175 = scmp.le.s32.totalorder 1, %s10
    %p176 = scmp.lt.s32.totalorder %s10, 3
    %p177 = pnand %p175, %p176
    %p178 = pneg %p177
    // Predicated region
    $region33: #{discriminator_forward.5} parent=5 // pred_check
      _
    $region34: #{discriminator_forward.5} parent=5 // pred_check_branch
      %180 = sbr.rel (%p177) target = $region36
    $region35: #{discriminator_forward.5} parent=5 // pred_region
      %s181 = ssub.s32 %s10, 1
      %s182 = smul.u32 4, %s20
      %p183 = scmp.lt.s32.totalorder %s182, 3
      %s184 = scalar_select %p183, %s182, 3
      %s185 = smul.addr %s184, 13
      %s186 = smul.addr %s185, 4
      %s187 = scalar_lea.vmem %s0, %s186
      %p188 = pneg %p48
      %p189 = pneg %p45
      %p190 = pneg %p69
      %p191 = pneg %p66
      %p192 = pneg %p90
      %p193 = pneg %p87
      %p194 = pneg %p111
      %p195 = pneg %p108
      %p196 = pneg %p137
      %p197 = pneg %p134
      %s198 = smul.u32 4, %s20
      %p199 = scmp.lt.s32.totalorder %s198, 3
      %s200 = scalar_select %p199, %s198, 3
      %s201 = smul.addr %s200, 8
      %s202 = scalar_lea.vmem %s4, %s201
      %s203 = smul.u32 4, %s20
      %p204 = scmp.lt.s32.totalorder %s203, 3
      %s205 = scalar_select %p204, %s203, 3
      %s206 = smul.addr %s205, 13
      %s207 = smul.addr %s206, 4
      %s208 = scalar_lea.vmem %s0, %s207
      %s209 = smul.u32 4, %s20
      %s210 = smul.u32 4, %s20
      %p211 = scmp.lt.s32.totalorder %s210, 3
      %s212 = scalar_select %p211, %s210, 3
      %s213 = smul.addr %s212, 8
      %s214 = scalar_lea.vmem %s4, %s213
      %s215 = smul.u32 4, %s20
      %v216 = vld [vmem:[%s208] sm:$0xff]
      %v217 = vld [vmem:[%s208 + $0x8] sm:$0xff]
      %v218 = vld [vmem:[%s208 + $0x10] sm:$0xff]
      %v219 = vld [vmem:[%s208 + $0x18] sm:$0xff]
      %v220 = vld [vmem:[%s208 + $0x20] sm:$0xff]
      %v221 = vld [vmem:[%s208 + $0x28] sm:$0xff]
      %v222 = vld [vmem:[%s208 + $0x30] sm:$0xf]
      %v223 = vld [vmem:[%s208 + $0x34] sm:$0xff]
      %v224 = vld [vmem:[%s208 + $0x3c] sm:$0xff]
      %v225 = vld [vmem:[%s208 + $0x44] sm:$0xff]
      %v226 = vld [vmem:[%s208 + $0x4c] sm:$0xff]
      %v227 = vld [vmem:[%s208 + $0x54] sm:$0xff]
      %v228 = vld [vmem:[%s208 + $0x5c] sm:$0xff]
      %v229 = vld [vmem:[%s208 + $0x64] sm:$0xf]
      %v230 = vld [vmem:[%s208 + $0x68] sm:$0xff]
      %v231 = vld [vmem:[%s208 + $0x70] sm:$0xff]
      %v232 = vld [vmem:[%s208 + $0x78] sm:$0xff]
      %v233 = vld [vmem:[%s208 + $0x80] sm:$0xff]
      %v234 = vld [vmem:[%s208 + $0x88] sm:$0xff]
      %v235 = vld [vmem:[%s208 + $0x90] sm:$0xff]
      %v236 = vld [vmem:[%s208 + $0x98] sm:$0xf]
      %v237 = vld [vmem:[%s208 + $0x9c] sm:$0xff]
      %v238 = vld [vmem:[%s208 + $0xa4] sm:$0xff]
      %v239 = vld [vmem:[%s208 + $0xac] sm:$0xff]
      %v240 = vld [vmem:[%s208 + $0xb4] sm:$0xff]
      %v241 = vld [vmem:[%s208 + $0xbc] sm:$0xff]
      %v242 = vld [vmem:[%s208 + $0xc4] sm:$0xff]
      %v243 = vld [vmem:[%s208 + $0xcc] sm:$0xf]
      %v244 = vld [vmem:[%s1] sm:$0xf]
      %v245 = vld [vmem:[%s1 + $0x4] sm:$0xf]
      %v246 = vld [vmem:[%s1 + $0x8] sm:$0xf]
      %v247 = vld [vmem:[%s1 + $0xc] sm:$0xf]
      %v248 = vld [vmem:[%s1 + $0x10] sm:$0xf]
      %v249 = vld [vmem:[%s1 + $0x14] sm:$0xf]
      %v250 = vld [vmem:[%s1 + $0x18] sm:$0xf]
      %v251 = vld [vmem:[%s1 + $0x1c] sm:$0xf]
      %v252 = vld [vmem:[%s1 + $0x20] sm:$0xf]
      %v253 = vld [vmem:[%s1 + $0x24] sm:$0xf]
      %v254 = vld [vmem:[%s1 + $0x28] sm:$0xf]
      %v255 = vld [vmem:[%s1 + $0x2c] sm:$0xf]
      %v256 = vld [vmem:[%s1 + $0x30] sm:$0xf]
      %v257 = vld [vmem:[%s1 + $0x34] sm:$0xf]
      %v258 = vld [vmem:[%s1 + $0x38] sm:$0xf]
      %v259 = vld [vmem:[%s1 + $0x3c] sm:$0xf]
      %v260 = vld [vmem:[%s1 + $0x40] sm:$0xf]
      %v261 = vld [vmem:[%s1 + $0x44] sm:$0xf]
      %v262 = vld [vmem:[%s1 + $0x48] sm:$0xf]
      %v263 = vld [vmem:[%s1 + $0x4c] sm:$0xf]
      %v264 = vld [vmem:[%s1 + $0x50] sm:$0xf]
      %v265 = vld [vmem:[%s1 + $0x54] sm:$0xf]
      %v266 = vld [vmem:[%s1 + $0x58] sm:$0xf]
      %v267 = vld [vmem:[%s1 + $0x5c] sm:$0xf]
      %v268 = vld [vmem:[%s1 + $0x60] sm:$0xf]
      %v269 = vld [vmem:[%s1 + $0x64] sm:$0xf]
      %v270 = vld [vmem:[%s1 + $0x68] sm:$0xf]
      %v271 = vld [vmem:[%s1 + $0x6c] sm:$0xf]
      %v272 = vld [vmem:[%s1 + $0x70] sm:$0xf]
      %v273 = vld [vmem:[%s1 + $0x74] sm:$0xf]
      %v274 = vld [vmem:[%s1 + $0x78] sm:$0xf]
      %v275 = vld [vmem:[%s1 + $0x7c] sm:$0xf]
      %v276 = vld [vmem:[%s1 + $0x80] sm:$0xf]
      %v277 = vld [vmem:[%s1 + $0x84] sm:$0xf]
      %v278 = vld [vmem:[%s1 + $0x88] sm:$0xf]
      %v279 = vld [vmem:[%s1 + $0x8c] sm:$0xf]
      %v280 = vld [vmem:[%s1 + $0x90] sm:$0xf]
      %v281 = vld [vmem:[%s1 + $0x94] sm:$0xf]
      %v282 = vld [vmem:[%s1 + $0x98] sm:$0xf]
      %v283 = vld [vmem:[%s1 + $0x9c] sm:$0xf]
      %v284 = vld [vmem:[%s1 + $0xa0] sm:$0xf]
      %v285 = vld [vmem:[%s1 + $0xa4] sm:$0xf]
      %v286 = vld [vmem:[%s1 + $0xa8] sm:$0xf]
      %v287 = vld [vmem:[%s1 + $0xac] sm:$0xf]
      %v288 = vld [vmem:[%s1 + $0xb0] sm:$0xf]
      %v289 = vld [vmem:[%s1 + $0xb4] sm:$0xf]
      %v290 = vld [vmem:[%s1 + $0xb8] sm:$0xf]
      %v291 = vld [vmem:[%s1 + $0xbc] sm:$0xf]
      %v292 = vld [vmem:[%s1 + $0xc0] sm:$0xf]
      %v293 = vld [vmem:[%s1 + $0xc4] sm:$0xf]
      %v294 = vld [vmem:[%s1 + $0xc8] sm:$0xf]
      %v295 = vld [vmem:[%s1 + $0xcc] sm:$0xf]
      %v296 = vld [vmem:[%s1 + $0xd0] sm:$0xf]
      %v297 = vld [vmem:[%s1 + $0xd4] sm:$0xf]
      %v298 = vld [vmem:[%s1 + $0xd8] sm:$0xf]
      %v299 = vld [vmem:[%s1 + $0xdc] sm:$0xf]
      %v300 = vld [vmem:[%s1 + $0xe0] sm:$0xf]
      %v301 = vld [vmem:[%s1 + $0xe4] sm:$0xf]
      %v302 = vld [vmem:[%s1 + $0xe8] sm:$0xf]
      %v303 = vld [vmem:[%s1 + $0xec] sm:$0xf]
      %v304 = vld [vmem:[%s1 + $0xf0] sm:$0xf]
      %v305 = vld [vmem:[%s1 + $0xf4] sm:$0xf]
      %v306 = vld [vmem:[%s1 + $0xf8] sm:$0xf]
      %v307 = vld [vmem:[%s1 + $0xfc] sm:$0xf]
      %v308 = vld [vmem:[%s1 + $0x100] sm:$0xf]
      %v309 = vld [vmem:[%s1 + $0x104] sm:$0xf]
      %v310 = vld [vmem:[%s1 + $0x108] sm:$0xf]
      %v311 = vld [vmem:[%s1 + $0x10c] sm:$0xf]
      %v312 = vld [vmem:[%s1 + $0x110] sm:$0xf]
      %v313 = vld [vmem:[%s1 + $0x114] sm:$0xf]
      %v314 = vld [vmem:[%s1 + $0x118] sm:$0xf]
      %v315 = vld [vmem:[%s1 + $0x11c] sm:$0xf]
      %v316 = vld [vmem:[%s1 + $0x120] sm:$0xf]
      %v317 = vld [vmem:[%s1 + $0x124] sm:$0xf]
      %v318 = vld [vmem:[%s1 + $0x128] sm:$0xf]
      %v319 = vld [vmem:[%s1 + $0x12c] sm:$0xf]
      %v320 = vld [vmem:[%s1 + $0x130] sm:$0xf]
      %v321 = vld [vmem:[%s1 + $0x134] sm:$0xf]
      %v322 = vld [vmem:[%s1 + $0x138] sm:$0xf]
      %v323 = vld [vmem:[%s1 + $0x13c] sm:$0xf]
      %v324 = vld [vmem:[%s1 + $0x140] sm:$0xf]
      %v325 = vld [vmem:[%s1 + $0x144] sm:$0xf]
      %v326 = vld [vmem:[%s1 + $0x148] sm:$0xf]
      %v327 = vld [vmem:[%s1 + $0x14c] sm:$0xf]
      %v328 = vld [vmem:[%s1 + $0x150] sm:$0xf]
      %v329 = vld [vmem:[%s1 + $0x154] sm:$0xf]
      %v330 = vld [vmem:[%s1 + $0x158] sm:$0xf]
      %v331 = vld [vmem:[%s1 + $0x15c] sm:$0xf]
      %v332 = vld [vmem:[%s1 + $0x160] sm:$0xf]
      %v333 = vld [vmem:[%s1 + $0x164] sm:$0xf]
      %v334 = vld [vmem:[%s1 + $0x168] sm:$0xf]
      %v335 = vld [vmem:[%s1 + $0x16c] sm:$0xf]
      %v336 = vld [vmem:[%s1 + $0x170] sm:$0xf]
      %v337 = vld [vmem:[%s1 + $0x174] sm:$0xf]
      %v338 = vld [vmem:[%s1 + $0x178] sm:$0xf]
      %v339 = vld [vmem:[%s1 + $0x17c] sm:$0xf]
      %v340 = vld [vmem:[%s1 + $0x180] sm:$0xf]
      %v341 = vld [vmem:[%s1 + $0x184] sm:$0xf]
      %v342 = vld [vmem:[%s1 + $0x188] sm:$0xf]
      %v343 = vld [vmem:[%s1 + $0x18c] sm:$0xf]
      %v344 = vld [vmem:[%s1 + $0x190] sm:$0xf]
      %v345 = vld [vmem:[%s1 + $0x194] sm:$0xf]
      %v346 = vld [vmem:[%s1 + $0x198] sm:$0xf]
      %v347 = vld [vmem:[%s1 + $0x19c] sm:$0xf]
      %v348 = vld [vmem:[%s1 + $0x1a0] sm:$0xf]
      %v349 = vld [vmem:[%s1 + $0x1a4] sm:$0xf]
      %v350 = vld [vmem:[%s1 + $0x1a8] sm:$0xf]
      %v351 = vld [vmem:[%s1 + $0x1ac] sm:$0xf]
      %v352 = vld [vmem:[%s1 + $0x1b0] sm:$0xf]
      %v353 = vld [vmem:[%s1 + $0x1b4] sm:$0xf]
      %v354 = vld [vmem:[%s1 + $0x1b8] sm:$0xf]
      %v355 = vld [vmem:[%s1 + $0x1bc] sm:$0xf]
      %v356 = vld [vmem:[%s1 + $0x1c0] sm:$0xf]
      %v357 = vld [vmem:[%s1 + $0x1c4] sm:$0xf]
      %v358 = vld [vmem:[%s1 + $0x1c8] sm:$0xf]
      %v359 = vld [vmem:[%s1 + $0x1cc] sm:$0xf]
      %v360 = vld [vmem:[%s1 + $0x1d0] sm:$0xf]
      %v361 = vld [vmem:[%s1 + $0x1d4] sm:$0xf]
      %v362 = vld [vmem:[%s1 + $0x1d8] sm:$0xf]
      %v363 = vld [vmem:[%s1 + $0x1dc] sm:$0xf]
      %v364 = vld [vmem:[%s1 + $0x1e0] sm:$0xf]
      %v365 = vld [vmem:[%s1 + $0x1e4] sm:$0xf]
      %v366 = vld [vmem:[%s1 + $0x1e8] sm:$0xf]
      %v367 = vld [vmem:[%s1 + $0x1ec] sm:$0xf]
      %v368 = vld [vmem:[%s1 + $0x1f0] sm:$0xf]
      %v369 = vld [vmem:[%s1 + $0x1f4] sm:$0xf]
      %v370 = vld [vmem:[%s1 + $0x1f8] sm:$0xf]
      %v371 = vld [vmem:[%s1 + $0x1fc] sm:$0xf]
      %v372 = vld [vmem:[%s1 + $0x200] sm:$0xf]
      %v373 = vld [vmem:[%s1 + $0x204] sm:$0xf]
      %v374 = vld [vmem:[%s1 + $0x208] sm:$0xf]
      %v375 = vld [vmem:[%s1 + $0x20c] sm:$0xf]
      %v376 = vld [vmem:[%s1 + $0x210] sm:$0xf]
      %v377 = vld [vmem:[%s1 + $0x214] sm:$0xf]
      %v378 = vld [vmem:[%s1 + $0x218] sm:$0xf]
      %v379 = vld [vmem:[%s1 + $0x21c] sm:$0xf]
      %v380 = vld [vmem:[%s1 + $0x220] sm:$0xf]
      %v381 = vld [vmem:[%s1 + $0x224] sm:$0xf]
      %v382 = vld [vmem:[%s1 + $0x228] sm:$0xf]
      %v383 = vld [vmem:[%s1 + $0x22c] sm:$0xf]
      %v384 = vld [vmem:[%s1 + $0x230] sm:$0xf]
      %v385 = vld [vmem:[%s1 + $0x234] sm:$0xf]
      %v386 = vld [vmem:[%s1 + $0x238] sm:$0xf]
      %v387 = vld [vmem:[%s1 + $0x23c] sm:$0xf]
      %v388 = vld [vmem:[%s1 + $0x240] sm:$0xf]
      %v389 = vld [vmem:[%s1 + $0x244] sm:$0xf]
      %v390 = vld [vmem:[%s1 + $0x248] sm:$0xf]
      %v391 = vld [vmem:[%s1 + $0x24c] sm:$0xf]
      %v392 = vld [vmem:[%s1 + $0x250] sm:$0xf]
      %v393 = vld [vmem:[%s1 + $0x254] sm:$0xf]
      %v394 = vld [vmem:[%s1 + $0x258] sm:$0xf]
      %v395 = vld [vmem:[%s1 + $0x25c] sm:$0xf]
      %v396 = vld [vmem:[%s1 + $0x260] sm:$0xf]
      %v397 = vld [vmem:[%s1 + $0x264] sm:$0xf]
      %v398 = vld [vmem:[%s1 + $0x268] sm:$0xf]
      %v399 = vld [vmem:[%s1 + $0x26c] sm:$0xf]
      %v400 = vld [vmem:[%s1 + $0x270] sm:$0xf]
      %v401 = vld [vmem:[%s1 + $0x274] sm:$0xf]
      %v402 = vld [vmem:[%s1 + $0x278] sm:$0xf]
      %v403 = vld [vmem:[%s1 + $0x27c] sm:$0xf]
      %v404 = vld [vmem:[%s1 + $0x280] sm:$0xf]
      %v405 = vld [vmem:[%s1 + $0x284] sm:$0xf]
      %v406 = vld [vmem:[%s1 + $0x288] sm:$0xf]
      %v407 = vld [vmem:[%s1 + $0x28c] sm:$0xf]
      %v408 = vld [vmem:[%s1 + $0x290] sm:$0xf]
      %v409 = vld [vmem:[%s1 + $0x294] sm:$0xf]
      %v410 = vld [vmem:[%s1 + $0x298] sm:$0xf]
      %v411 = vld [vmem:[%s1 + $0x29c] sm:$0xf]
      %v412 = vld [vmem:[%s1 + $0x2a0] sm:$0xf]
      %v413 = vld [vmem:[%s1 + $0x2a4] sm:$0xf]
      %v414 = vld [vmem:[%s1 + $0x2a8] sm:$0xf]
      %v415 = vld [vmem:[%s1 + $0x2ac] sm:$0xf]
      %v416 = vld [vmem:[%s1 + $0x2b0] sm:$0xf]
      %v417 = vld [vmem:[%s1 + $0x2b4] sm:$0xf]
      %v418 = vld [vmem:[%s1 + $0x2b8] sm:$0xf]
      %v419 = vld [vmem:[%s1 + $0x2bc] sm:$0xf]
      %v420 = vld [vmem:[%s1 + $0x2c0] sm:$0xf]
      %v421 = vld [vmem:[%s1 + $0x2c4] sm:$0xf]
      %v422 = vld [vmem:[%s1 + $0x2c8] sm:$0xf]
      %v423 = vld [vmem:[%s1 + $0x2cc] sm:$0xf]
      %v424 = vld [vmem:[%s1 + $0x2d0] sm:$0xf]
      %v425 = vld [vmem:[%s1 + $0x2d4] sm:$0xf]
      %v426 = vld [vmem:[%s1 + $0x2d8] sm:$0xf]
      %v427 = vld [vmem:[%s1 + $0x2dc] sm:$0xf]
      %v428 = vld [vmem:[%s1 + $0x2e0] sm:$0xf]
      %v429 = vld [vmem:[%s1 + $0x2e4] sm:$0xf]
      %v430 = vld [vmem:[%s1 + $0x2e8] sm:$0xf]
      %v431 = vld [vmem:[%s1 + $0x2ec] sm:$0xf]
      %v432 = vld [vmem:[%s1 + $0x2f0] sm:$0xf]
      %v433 = vld [vmem:[%s1 + $0x2f4] sm:$0xf]
      %v434 = vld [vmem:[%s1 + $0x2f8] sm:$0xf]
      %v435 = vld [vmem:[%s1 + $0x2fc] sm:$0xf]
      %v436 = vld [vmem:[%s1 + $0x300] sm:$0xf]
      %v437 = vld [vmem:[%s1 + $0x304] sm:$0xf]
      %v438 = vld [vmem:[%s1 + $0x308] sm:$0xf]
      %v439 = vld [vmem:[%s1 + $0x30c] sm:$0xf]
      %v440 = vld [vmem:[%s1 + $0x310] sm:$0xf]
      %v441 = vld [vmem:[%s1 + $0x314] sm:$0xf]
      %v442 = vld [vmem:[%s1 + $0x318] sm:$0xf]
      %v443 = vld [vmem:[%s1 + $0x31c] sm:$0xf]
      %v444 = vld [vmem:[%s1 + $0x320] sm:$0xf]
      %v445 = vld [vmem:[%s1 + $0x324] sm:$0xf]
      %v446 = vld [vmem:[%s1 + $0x328] sm:$0xf]
      %v447 = vld [vmem:[%s1 + $0x32c] sm:$0xf]
      %v448 = vld [vmem:[%s1 + $0x330] sm:$0xf]
      %v449 = vld [vmem:[%s1 + $0x334] sm:$0xf]
      %v450 = vld [vmem:[%s1 + $0x338] sm:$0xf]
      %v451 = vld [vmem:[%s1 + $0x33c] sm:$0xf]
      %v480 = vunpack.c.l.b16 %v216
      %v481 = vunpack.c.h.b16 %v216
      %v482 = vunpack.c.l.b16 %v217
      %v483 = vunpack.c.h.b16 %v217
      %v484 = vunpack.c.l.b16 %v218
      %v485 = vunpack.c.h.b16 %v218
      %v486 = vunpack.c.l.b16 %v219
      %v487 = vunpack.c.h.b16 %v219
      %v488 = vunpack.c.l.b16 %v220
      %v489 = vunpack.c.h.b16 %v220
      %v490 = vunpack.c.l.b16 %v221
      %v491 = vunpack.c.h.b16 %v221
      %v492 = vunpack.c.l.b16 %v222
      %v493 = vunpack.c.l.b16 %v223
      %v494 = vunpack.c.h.b16 %v223
      %v495 = vunpack.c.l.b16 %v224
      %v496 = vunpack.c.h.b16 %v224
      %v497 = vunpack.c.l.b16 %v225
      %v498 = vunpack.c.h.b16 %v225
      %v499 = vunpack.c.l.b16 %v226
      %v500 = vunpack.c.h.b16 %v226
      %v501 = vunpack.c.l.b16 %v227
      %v502 = vunpack.c.h.b16 %v227
      %v503 = vunpack.c.l.b16 %v228
      %v504 = vunpack.c.h.b16 %v228
      %v505 = vunpack.c.l.b16 %v229
      %v506 = vunpack.c.l.b16 %v230
      %v507 = vunpack.c.h.b16 %v230
      %v508 = vunpack.c.l.b16 %v231
      %v509 = vunpack.c.h.b16 %v231
      %v510 = vunpack.c.l.b16 %v232
      %v511 = vunpack.c.h.b16 %v232
      %v512 = vunpack.c.l.b16 %v233
      %v513 = vunpack.c.h.b16 %v233
      %v514 = vunpack.c.l.b16 %v234
      %v515 = vunpack.c.h.b16 %v234
      %v516 = vunpack.c.l.b16 %v235
      %v517 = vunpack.c.h.b16 %v235
      %v518 = vunpack.c.l.b16 %v236
      %v519 = vunpack.c.l.b16 %v237
      %v520 = vunpack.c.h.b16 %v237
      %v521 = vunpack.c.l.b16 %v238
      %v522 = vunpack.c.h.b16 %v238
      %v523 = vunpack.c.l.b16 %v239
      %v524 = vunpack.c.h.b16 %v239
      %v525 = vunpack.c.l.b16 %v240
      %v526 = vunpack.c.h.b16 %v240
      %v527 = vunpack.c.l.b16 %v241
      %v528 = vunpack.c.h.b16 %v241
      %v529 = vunpack.c.l.b16 %v242
      %v530 = vunpack.c.h.b16 %v242
      %v531 = vunpack.c.l.b16 %v243
      %v532 = vpack.c.b16 %v493, %v480
      %v533 = vpack.c.b16 %v494, %v481
      %v534 = vpack.c.b16 %v495, %v482
      %v535 = vpack.c.b16 %v496, %v483
      %v536 = vpack.c.b16 %v497, %v484
      %v537 = vpack.c.b16 %v498, %v485
      %v538 = vpack.c.b16 %v499, %v486
      %v539 = vpack.c.b16 %v500, %v487
      %v540 = vpack.c.b16 %v501, %v488
      %v541 = vpack.c.b16 %v502, %v489
      %v542 = vpack.c.b16 %v503, %v490
      %v543 = vpack.c.b16 %v504, %v491
      %v544 = vpack.c.b16 %v505, %v492
      %v545 = vpack.c.b16 %v519, %v506
      %v546 = vpack.c.b16 %v520, %v507
      %v547 = vpack.c.b16 %v521, %v508
      %v548 = vpack.c.b16 %v522, %v509
      %v549 = vpack.c.b16 %v523, %v510
      %v550 = vpack.c.b16 %v524, %v511
      %v551 = vpack.c.b16 %v525, %v512
      %v552 = vpack.c.b16 %v526, %v513
      %v553 = vpack.c.b16 %v527, %v514
      %v554 = vpack.c.b16 %v528, %v515
      %v555 = vpack.c.b16 %v529, %v516
      %v556 = vpack.c.b16 %v530, %v517
      %v557 = vpack.c.b16 %v531, %v518
      %v792 = vunpack.c.l.b16 %v244
      %v793 = vunpack.c.l.b16 %v245
      %v794 = vunpack.c.l.b16 %v246
      %v795 = vunpack.c.l.b16 %v247
      %v796 = vunpack.c.l.b16 %v248
      %v797 = vunpack.c.l.b16 %v249
      %v798 = vunpack.c.l.b16 %v250
      %v799 = vunpack.c.l.b16 %v251
      %v800 = vunpack.c.l.b16 %v252
      %v801 = vunpack.c.l.b16 %v253
      %v802 = vunpack.c.l.b16 %v254
      %v803 = vunpack.c.l.b16 %v255
      %v804 = vunpack.c.l.b16 %v256
      %v805 = vunpack.c.l.b16 %v257
      %v806 = vunpack.c.l.b16 %v258
      %v807 = vunpack.c.l.b16 %v259
      %v808 = vunpack.c.l.b16 %v260
      %v809 = vunpack.c.l.b16 %v261
      %v810 = vunpack.c.l.b16 %v262
      %v811 = vunpack.c.l.b16 %v263
      %v812 = vunpack.c.l.b16 %v264
      %v813 = vunpack.c.l.b16 %v265
      %v814 = vunpack.c.l.b16 %v266
      %v815 = vunpack.c.l.b16 %v267
      %v816 = vunpack.c.l.b16 %v268
      %v817 = vunpack.c.l.b16 %v269
      %v818 = vunpack.c.l.b16 %v270
      %v819 = vunpack.c.l.b16 %v271
      %v820 = vunpack.c.l.b16 %v272
      %v821 = vunpack.c.l.b16 %v273
      %v822 = vunpack.c.l.b16 %v274
      %v823 = vunpack.c.l.b16 %v275
      %v824 = vunpack.c.l.b16 %v276
      %v825 = vunpack.c.l.b16 %v277
      %v826 = vunpack.c.l.b16 %v278
      %v827 = vunpack.c.l.b16 %v279
      %v828 = vunpack.c.l.b16 %v280
      %v829 = vunpack.c.l.b16 %v281
      %v830 = vunpack.c.l.b16 %v282
      %v831 = vunpack.c.l.b16 %v283
      %v832 = vunpack.c.l.b16 %v284
      %v833 = vunpack.c.l.b16 %v285
      %v834 = vunpack.c.l.b16 %v286
      %v835 = vunpack.c.l.b16 %v287
      %v836 = vunpack.c.l.b16 %v288
      %v837 = vunpack.c.l.b16 %v289
      %v838 = vunpack.c.l.b16 %v290
      %v839 = vunpack.c.l.b16 %v291
      %v840 = vunpack.c.l.b16 %v292
      %v841 = vunpack.c.l.b16 %v293
      %v842 = vunpack.c.l.b16 %v294
      %v843 = vunpack.c.l.b16 %v295
      %v844 = vunpack.c.l.b16 %v296
      %v845 = vunpack.c.l.b16 %v297
      %v846 = vunpack.c.l.b16 %v298
      %v847 = vunpack.c.l.b16 %v299
      %v848 = vunpack.c.l.b16 %v300
      %v849 = vunpack.c.l.b16 %v301
      %v850 = vunpack.c.l.b16 %v302
      %v851 = vunpack.c.l.b16 %v303
      %v852 = vunpack.c.l.b16 %v304
      %v853 = vunpack.c.l.b16 %v305
      %v854 = vunpack.c.l.b16 %v306
      %v855 = vunpack.c.l.b16 %v307
      %v856 = vunpack.c.l.b16 %v308
      %v857 = vunpack.c.l.b16 %v309
      %v858 = vunpack.c.l.b16 %v310
      %v859 = vunpack.c.l.b16 %v311
      %v860 = vunpack.c.l.b16 %v312
      %v861 = vunpack.c.l.b16 %v313
      %v862 = vunpack.c.l.b16 %v314
      %v863 = vunpack.c.l.b16 %v315
      %v864 = vunpack.c.l.b16 %v316
      %v865 = vunpack.c.l.b16 %v317
      %v866 = vunpack.c.l.b16 %v318
      %v867 = vunpack.c.l.b16 %v319
      %v868 = vunpack.c.l.b16 %v320
      %v869 = vunpack.c.l.b16 %v321
      %v870 = vunpack.c.l.b16 %v322
      %v871 = vunpack.c.l.b16 %v323
      %v872 = vunpack.c.l.b16 %v324
      %v873 = vunpack.c.l.b16 %v325
      %v874 = vunpack.c.l.b16 %v326
      %v875 = vunpack.c.l.b16 %v327
      %v876 = vunpack.c.l.b16 %v328
      %v877 = vunpack.c.l.b16 %v329
      %v878 = vunpack.c.l.b16 %v330
      %v879 = vunpack.c.l.b16 %v331
      %v880 = vunpack.c.l.b16 %v332
      %v881 = vunpack.c.l.b16 %v333
      %v882 = vunpack.c.l.b16 %v334
      %v883 = vunpack.c.l.b16 %v335
      %v884 = vunpack.c.l.b16 %v336
      %v885 = vunpack.c.l.b16 %v337
      %v886 = vunpack.c.l.b16 %v338
      %v887 = vunpack.c.l.b16 %v339
      %v888 = vunpack.c.l.b16 %v340
      %v889 = vunpack.c.l.b16 %v341
      %v890 = vunpack.c.l.b16 %v342
      %v891 = vunpack.c.l.b16 %v343
      %v892 = vunpack.c.l.b16 %v344
      %v893 = vunpack.c.l.b16 %v345
      %v894 = vunpack.c.l.b16 %v346
      %v895 = vunpack.c.l.b16 %v347
      %v896 = vunpack.c.l.b16 %v348
      %v897 = vunpack.c.l.b16 %v349
      %v898 = vunpack.c.l.b16 %v350
      %v899 = vunpack.c.l.b16 %v351
      %v900 = vunpack.c.l.b16 %v352
      %v901 = vunpack.c.l.b16 %v353
      %v902 = vunpack.c.l.b16 %v354
      %v903 = vunpack.c.l.b16 %v355
      %v904 = vunpack.c.l.b16 %v356
      %v905 = vunpack.c.l.b16 %v357
      %v906 = vunpack.c.l.b16 %v358
      %v907 = vunpack.c.l.b16 %v359
      %v908 = vunpack.c.l.b16 %v360
      %v909 = vunpack.c.l.b16 %v361
      %v910 = vunpack.c.l.b16 %v362
      %v911 = vunpack.c.l.b16 %v363
      %v912 = vunpack.c.l.b16 %v364
      %v913 = vunpack.c.l.b16 %v365
      %v914 = vunpack.c.l.b16 %v366
      %v915 = vunpack.c.l.b16 %v367
      %v916 = vunpack.c.l.b16 %v368
      %v917 = vunpack.c.l.b16 %v369
      %v918 = vunpack.c.l.b16 %v370
      %v919 = vunpack.c.l.b16 %v371
      %v920 = vunpack.c.l.b16 %v372
      %v921 = vunpack.c.l.b16 %v373
      %v922 = vunpack.c.l.b16 %v374
      %v923 = vunpack.c.l.b16 %v375
      %v924 = vunpack.c.l.b16 %v376
      %v925 = vunpack.c.l.b16 %v377
      %v926 = vunpack.c.l.b16 %v378
      %v927 = vunpack.c.l.b16 %v379
      %v928 = vunpack.c.l.b16 %v380
      %v929 = vunpack.c.l.b16 %v381
      %v930 = vunpack.c.l.b16 %v382
      %v931 = vunpack.c.l.b16 %v383
      %v932 = vunpack.c.l.b16 %v384
      %v933 = vunpack.c.l.b16 %v385
      %v934 = vunpack.c.l.b16 %v386
      %v935 = vunpack.c.l.b16 %v387
      %v936 = vunpack.c.l.b16 %v388
      %v937 = vunpack.c.l.b16 %v389
      %v938 = vunpack.c.l.b16 %v390
      %v939 = vunpack.c.l.b16 %v391
      %v940 = vunpack.c.l.b16 %v392
      %v941 = vunpack.c.l.b16 %v393
      %v942 = vunpack.c.l.b16 %v394
      %v943 = vunpack.c.l.b16 %v395
      %v944 = vunpack.c.l.b16 %v396
      %v945 = vunpack.c.l.b16 %v397
      %v946 = vunpack.c.l.b16 %v398
      %v947 = vunpack.c.l.b16 %v399
      %v948 = vunpack.c.l.b16 %v400
      %v949 = vunpack.c.l.b16 %v401
      %v950 = vunpack.c.l.b16 %v402
      %v951 = vunpack.c.l.b16 %v403
      %v952 = vunpack.c.l.b16 %v404
      %v953 = vunpack.c.l.b16 %v405
      %v954 = vunpack.c.l.b16 %v406
      %v955 = vunpack.c.l.b16 %v407
      %v956 = vunpack.c.l.b16 %v408
      %v957 = vunpack.c.l.b16 %v409
      %v958 = vunpack.c.l.b16 %v410
      %v959 = vunpack.c.l.b16 %v411
      %v960 = vunpack.c.l.b16 %v412
      %v961 = vunpack.c.l.b16 %v413
      %v962 = vunpack.c.l.b16 %v414
      %v963 = vunpack.c.l.b16 %v415
      %v964 = vunpack.c.l.b16 %v416
      %v965 = vunpack.c.l.b16 %v417
      %v966 = vunpack.c.l.b16 %v418
      %v967 = vunpack.c.l.b16 %v419
      %v968 = vunpack.c.l.b16 %v420
      %v969 = vunpack.c.l.b16 %v421
      %v970 = vunpack.c.l.b16 %v422
      %v971 = vunpack.c.l.b16 %v423
      %v972 = vunpack.c.l.b16 %v424
      %v973 = vunpack.c.l.b16 %v425
      %v974 = vunpack.c.l.b16 %v426
      %v975 = vunpack.c.l.b16 %v427
      %v976 = vunpack.c.l.b16 %v428
      %v977 = vunpack.c.l.b16 %v429
      %v978 = vunpack.c.l.b16 %v430
      %v979 = vunpack.c.l.b16 %v431
      %v980 = vunpack.c.l.b16 %v432
      %v981 = vunpack.c.l.b16 %v433
      %v982 = vunpack.c.l.b16 %v434
      %v983 = vunpack.c.l.b16 %v435
      %v984 = vunpack.c.l.b16 %v436
      %v985 = vunpack.c.l.b16 %v437
      %v986 = vunpack.c.l.b16 %v438
      %v987 = vunpack.c.l.b16 %v439
      %v988 = vunpack.c.l.b16 %v440
      %v989 = vunpack.c.l.b16 %v441
      %v990 = vunpack.c.l.b16 %v442
      %v991 = vunpack.c.l.b16 %v443
      %v992 = vunpack.c.l.b16 %v444
      %v993 = vunpack.c.l.b16 %v445
      %v994 = vunpack.c.l.b16 %v446
      %v995 = vunpack.c.l.b16 %v447
      %v996 = vunpack.c.l.b16 %v448
      %v997 = vunpack.c.l.b16 %v449
      %v998 = vunpack.c.l.b16 %v450
      %v999 = vunpack.c.l.b16 %v451
      %v1000 = vpack.c.b16 %v793, %v792
      %v1001 = vpack.c.b16 %v795, %v794
      %v1002 = vpack.c.b16 %v797, %v796
      %v1003 = vpack.c.b16 %v799, %v798
      %v1004 = vpack.c.b16 %v801, %v800
      %v1005 = vpack.c.b16 %v803, %v802
      %v1006 = vpack.c.b16 %v805, %v804
      %v1007 = vpack.c.b16 %v807, %v806
      %v1008 = vpack.c.b16 %v809, %v808
      %v1009 = vpack.c.b16 %v811, %v810
      %v1010 = vpack.c.b16 %v813, %v812
      %v1011 = vpack.c.b16 %v815, %v814
      %v1012 = vpack.c.b16 %v817, %v816
      %v1013 = vpack.c.b16 %v819, %v818
      %v1014 = vpack.c.b16 %v821, %v820
      %v1015 = vpack.c.b16 %v823, %v822
      %v1016 = vpack.c.b16 %v825, %v824
      %v1017 = vpack.c.b16 %v827, %v826
      %v1018 = vpack.c.b16 %v829, %v828
      %v1019 = vpack.c.b16 %v831, %v830
      %v1020 = vpack.c.b16 %v833, %v832
      %v1021 = vpack.c.b16 %v835, %v834
      %v1022 = vpack.c.b16 %v837, %v836
      %v1023 = vpack.c.b16 %v839, %v838
      %v1024 = vpack.c.b16 %v841, %v840
      %v1025 = vpack.c.b16 %v843, %v842
      %v1026 = vpack.c.b16 %v845, %v844
      %v1027 = vpack.c.b16 %v847, %v846
      %v1028 = vpack.c.b16 %v849, %v848
      %v1029 = vpack.c.b16 %v851, %v850
      %v1030 = vpack.c.b16 %v853, %v852
      %v1031 = vpack.c.b16 %v855, %v854
      %v1032 = vpack.c.b16 %v857, %v856
      %v1033 = vpack.c.b16 %v859, %v858
      %v1034 = vpack.c.b16 %v861, %v860
      %v1035 = vpack.c.b16 %v863, %v862
      %v1036 = vpack.c.b16 %v865, %v864
      %v1037 = vpack.c.b16 %v867, %v866
      %v1038 = vpack.c.b16 %v869, %v868
      %v1039 = vpack.c.b16 %v871, %v870
      %v1040 = vpack.c.b16 %v873, %v872
      %v1041 = vpack.c.b16 %v875, %v874
      %v1042 = vpack.c.b16 %v877, %v876
      %v1043 = vpack.c.b16 %v879, %v878
      %v1044 = vpack.c.b16 %v881, %v880
      %v1045 = vpack.c.b16 %v883, %v882
      %v1046 = vpack.c.b16 %v885, %v884
      %v1047 = vpack.c.b16 %v887, %v886
      %v1048 = vpack.c.b16 %v889, %v888
      %v1049 = vpack.c.b16 %v891, %v890
      %v1050 = vpack.c.b16 %v893, %v892
      %v1051 = vpack.c.b16 %v895, %v894
      %v1052 = vpack.c.b16 %v897, %v896
      %v1053 = vpack.c.b16 %v899, %v898
      %v1054 = vpack.c.b16 %v901, %v900
      %v1055 = vpack.c.b16 %v903, %v902
      %v1056 = vpack.c.b16 %v905, %v904
      %v1057 = vpack.c.b16 %v907, %v906
      %v1058 = vpack.c.b16 %v909, %v908
      %v1059 = vpack.c.b16 %v911, %v910
      %v1060 = vpack.c.b16 %v913, %v912
      %v1061 = vpack.c.b16 %v915, %v914
      %v1062 = vpack.c.b16 %v917, %v916
      %v1063 = vpack.c.b16 %v919, %v918
      %v1064 = vpack.c.b16 %v921, %v920
      %v1065 = vpack.c.b16 %v923, %v922
      %v1066 = vpack.c.b16 %v925, %v924
      %v1067 = vpack.c.b16 %v927, %v926
      %v1068 = vpack.c.b16 %v929, %v928
      %v1069 = vpack.c.b16 %v931, %v930
      %v1070 = vpack.c.b16 %v933, %v932
      %v1071 = vpack.c.b16 %v935, %v934
      %v1072 = vpack.c.b16 %v937, %v936
      %v1073 = vpack.c.b16 %v939, %v938
      %v1074 = vpack.c.b16 %v941, %v940
      %v1075 = vpack.c.b16 %v943, %v942
      %v1076 = vpack.c.b16 %v945, %v944
      %v1077 = vpack.c.b16 %v947, %v946
      %v1078 = vpack.c.b16 %v949, %v948
      %v1079 = vpack.c.b16 %v951, %v950
      %v1080 = vpack.c.b16 %v953, %v952
      %v1081 = vpack.c.b16 %v955, %v954
      %v1082 = vpack.c.b16 %v957, %v956
      %v1083 = vpack.c.b16 %v959, %v958
      %v1084 = vpack.c.b16 %v961, %v960
      %v1085 = vpack.c.b16 %v963, %v962
      %v1086 = vpack.c.b16 %v965, %v964
      %v1087 = vpack.c.b16 %v967, %v966
      %v1088 = vpack.c.b16 %v969, %v968
      %v1089 = vpack.c.b16 %v971, %v970
      %v1090 = vpack.c.b16 %v973, %v972
      %v1091 = vpack.c.b16 %v975, %v974
      %v1092 = vpack.c.b16 %v977, %v976
      %v1093 = vpack.c.b16 %v979, %v978
      %v1094 = vpack.c.b16 %v981, %v980
      %v1095 = vpack.c.b16 %v983, %v982
      %v1096 = vpack.c.b16 %v985, %v984
      %v1097 = vpack.c.b16 %v987, %v986
      %v1098 = vpack.c.b16 %v989, %v988
      %v1099 = vpack.c.b16 %v991, %v990
      %v1100 = vpack.c.b16 %v993, %v992
      %v1101 = vpack.c.b16 %v995, %v994
      %v1102 = vpack.c.b16 %v997, %v996
      %v1103 = vpack.c.b16 %v999, %v998
      %1208 = vmatpush.bf16.msra.mxu0 %v1007
      %1209 = vmatpush.bf16.msra.mxu0 %v1006
      %1210 = vmatpush.bf16.msra.mxu0 %v1005
      %1211 = vmatpush.bf16.msra.mxu0 %v1004
      %1212 = vmatpush.bf16.msra.mxu0 %v1003
      %1213 = vmatpush.bf16.msra.mxu0 %v1002
      %1214 = vmatpush.bf16.msra.mxu0 %v1001
      %1215 = vmatpush.bf16.msra.mxu0 %v1000
      %1216 = vmatmul.bf16.gmra.mxu0 %v532
      %v1217 = vpop.f32.mrf.mxu0
      %v1218 = vadd.f32 0.0, %v1217
      %v1219 = vpop.f32.mrf.mxu0
      %v1220 = vadd.f32 0.0, %v1219
      %1221 = vmatmul.bf16.gmra.mxu0 %v545
      %v1222 = vpop.f32.mrf.mxu0
      %v1223 = vadd.f32 0.0, %v1222
      %v1224 = vpop.f32.mrf.mxu0
      %v1225 = vadd.f32 0.0, %v1224
      %1226 = vdwg.mxu0
      %1227 = vmatpush.bf16.msra.mxu0 %v1015
      %1228 = vmatpush.bf16.msra.mxu0 %v1014
      %1229 = vmatpush.bf16.msra.mxu0 %v1013
      %1230 = vmatpush.bf16.msra.mxu0 %v1012
      %1231 = vmatpush.bf16.msra.mxu0 %v1011
      %1232 = vmatpush.bf16.msra.mxu0 %v1010
      %1233 = vmatpush.bf16.msra.mxu0 %v1009
      %1234 = vmatpush.bf16.msra.mxu0 %v1008
      %1235 = vmatmul.bf16.gmra.mxu0 %v533
      %v1236 = vpop.f32.mrf.mxu0
      %v1237 = vadd.f32 %v1218, %v1236
      %v1238 = vpop.f32.mrf.mxu0
      %v1239 = vadd.f32 %v1220, %v1238
      %1240 = vmatmul.bf16.gmra.mxu0 %v546
      %v1241 = vpop.f32.mrf.mxu0
      %v1242 = vadd.f32 %v1223, %v1241
      %v1243 = vpop.f32.mrf.mxu0
      %v1244 = vadd.f32 %v1225, %v1243
      %1245 = vdwg.mxu0
      %1246 = vmatpush.bf16.msra.mxu0 %v1023
      %1247 = vmatpush.bf16.msra.mxu0 %v1022
      %1248 = vmatpush.bf16.msra.mxu0 %v1021
      %1249 = vmatpush.bf16.msra.mxu0 %v1020
      %1250 = vmatpush.bf16.msra.mxu0 %v1019
      %1251 = vmatpush.bf16.msra.mxu0 %v1018
      %1252 = vmatpush.bf16.msra.mxu0 %v1017
      %1253 = vmatpush.bf16.msra.mxu0 %v1016
      %1254 = vmatmul.bf16.gmra.mxu0 %v534
      %v1255 = vpop.f32.mrf.mxu0
      %v1256 = vadd.f32 %v1237, %v1255
      %v1257 = vpop.f32.mrf.mxu0
      %v1258 = vadd.f32 %v1239, %v1257
      %1259 = vmatmul.bf16.gmra.mxu0 %v547
      %v1260 = vpop.f32.mrf.mxu0
      %v1261 = vadd.f32 %v1242, %v1260
      %v1262 = vpop.f32.mrf.mxu0
      %v1263 = vadd.f32 %v1244, %v1262
      %1264 = vdwg.mxu0
      %1265 = vmatpush.bf16.msra.mxu0 %v1031
      %1266 = vmatpush.bf16.msra.mxu0 %v1030
      %1267 = vmatpush.bf16.msra.mxu0 %v1029
      %1268 = vmatpush.bf16.msra.mxu0 %v1028
      %1269 = vmatpush.bf16.msra.mxu0 %v1027
      %1270 = vmatpush.bf16.msra.mxu0 %v1026
      %1271 = vmatpush.bf16.msra.mxu0 %v1025
      %1272 = vmatpush.bf16.msra.mxu0 %v1024
      %1273 = vmatmul.bf16.gmra.mxu0 %v535
      %v1274 = vpop.f32.mrf.mxu0
      %v1275 = vadd.f32 %v1256, %v1274
      %v1276 = vpop.f32.mrf.mxu0
      %v1277 = vadd.f32 %v1258, %v1276
      %1278 = vmatmul.bf16.gmra.mxu0 %v548
      %v1279 = vpop.f32.mrf.mxu0
      %v1280 = vadd.f32 %v1261, %v1279
      %v1281 = vpop.f32.mrf.mxu0
      %v1282 = vadd.f32 %v1263, %v1281
      %1283 = vdwg.mxu0
      %1284 = vmatpush.bf16.msra.mxu0 %v1039
      %1285 = vmatpush.bf16.msra.mxu0 %v1038
      %1286 = vmatpush.bf16.msra.mxu0 %v1037
      %1287 = vmatpush.bf16.msra.mxu0 %v1036
      %1288 = vmatpush.bf16.msra.mxu0 %v1035
      %1289 = vmatpush.bf16.msra.mxu0 %v1034
      %1290 = vmatpush.bf16.msra.mxu0 %v1033
      %1291 = vmatpush.bf16.msra.mxu0 %v1032
      %1292 = vmatmul.bf16.gmra.mxu0 %v536
      %v1293 = vpop.f32.mrf.mxu0
      %v1294 = vadd.f32 %v1275, %v1293
      %v1295 = vpop.f32.mrf.mxu0
      %v1296 = vadd.f32 %v1277, %v1295
      %1297 = vmatmul.bf16.gmra.mxu0 %v549
      %v1298 = vpop.f32.mrf.mxu0
      %v1299 = vadd.f32 %v1280, %v1298
      %v1300 = vpop.f32.mrf.mxu0
      %v1301 = vadd.f32 %v1282, %v1300
      %1302 = vdwg.mxu0
      %1303 = vmatpush.bf16.msra.mxu0 %v1047
      %1304 = vmatpush.bf16.msra.mxu0 %v1046
      %1305 = vmatpush.bf16.msra.mxu0 %v1045
      %1306 = vmatpush.bf16.msra.mxu0 %v1044
      %1307 = vmatpush.bf16.msra.mxu0 %v1043
      %1308 = vmatpush.bf16.msra.mxu0 %v1042
      %1309 = vmatpush.bf16.msra.mxu0 %v1041
      %1310 = vmatpush.bf16.msra.mxu0 %v1040
      %1311 = vmatmul.bf16.gmra.mxu0 %v537
      %v1312 = vpop.f32.mrf.mxu0
      %v1313 = vadd.f32 %v1294, %v1312
      %v1314 = vpop.f32.mrf.mxu0
      %v1315 = vadd.f32 %v1296, %v1314
      %1316 = vmatmul.bf16.gmra.mxu0 %v550
      %v1317 = vpop.f32.mrf.mxu0
      %v1318 = vadd.f32 %v1299, %v1317
      %v1319 = vpop.f32.mrf.mxu0
      %v1320 = vadd.f32 %v1301, %v1319
      %1321 = vdwg.mxu0
      %1322 = vmatpush.bf16.msra.mxu0 %v1055
      %1323 = vmatpush.bf16.msra.mxu0 %v1054
      %1324 = vmatpush.bf16.msra.mxu0 %v1053
      %1325 = vmatpush.bf16.msra.mxu0 %v1052
      %1326 = vmatpush.bf16.msra.mxu0 %v1051
      %1327 = vmatpush.bf16.msra.mxu0 %v1050
      %1328 = vmatpush.bf16.msra.mxu0 %v1049
      %1329 = vmatpush.bf16.msra.mxu0 %v1048
      %1330 = vmatmul.bf16.gmra.mxu0 %v538
      %v1331 = vpop.f32.mrf.mxu0
      %v1332 = vadd.f32 %v1313, %v1331
      %v1333 = vpop.f32.mrf.mxu0
      %v1334 = vadd.f32 %v1315, %v1333
      %1335 = vmatmul.bf16.gmra.mxu0 %v551
      %v1336 = vpop.f32.mrf.mxu0
      %v1337 = vadd.f32 %v1318, %v1336
      %v1338 = vpop.f32.mrf.mxu0
      %v1339 = vadd.f32 %v1320, %v1338
      %1340 = vdwg.mxu0
      %1341 = vmatpush.bf16.msra.mxu0 %v1063
      %1342 = vmatpush.bf16.msra.mxu0 %v1062
      %1343 = vmatpush.bf16.msra.mxu0 %v1061
      %1344 = vmatpush.bf16.msra.mxu0 %v1060
      %1345 = vmatpush.bf16.msra.mxu0 %v1059
      %1346 = vmatpush.bf16.msra.mxu0 %v1058
      %1347 = vmatpush.bf16.msra.mxu0 %v1057
      %1348 = vmatpush.bf16.msra.mxu0 %v1056
      %1349 = vmatmul.bf16.gmra.mxu0 %v539
      %v1350 = vpop.f32.mrf.mxu0
      %v1351 = vadd.f32 %v1332, %v1350
      %v1352 = vpop.f32.mrf.mxu0
      %v1353 = vadd.f32 %v1334, %v1352
      %1354 = vmatmul.bf16.gmra.mxu0 %v552
      %v1355 = vpop.f32.mrf.mxu0
      %v1356 = vadd.f32 %v1337, %v1355
      %v1357 = vpop.f32.mrf.mxu0
      %v1358 = vadd.f32 %v1339, %v1357
      %1359 = vdwg.mxu0
      %1360 = vmatpush.bf16.msra.mxu0 %v1071
      %1361 = vmatpush.bf16.msra.mxu0 %v1070
      %1362 = vmatpush.bf16.msra.mxu0 %v1069
      %1363 = vmatpush.bf16.msra.mxu0 %v1068
      %1364 = vmatpush.bf16.msra.mxu0 %v1067
      %1365 = vmatpush.bf16.msra.mxu0 %v1066
      %1366 = vmatpush.bf16.msra.mxu0 %v1065
      %1367 = vmatpush.bf16.msra.mxu0 %v1064
      %1368 = vmatmul.bf16.gmra.mxu0 %v540
      %v1369 = vpop.f32.mrf.mxu0
      %v1370 = vadd.f32 %v1351, %v1369
      %v1371 = vpop.f32.mrf.mxu0
      %v1372 = vadd.f32 %v1353, %v1371
      %1373 = vmatmul.bf16.gmra.mxu0 %v553
      %v1374 = vpop.f32.mrf.mxu0
      %v1375 = vadd.f32 %v1356, %v1374
      %v1376 = vpop.f32.mrf.mxu0
      %v1377 = vadd.f32 %v1358, %v1376
      %1378 = vdwg.mxu0
      %1379 = vmatpush.bf16.msra.mxu0 %v1079
      %1380 = vmatpush.bf16.msra.mxu0 %v1078
      %1381 = vmatpush.bf16.msra.mxu0 %v1077
      %1382 = vmatpush.bf16.msra.mxu0 %v1076
      %1383 = vmatpush.bf16.msra.mxu0 %v1075
      %1384 = vmatpush.bf16.msra.mxu0 %v1074
      %1385 = vmatpush.bf16.msra.mxu0 %v1073
      %1386 = vmatpush.bf16.msra.mxu0 %v1072
      %1387 = vmatmul.bf16.gmra.mxu0 %v541
      %v1388 = vpop.f32.mrf.mxu0
      %v1389 = vadd.f32 %v1370, %v1388
      %v1390 = vpop.f32.mrf.mxu0
      %v1391 = vadd.f32 %v1372, %v1390
      %1392 = vmatmul.bf16.gmra.mxu0 %v554
      %v1393 = vpop.f32.mrf.mxu0
      %v1394 = vadd.f32 %v1375, %v1393
      %v1395 = vpop.f32.mrf.mxu0
      %v1396 = vadd.f32 %v1377, %v1395
      %1397 = vdwg.mxu0
      %1398 = vmatpush.bf16.msra.mxu0 %v1087
      %1399 = vmatpush.bf16.msra.mxu0 %v1086
      %1400 = vmatpush.bf16.msra.mxu0 %v1085
      %1401 = vmatpush.bf16.msra.mxu0 %v1084
      %1402 = vmatpush.bf16.msra.mxu0 %v1083
      %1403 = vmatpush.bf16.msra.mxu0 %v1082
      %1404 = vmatpush.bf16.msra.mxu0 %v1081
      %1405 = vmatpush.bf16.msra.mxu0 %v1080
      %1406 = vmatmul.bf16.gmra.mxu0 %v542
      %v1407 = vpop.f32.mrf.mxu0
      %v1408 = vadd.f32 %v1389, %v1407
      %v1409 = vpop.f32.mrf.mxu0
      %v1410 = vadd.f32 %v1391, %v1409
      %1411 = vmatmul.bf16.gmra.mxu0 %v555
      %v1412 = vpop.f32.mrf.mxu0
      %v1413 = vadd.f32 %v1394, %v1412
      %v1414 = vpop.f32.mrf.mxu0
      %v1415 = vadd.f32 %v1396, %v1414
      %1416 = vdwg.mxu0
      %1417 = vmatpush.bf16.msra.mxu0 %v1095
      %1418 = vmatpush.bf16.msra.mxu0 %v1094
      %1419 = vmatpush.bf16.msra.mxu0 %v1093
      %1420 = vmatpush.bf16.msra.mxu0 %v1092
      %1421 = vmatpush.bf16.msra.mxu0 %v1091
      %1422 = vmatpush.bf16.msra.mxu0 %v1090
      %1423 = vmatpush.bf16.msra.mxu0 %v1089
      %1424 = vmatpush.bf16.msra.mxu0 %v1088
      %1425 = vmatmul.bf16.gmra.mxu0 %v543
      %v1426 = vpop.f32.mrf.mxu0
      %v1427 = vadd.f32 %v1408, %v1426
      %v1428 = vpop.f32.mrf.mxu0
      %v1429 = vadd.f32 %v1410, %v1428
      %1430 = vmatmul.bf16.gmra.mxu0 %v556
      %v1431 = vpop.f32.mrf.mxu0
      %v1432 = vadd.f32 %v1413, %v1431
      %v1433 = vpop.f32.mrf.mxu0
      %v1434 = vadd.f32 %v1415, %v1433
      %1435 = vdwg.mxu0
      %1436 = vmatpush.bf16.msra.mxu0 %v1103
      %1437 = vmatpush.bf16.msra.mxu0 %v1102
      %1438 = vmatpush.bf16.msra.mxu0 %v1101
      %1439 = vmatpush.bf16.msra.mxu0 %v1100
      %1440 = vmatpush.bf16.msra.mxu0 %v1099
      %1441 = vmatpush.bf16.msra.mxu0 %v1098
      %1442 = vmatpush.bf16.msra.mxu0 %v1097
      %1443 = vmatpush.bf16.msra.mxu0 %v1096
      %1444 = vmatmul.bf16.gmra.mxu0 %v544
      %v1445 = vpop.f32.mrf.mxu0
      %v1446 = vadd.f32 %v1427, %v1445
      %v1447 = vpop.f32.mrf.mxu0
      %v1448 = vadd.f32 %v1429, %v1447
      %1449 = vmatmul.bf16.gmra.mxu0 %v557
      %v1450 = vpop.f32.mrf.mxu0
      %v1451 = vadd.f32 %v1432, %v1450
      %v1452 = vpop.f32.mrf.mxu0
      %v1453 = vadd.f32 %v1434, %v1452
      %1454 = vdwg.mxu0
      %p1455 = scmp.eq.s32.totalorder %s19, 0
      %p1456 = scmp.eq.s32.totalorder %s20, 0
      %p1457 = pnand %p1455, %p1456
      %p1458 = pneg %p1457
      // Predicated region
      $region37: #{discriminator_forward.5} parent=35 // pred_check
        _
      $region38: #{discriminator_forward.5} parent=35 // pred_check_branch
        %1460 = sbr.rel (%p1457) target = $region40
      $region39: #{discriminator_forward.5} parent=35 // pred_region
        %1461 = vst [vmem:[#allocation2] sm:$0x1] 0.0
        %1462 = vst [vmem:[#allocation3] sm:$0x1] 0.0
      $region40: #{discriminator_forward.5} parent=35 // pred_fallthru
        _
      // Predicated region
      $region41: #{discriminator_forward.5} parent=35 // pred_check
        %p1463 = pneg %p1455
      $region42: #{discriminator_forward.5} parent=35 // pred_check_branch
        %1465 = sbr.rel (%p1463) target = $region44
      $region43: #{discriminator_forward.5} parent=35 // pred_region
        %v1466 = vld [vmem:[#allocation2] sm:$0x1]
        %v1467 = vadd.f32 %v1446, %v1448
        %v1468 = vadd.f32 %v1467, %v1451
        %v1469 = vadd.f32 %v1468, %v1453
        %v1470 = vrot.slane %v1469, 4
        %v1471 = vadd.f32 %v1469, %v1470
        %v1472 = vrot.slane %v1471, 2
        %v1473 = vadd.f32 %v1471, %v1472
        %v1474 = vrot.slane %v1473, 1
        %v1475 = vadd.f32 %v1473, %v1474
        %v1476 = vadd.f32 %v1466, %v1475
        %1477 = vst [vmem:[#allocation2] sm:$0x1] %v1476
        %v1478 = vld [vmem:[#allocation3] sm:$0x1]
        %v1479 = vmul.f32 %v1446, %v1446
        %v1480 = vmul.f32 %v1448, %v1448
        %v1481 = vmul.f32 %v1451, %v1451
        %v1482 = vmul.f32 %v1453, %v1453
        %v1483 = vadd.f32 %v1479, %v1480
        %v1484 = vadd.f32 %v1483, %v1481
        %v1485 = vadd.f32 %v1484, %v1482
        %v1486 = vrot.slane %v1485, 4
        %v1487 = vadd.f32 %v1485, %v1486
        %v1488 = vrot.slane %v1487, 2
        %v1489 = vadd.f32 %v1487, %v1488
        %v1490 = vrot.slane %v1489, 1
        %v1491 = vadd.f32 %v1489, %v1490
        %v1492 = vadd.f32 %v1478, %v1491
        %1493 = vst [vmem:[#allocation3] sm:$0x1] %v1492
        %1494 = vst [vmem:[%s214] sm:$0xff] 0.0
        %1495 = vst [vmem:[%s214 + $0x8] sm:$0xff] 0.0
        %1496 = vst [vmem:[%s214 + $0x10] sm:$0xff] 0.0
        %1497 = vst [vmem:[%s214 + $0x18] sm:$0xff] 0.0
      $region44: #{discriminator_forward.5} parent=35 // pred_fallthru
        _
      %p1498 = scmp.eq.s32.totalorder %s19, 1
      // Predicated region
      $region45: #{discriminator_forward.5} parent=35 // pred_check
        %p1499 = pneg %p1498
      $region46: #{discriminator_forward.5} parent=35 // pred_check_branch
        %1501 = sbr.rel (%p1499) target = $region48
      $region47: #{discriminator_forward.5} parent=35 // pred_region
        %v1502 = vld [vmem:[#allocation2] sm:$0x1]
        %v1503 = vmul.f32 %v1502, 0.03125
        %v1504 = vld [vmem:[#allocation3] sm:$0x1]
        %v1505 = vmul.f32 %v1504, 0.03125
        %v1506 = vmul.f32 %v1503, %v1503
        %v1507 = vsub.f32 %v1505, %v1506
        %v1508 = vmax.f32 %v1507, 0.0
        %v1509 = vadd.f32 %v1508, 1e-05
        %v1510 = vrsqrt.pop %v1509
        %v1511 = vmul.f32 %v1510, %v1509
        %v1512 = vmul.f32 %v1511, %v1510
        %v1513 = vmul.f32 0.5, %v1512
        %v1514 = vsub.f32 1.5, %v1513
        %v1515 = vmul.f32 %v1510, %v1514
        %vm1516 = vweird.f32 %v1509
        %vm1517 = vweird.f32 %v1510
        %vm1518 = vmor %vm1516, %vm1517
        %v1519 = vsel %vm1518, %v1510, %v1515
        %v1521 = vperm.slane %v1503, 0
        %v1523 = vsub.f32 %v1446, %v1521
        %v1524 = vsub.f32 %v1448, %v1521
        %v1525 = vsub.f32 %v1451, %v1521
        %v1526 = vsub.f32 %v1453, %v1521
        %v1527 = vld [vmem:[%s2] sm:$0x1]
        %v1528 = vmul.f32 %v1519, %v1527
        %v1530 = vperm.slane %v1528, 0
        %v1532 = vmul.f32 %v1523, %v1530
        %v1533 = vmul.f32 %v1524, %v1530
        %v1534 = vmul.f32 %v1525, %v1530
        %v1535 = vmul.f32 %v1526, %v1530
        %v1536 = vld [vmem:[%s3] sm:$0x1]
        %v1538 = vperm.slane %v1536, 0
        %v1540 = vadd.f32 %v1532, %v1538
        %v1541 = vadd.f32 %v1533, %v1538
        %v1542 = vadd.f32 %v1534, %v1538
        %v1543 = vadd.f32 %v1535, %v1538
        %v1544 = vmax.f32 %v1540, 0.0
        %v1545 = vmax.f32 %v1541, 0.0
        %v1546 = vmax.f32 %v1542, 0.0
        %v1547 = vmax.f32 %v1543, 0.0
        %1548 = vst [vmem:[%s214] sm:$0xff] %v1544
        %1549 = vst [vmem:[%s214 + $0x8] sm:$0xff] %v1545
        %1550 = vst [vmem:[%s214 + $0x10] sm:$0xff] %v1546
        %1551 = vst [vmem:[%s214 + $0x18] sm:$0xff] %v1547
      $region48: #{discriminator_forward.5} parent=35 // pred_fallthru
        _
      %s1552 = smul.u32 4, %s20
      %p1553 = scmp.lt.s32.totalorder %s1552, 3
      %s1554 = scalar_select %p1553, %s1552, 3
      %s1555 = smul.addr %s1554, 8
      %s1556 = scalar_lea.vmem %s4, %s1555
      // Predicated region
      $region49: #{discriminator_forward.5} parent=35 // pred_check
        %p1557 = pneg %p134
      $region50: #{discriminator_forward.5} parent=35 // pred_check_branch
        %1559 = sbr.rel (%p1557) target = $region52
      $region51: #{discriminator_forward.5} parent=35 // pred_region
        %s1560 = smul.u32 4, %s20
      $region52: #{discriminator_forward.5} parent=35 // pred_fallthru
        _
      // Predicated region
      $region53: #{discriminator_forward.5} parent=35 // pred_check
        %p1561 = pneg %p134
      $region54: #{discriminator_forward.5} parent=35 // pred_check_branch
        %1563 = sbr.rel (%p1561) target = $region56
      $region55: #{discriminator_forward.5} parent=35 // pred_region
        %s1564 = smul.u32 4, %s20
        %p1565 = scmp.lt.s32.totalorder %s1564, 3
        %s1566 = scalar_select %p1565, %s1564, 3
        %s1567 = smul.addr %s1566, 8
        %s1568 = scalar_lea.vmem %s4, %s1567
      $region56: #{discriminator_forward.5} parent=35 // pred_fallthru
        _
    $region36: #{discriminator_forward.5} parent=5 // pred_fallthru
      _
    %p1569 = scmp.le.s32.totalorder 2, %s10
    // Predicated region
    $region57: #{discriminator_forward.5} parent=5 // pred_check
      %p1570 = pneg %p1569
    $region58: #{discriminator_forward.5} parent=5 // pred_check_branch
      %1572 = sbr.rel (%p1570) target = $region60
    $region59: #{discriminator_forward.5} parent=5 // pred_region
      %s1573 = ssub.s32 %s10, 2
    $region60: #{discriminator_forward.5} parent=5 // pred_fallthru
      _
  $region6: #{discriminator_forward.5} parent=0 // loop_footer
    %s14 = sadd.s32 1, %s10
  $region7: #{discriminator_forward.5} parent=0 // loop_footer_branch
    %9 = sbr.rel target = $region3
  $region8: #{discriminator_forward.5} parent=0 // loop_exit
    _

// kernel: discriminator_forward.7
$region0: #{discriminator_forward.7}
  #allocation0 [shape = 'u32[]', space=smem, size = 0x4, offset = 0x4, fixed_abs, tag = 'smem constant byte address 0x4 - core index']
  #allocation1 [shape = 'u32[72,128]{1,0:T(1,128)}', space=vmem, size = 0x9000, scoped, tag = 'internal scratch']
  #allocation2 [shape = 'f32[1,1]{1,0:T(1,128)S(1)}', space=vmem, size = 0x200, scoped, tag = 'scoped memory for discriminator_forward.7']
  %s0 = inlined_call_operand.vmem [shape: f32[2,1024], index: 0, kind: input, shape index: {}]
  %s1 = inlined_call_operand.vmem [shape: f32[1,1024], index: 1, kind: input, shape index: {}]
  %s2 = inlined_call_operand.<no memory space> [shape: f32[1,1], index: 2, kind: input, shape index: {}]
  %s3 = inlined_call_operand.vmem [shape: f32[2,1], index: 3, kind: output, shape index: {}]
  %s4 = sld [smem:[#allocation0]]
  $region22: #{discriminator_forward.7} parent=0
    _
  %s6 = ssub.s32 1, %s4
  %s7 = scalar_select 0, %s6, %s4
  %v8 = vstv %s2
  %9 = vst [vmem:[#allocation2] sm:$0x1] %v8
  // Predicated region
  $region2: #{discriminator_forward.7} parent=0 // pred_check
    _
  $region3: #{discriminator_forward.7} parent=0 // pred_check_branch
    %11 = sbr.rel (0) target = $region5
  $region4: #{discriminator_forward.7} parent=0 // pred_region
    _
  $region5: #{discriminator_forward.7} parent=0 // pred_fallthru
    _
  // Predicated region
  $region6: #{discriminator_forward.7} parent=0 // pred_check
    _
  $region7: #{discriminator_forward.7} parent=0 // pred_check_branch
    %13 = sbr.rel (0) target = $region9
  $region8: #{discriminator_forward.7} parent=0 // pred_region
    _
  $region9: #{discriminator_forward.7} parent=0 // pred_fallthru
    _
  // Predicated region
  $region10: #{discriminator_forward.7} parent=0 // pred_check
    _
  $region11: #{discriminator_forward.7} parent=0 // pred_check_branch
    %15 = sbr.rel (0) target = $region13
  $region12: #{discriminator_forward.7} parent=0 // pred_region
    _
  $region13: #{discriminator_forward.7} parent=0 // pred_fallthru
    _
  %v16 = vld [vmem:[%s0] sm:$0xff]
  %v17 = vld [vmem:[%s0 + $0x8] sm:$0xff]
  %v18 = vld [vmem:[%s1] sm:$0xff]
  %v20 = vperm.slane %v18, 0
  %v21 = vperm.slane %v18, 1
  %v22 = vperm.slane %v18, 2
  %v23 = vperm.slane %v18, 3
  %v24 = vperm.slane %v18, 4
  %v25 = vperm.slane %v18, 5
  %v26 = vperm.slane %v18, 6
  %v27 = vperm.slane %v18, 7
  %v28 = vrot.slane %v21, 6
  %v29 = vrot.slane %v22, 4
  %v30 = vrot.slane %v23, 2
  %v31 = vrot.slane %v25, 6
  %v32 = vrot.slane %v26, 4
  %v33 = vrot.slane %v27, 2
  %vm34 = vcmask 1041408
  %v35 = vsel %vm34, %v20, %v28
  %vm36 = vcmask 1045508
  %v37 = vsel %vm36, %v29, %v30
  %vm38 = vcmask 1043456
  %v39 = vsel %vm38, %v35, %v37
  %v40 = vsel %vm34, %v24, %v31
  %v41 = vsel %vm36, %v32, %v33
  %v42 = vsel %vm38, %v40, %v41
  %v45 = vmul.f32 %v16, %v39
  %v46 = vmul.f32 %v17, %v42
  %49 = vst [vmem:[#allocation1] ss:$4 sm:$0xff] %v45
  %s50 = scalar_lea.vmem [#allocation1], 32
  %51 = vst [vmem:[%s50] ss:$4 sm:$0xff] %v46
  %v52 = vld.sshfl [vmem:[#allocation1] sm:$0xff pattern:$0x73625140]
  %v53 = vld.sshfl [vmem:[#allocation1 + $0x8] sm:$0xff pattern:$0x73625140]
  %v54 = vld.sshfl [vmem:[#allocation1 + $0x10] sm:$0xff pattern:$0x73625140]
  %v55 = vld.sshfl [vmem:[#allocation1 + $0x18] sm:$0xff pattern:$0x73625140]
  %v56 = vld.sshfl [vmem:[#allocation1 + $0x20] sm:$0xff pattern:$0x73625140]
  %v57 = vld.sshfl [vmem:[#allocation1 + $0x28] sm:$0xff pattern:$0x73625140]
  %v58 = vld.sshfl [vmem:[#allocation1 + $0x30] sm:$0xff pattern:$0x73625140]
  %v59 = vld.sshfl [vmem:[#allocation1 + $0x38] sm:$0xff pattern:$0x73625140]
  %v68 = vsel %vm34, %v52, 0.0
  %v69 = vsel %vm34, %v53, 0.0
  %v70 = vadd.f32 %v68, %v69
  %v71 = vsel %vm34, %v54, 0.0
  %v72 = vadd.f32 %v70, %v71
  %v73 = vsel %vm34, %v55, 0.0
  %v74 = vadd.f32 %v72, %v73
  %v75 = vsel %vm34, %v56, 0.0
  %v76 = vadd.f32 %v74, %v75
  %v77 = vsel %vm34, %v57, 0.0
  %v78 = vadd.f32 %v76, %v77
  %v79 = vsel %vm34, %v58, 0.0
  %v80 = vadd.f32 %v78, %v79
  %v81 = vsel %vm34, %v59, 0.0
  %v82 = vadd.f32 %v80, %v81
  %83 = vadd.xlane.f32.xlu0 %v82
  %v84 = vpop.xlane.xlu0 %83
  %v85 = vld [vmem:[#allocation2] sm:$0x1]
  %v87 = vperm.slane %v85, 0
  %v89 = vadd.f32 %v84, %v87
  %vm90 = vcmask 1024
  %91 = vst.msk [vmem:[%s3] sm:$0x3] %vm90, %v89
  // Predicated region
  $region14: #{discriminator_forward.7} parent=0 // pred_check
    _
  $region15: #{discriminator_forward.7} parent=0 // pred_check_branch
    %93 = sbr.rel (0) target = $region17
  $region16: #{discriminator_forward.7} parent=0 // pred_region
    _
  $region17: #{discriminator_forward.7} parent=0 // pred_fallthru
    _
  // Predicated region
  $region18: #{discriminator_forward.7} parent=0 // pred_check
    _
  $region19: #{discriminator_forward.7} parent=0 // pred_check_branch
    %95 = sbr.rel (0) target = $region21
  $region20: #{discriminator_forward.7} parent=0 // pred_region
    _
  $region21: #{discriminator_forward.7} parent=0 // pred_fallthru
    _

// kernel: discriminator_forward.6
$region0: #{discriminator_forward.6}
  #allocation0 [shape = 'u32[]', space=smem, size = 0x4, offset = 0x4, fixed_abs, tag = 'smem constant byte address 0x4 - core index']
  #allocation1 [shape = 'u32[72,128]{1,0:T(1,128)}', space=vmem, size = 0x9000, scoped, tag = 'internal scratch']
  #allocation2 [shape = 'f32[1,256]{1,0:T(1,128)}', space=vmem, size = 0x400, scoped, tag = 'scratch operand']
  #allocation3 [shape = 'f32[1,256]{1,0:T(1,128)}', space=vmem, size = 0x400, scoped, tag = 'scratch operand']
  %s0 = inlined_call_operand.vmem [shape: bf16[8,3200], index: 0, kind: input, shape index: {}]
  %s1 = inlined_call_operand.vmem [shape: bf16[3200,256], index: 1, kind: input, shape index: {}]
  %s2 = inlined_call_operand.vmem [shape: f32[1,256], index: 2, kind: input, shape index: {}]
  %s3 = inlined_call_operand.vmem [shape: f32[1,256], index: 3, kind: input, shape index: {}]
  %s4 = inlined_call_operand.vmem [shape: f32[8,256], index: 4, kind: output, shape index: {}]
  %s5 = sld [smem:[#allocation0]]
  $region61: #{discriminator_forward.6} parent=0
    _
  %s7 = ssub.s32 1, %s5
  %s8 = scalar_select 0, %s7, %s5
  loop: start=0, step=1, limit=4
  $region2: #{discriminator_forward.6} parent=0 // loop_pre_header
    _
  $region3: #{discriminator_forward.6} parent=0 // loop_header
    %s10 = sphi 0, %s14
    %p11 = scmp.ge.s32.totalorder %s10, 4
    %s17 = sphi 0, %s29
    %s18 = sphi 0, %s25
    %s19 = sphi 0, %s17
    %s20 = sphi 0, %s18
    %s21 = sphi 0, %s19
    %s22 = sphi 0, %s20
    %s32 = sphi 0, %s34
    %s35 = sphi 0, %s32
    %s36 = sphi 0, %s35
    %s52 = sphi 0, %s36
    %s56 = sphi 0, %s56
    %s58 = sphi 0, %s56
    %s59 = sphi 0, %s58
    %s73 = sphi 0, %s59
    %s77 = sphi 0, %s77
    %s79 = sphi 0, %s77
    %s80 = sphi 0, %s79
    %s94 = sphi 0, %s80
    %s98 = sphi 0, %s98
    %s100 = sphi 0, %s98
    %s101 = sphi 0, %s100
    %s115 = sphi 0, %s101
    %s121 = sphi 0, %s123
    %s124 = sphi 0, %s121
    %s125 = sphi 0, %s124
    %s141 = sphi 0, %s125
  $region4: #{discriminator_forward.6} parent=0 // loop_header_branch
    %13 = sbr.rel (%p11) target = $region8
  $region5: #{discriminator_forward.6} parent=0 // loop_body
    %s15 = ssub.s32 %s10, 1
    %s16 = ssub.s32 %s10, 2
    %s23 = sadd.s32 1, %s18
    %p24 = scmp.ge.s32.totalorder %s23, 1
    %s25 = scalar_select %p24, 0, %s23
    %s26 = sadd.s32 1, %s17
    %s27 = scalar_select %p24, %s26, %s17
    %p28 = scmp.ge.s32.totalorder %s27, 2
    %s29 = scalar_select %p28, 0, %s27
    %s30 = ssub.s32 %s18, %s25
    %p31 = scmp.eq.s32.totalorder %s30, 0
    %s33 = sadd.s32 %s32, 1
    %s34 = scalar_select %p31, %s32, %s33
    %p37 = pneg %p31
    %p38 = scmp.eq.s32.totalorder %s10, 1
    %p39 = por %p37, %p38
    %p40 = scmp.ne.s32.totalorder %s32, %s35
    %p41 = scmp.eq.s32.totalorder %s10, 0
    %p42 = por %p40, %p41
    %p43 = scmp.ne.s32.totalorder %s32, %s35
    %p44 = scmp.eq.s32.totalorder %s15, 1
    %p45 = por %p43, %p44
    %p46 = scmp.ne.s32.totalorder %s35, %s36
    %p47 = scmp.eq.s32.totalorder %s15, 0
    %p48 = por %p46, %p47
    %p49 = scmp.ne.s32.totalorder %s35, %s36
    %p50 = scmp.eq.s32.totalorder %s16, 1
    %p51 = por %p49, %p50
    %p53 = scmp.ne.s32.totalorder %s36, %s52
    %p54 = scmp.eq.s32.totalorder %s16, 0
    %p55 = por %p53, %p54
    %s57 = sadd.s32 %s56, 1
    %p60 = scmp.eq.s32.totalorder %s10, 1
    %p61 = scmp.ne.s32.totalorder %s56, %s58
    %p62 = scmp.eq.s32.totalorder %s10, 0
    %p63 = por %p61, %p62
    %p64 = scmp.ne.s32.totalorder %s56, %s58
    %p65 = scmp.eq.s32.totalorder %s15, 1
    %p66 = por %p64, %p65
    %p67 = scmp.ne.s32.totalorder %s58, %s59
    %p68 = scmp.eq.s32.totalorder %s15, 0
    %p69 = por %p67, %p68
    %p70 = scmp.ne.s32.totalorder %s58, %s59
    %p71 = scmp.eq.s32.totalorder %s16, 1
    %p72 = por %p70, %p71
    %p74 = scmp.ne.s32.totalorder %s59, %s73
    %p75 = scmp.eq.s32.totalorder %s16, 0
    %p76 = por %p74, %p75
    %s78 = sadd.s32 %s77, 1
    %p81 = scmp.eq.s32.totalorder %s10, 1
    %p82 = scmp.ne.s32.totalorder %s77, %s79
    %p83 = scmp.eq.s32.totalorder %s10, 0
    %p84 = por %p82, %p83
    %p85 = scmp.ne.s32.totalorder %s77, %s79
    %p86 = scmp.eq.s32.totalorder %s15, 1
    %p87 = por %p85, %p86
    %p88 = scmp.ne.s32.totalorder %s79, %s80
    %p89 = scmp.eq.s32.totalorder %s15, 0
    %p90 = por %p88, %p89
    %p91 = scmp.ne.s32.totalorder %s79, %s80
    %p92 = scmp.eq.s32.totalorder %s16, 1
    %p93 = por %p91, %p92
    %p95 = scmp.ne.s32.totalorder %s80, %s94
    %p96 = scmp.eq.s32.totalorder %s16, 0
    %p97 = por %p95, %p96
    %s99 = sadd.s32 %s98, 1
    %p102 = scmp.eq.s32.totalorder %s10, 1
    %p103 = scmp.ne.s32.totalorder %s98, %s100
    %p104 = scmp.eq.s32.totalorder %s10, 0
    %p105 = por %p103, %p104
    %p106 = scmp.ne.s32.totalorder %s98, %s100
    %p107 = scmp.eq.s32.totalorder %s15, 1
    %p108 = por %p106, %p107
    %p109 = scmp.ne.s32.totalorder %s100, %s101
    %p110 = scmp.eq.s32.totalorder %s15, 0
    %p111 = por %p109, %p110
    %p112 = scmp.ne.s32.totalorder %s100, %s101
    %p113 = scmp.eq.s32.totalorder %s16, 1
    %p114 = por %p112, %p113
    %p116 = scmp.ne.s32.totalorder %s101, %s115
    %p117 = scmp.eq.s32.totalorder %s16, 0
    %p118 = por %p116, %p117
    %s119 = ssub.s32 %s18, %s25
    %p120 = scmp.eq.s32.totalorder %s119, 0
    %s122 = sadd.s32 %s121, 1
    %s123 = scalar_select %p120, %s121, %s122
    %p126 = pneg %p120
    %p127 = scmp.eq.s32.totalorder %s10, 1
    %p128 = por %p126, %p127
    %p129 = scmp.ne.s32.totalorder %s121, %s124
    %p130 = scmp.eq.s32.totalorder %s10, 0
    %p131 = por %p129, %p130
    %p132 = scmp.ne.s32.totalorder %s121, %s124
    %p133 = scmp.eq.s32.totalorder %s15, 1
    %p134 = por %p132, %p133
    %p135 = scmp.ne.s32.totalorder %s124, %s125
    %p136 = scmp.eq.s32.totalorder %s15, 0
    %p137 = por %p135, %p136
    %p138 = scmp.ne.s32.totalorder %s124, %s125
    %p139 = scmp.eq.s32.totalorder %s16, 1
    %p140 = por %p138, %p139
    %p142 = scmp.ne.s32.totalorder %s125, %s141
    %p143 = scmp.eq.s32.totalorder %s16, 0
    %p144 = por %p142, %p143
    %p145 = scmp.le.s32.totalorder 1, %s10
    %p146 = scmp.lt.s32.totalorder %s10, 3
    %p147 = pnand %p145, %p146
    %p148 = pneg %p147
    // Predicated region
    $region9: #{discriminator_forward.6} parent=5 // pred_check
      _
    $region10: #{discriminator_forward.6} parent=5 // pred_check_branch
      %150 = sbr.rel (%p147) target = $region12
    $region11: #{discriminator_forward.6} parent=5 // pred_region
      %s151 = ssub.s32 %s10, 1
      // Predicated region
      $region13: #{discriminator_forward.6} parent=11 // pred_check
        %p152 = pneg %p48
      $region14: #{discriminator_forward.6} parent=11 // pred_check_branch
        %154 = sbr.rel (%p152) target = $region16
      $region15: #{discriminator_forward.6} parent=11 // pred_region
        %p155 = scmp.lt.s32.totalorder %s20, 0
        %s156 = scalar_select %p155, %s20, 0
        %s157 = smul.addr %s156, 25
        %s158 = smul.addr %s157, 4
        %s159 = scalar_lea.vmem %s0, %s158
      $region16: #{discriminator_forward.6} parent=11 // pred_fallthru
        _
      // Predicated region
      $region17: #{discriminator_forward.6} parent=11 // pred_check
        %p160 = pneg %p69
      $region18: #{discriminator_forward.6} parent=11 // pred_check_branch
        %162 = sbr.rel (%p160) target = $region20
      $region19: #{discriminator_forward.6} parent=11 // pred_region
        _
      $region20: #{discriminator_forward.6} parent=11 // pred_fallthru
        _
      // Predicated region
      $region21: #{discriminator_forward.6} parent=11 // pred_check
        %p163 = pneg %p90
      $region22: #{discriminator_forward.6} parent=11 // pred_check_branch
        %165 = sbr.rel (%p163) target = $region24
      $region23: #{discriminator_forward.6} parent=11 // pred_region
        _
      $region24: #{discriminator_forward.6} parent=11 // pred_fallthru
        _
      // Predicated region
      $region25: #{discriminator_forward.6} parent=11 // pred_check
        %p166 = pneg %p111
      $region26: #{discriminator_forward.6} parent=11 // pred_check_branch
        %168 = sbr.rel (%p166) target = $region28
      $region27: #{discriminator_forward.6} parent=11 // pred_region
        _
      $region28: #{discriminator_forward.6} parent=11 // pred_fallthru
        _
    $region12: #{discriminator_forward.6} parent=5 // pred_fallthru
      _
    %p169 = scmp.lt.s32.totalorder %s10, 2
    // Predicated region
    $region29: #{discriminator_forward.6} parent=5 // pred_check
      %p170 = pneg %p169
    $region30: #{discriminator_forward.6} parent=5 // pred_check_branch
      %172 = sbr.rel (%p170) target = $region32
    $region31: #{discriminator_forward.6} parent=5 // pred_region
      _
    $region32: #{discriminator_forward.6} parent=5 // pred_fallthru
      _
    %p173 = scmp.le.s32.totalorder 1, %s10
    %p174 = scmp.lt.s32.totalorder %s10, 3
    %p175 = pnand %p173, %p174
    %p176 = pneg %p175
    // Predicated region
    $region33: #{discriminator_forward.6} parent=5 // pred_check
      _
    $region34: #{discriminator_forward.6} parent=5 // pred_check_branch
      %178 = sbr.rel (%p175) target = $region36
    $region35: #{discriminator_forward.6} parent=5 // pred_region
      %s179 = ssub.s32 %s10, 1
      %p180 = scmp.lt.s32.totalorder %s20, 0
      %s181 = scalar_select %p180, %s20, 0
      %s182 = smul.addr %s181, 25
      %s183 = smul.addr %s182, 4
      %s184 = scalar_lea.vmem %s0, %s183
      %p185 = pneg %p48
      %p186 = pneg %p45
      %p187 = pneg %p69
      %p188 = pneg %p66
      %p189 = pneg %p90
      %p190 = pneg %p87
      %p191 = pneg %p111
      %p192 = pneg %p108
      %p193 = pneg %p137
      %p194 = pneg %p134
      %p195 = scmp.lt.s32.totalorder %s20, 0
      %s196 = scalar_select %p195, %s20, 0
      %s197 = smul.addr %s196, 2
      %s198 = smul.addr %s197, 8
      %s199 = scalar_lea.vmem %s4, %s198
      %p200 = scmp.lt.s32.totalorder %s20, 0
      %s201 = scalar_select %p200, %s20, 0
      %s202 = smul.addr %s201, 25
      %s203 = smul.addr %s202, 4
      %s204 = scalar_lea.vmem %s0, %s203
      %p205 = scmp.lt.s32.totalorder %s20, 0
      %s206 = scalar_select %p205, %s20, 0
      %s207 = smul.addr %s206, 2
      %s208 = smul.addr %s207, 8
      %s209 = scalar_lea.vmem %s4, %s208
      %v210 = vld [vmem:[%s204] sm:$0xff]
      %v211 = vld [vmem:[%s204 + $0x8] sm:$0xff]
      %v212 = vld [vmem:[%s204 + $0x10] sm:$0xff]
      %v213 = vld [vmem:[%s204 + $0x18] sm:$0xff]
      %v214 = vld [vmem:[%s204 + $0x20] sm:$0xff]
      %v215 = vld [vmem:[%s204 + $0x28] sm:$0xff]
      %v216 = vld [vmem:[%s204 + $0x30] sm:$0xff]
      %v217 = vld [vmem:[%s204 + $0x38] sm:$0xff]
      %v218 = vld [vmem:[%s204 + $0x40] sm:$0xff]
      %v219 = vld [vmem:[%s204 + $0x48] sm:$0xff]
      %v220 = vld [vmem:[%s204 + $0x50] sm:$0xff]
      %v221 = vld [vmem:[%s204 + $0x58] sm:$0xff]
      %v222 = vld [vmem:[%s204 + $0x60] sm:$0xf]
      %v223 = vld [vmem:[%s1] sm:$0xff]
      %v224 = vld [vmem:[%s1 + $0x8] sm:$0xff]
      %v225 = vld [vmem:[%s1 + $0x10] sm:$0xff]
      %v226 = vld [vmem:[%s1 + $0x18] sm:$0xff]
      %v227 = vld [vmem:[%s1 + $0x20] sm:$0xff]
      %v228 = vld [vmem:[%s1 + $0x28] sm:$0xff]
      %v229 = vld [vmem:[%s1 + $0x30] sm:$0xff]
      %v230 = vld [vmem:[%s1 + $0x38] sm:$0xff]
      %v231 = vld [vmem:[%s1 + $0x40] sm:$0xff]
      %v232 = vld [vmem:[%s1 + $0x48] sm:$0xff]
      %v233 = vld [vmem:[%s1 + $0x50] sm:$0xff]
      %v234 = vld [vmem:[%s1 + $0x58] sm:$0xff]
      %v235 = vld [vmem:[%s1 + $0x60] sm:$0xff]
      %v236 = vld [vmem:[%s1 + $0x68] sm:$0xff]
      %v237 = vld [vmem:[%s1 + $0x70] sm:$0xff]
      %v238 = vld [vmem:[%s1 + $0x78] sm:$0xff]
      %v239 = vld [vmem:[%s1 + $0x80] sm:$0xff]
      %v240 = vld [vmem:[%s1 + $0x88] sm:$0xff]
      %v241 = vld [vmem:[%s1 + $0x90] sm:$0xff]
      %v242 = vld [vmem:[%s1 + $0x98] sm:$0xff]
      %v243 = vld [vmem:[%s1 + $0xa0] sm:$0xff]
      %v244 = vld [vmem:[%s1 + $0xa8] sm:$0xff]
      %v245 = vld [vmem:[%s1 + $0xb0] sm:$0xff]
      %v246 = vld [vmem:[%s1 + $0xb8] sm:$0xff]
      %v247 = vld [vmem:[%s1 + $0xc0] sm:$0xff]
      %v248 = vld [vmem:[%s1 + $0xc8] sm:$0xff]
      %v249 = vld [vmem:[%s1 + $0xd0] sm:$0xff]
      %v250 = vld [vmem:[%s1 + $0xd8] sm:$0xff]
      %v251 = vld [vmem:[%s1 + $0xe0] sm:$0xff]
      %v252 = vld [vmem:[%s1 + $0xe8] sm:$0xff]
      %v253 = vld [vmem:[%s1 + $0xf0] sm:$0xff]
      %v254 = vld [vmem:[%s1 + $0xf8] sm:$0xff]
      %v255 = vld [vmem:[%s1 + $0x100] sm:$0xff]
      %v256 = vld [vmem:[%s1 + $0x108] sm:$0xff]
      %v257 = vld [vmem:[%s1 + $0x110] sm:$0xff]
      %v258 = vld [vmem:[%s1 + $0x118] sm:$0xff]
      %v259 = vld [vmem:[%s1 + $0x120] sm:$0xff]
      %v260 = vld [vmem:[%s1 + $0x128] sm:$0xff]
      %v261 = vld [vmem:[%s1 + $0x130] sm:$0xff]
      %v262 = vld [vmem:[%s1 + $0x138] sm:$0xff]
      %v263 = vld [vmem:[%s1 + $0x140] sm:$0xff]
      %v264 = vld [vmem:[%s1 + $0x148] sm:$0xff]
      %v265 = vld [vmem:[%s1 + $0x150] sm:$0xff]
      %v266 = vld [vmem:[%s1 + $0x158] sm:$0xff]
      %v267 = vld [vmem:[%s1 + $0x160] sm:$0xff]
      %v268 = vld [vmem:[%s1 + $0x168] sm:$0xff]
      %v269 = vld [vmem:[%s1 + $0x170] sm:$0xff]
      %v270 = vld [vmem:[%s1 + $0x178] sm:$0xff]
      %v271 = vld [vmem:[%s1 + $0x180] sm:$0xff]
      %v272 = vld [vmem:[%s1 + $0x188] sm:$0xff]
      %v273 = vld [vmem:[%s1 + $0x190] sm:$0xff]
      %v274 = vld [vmem:[%s1 + $0x198] sm:$0xff]
      %v275 = vld [vmem:[%s1 + $0x1a0] sm:$0xff]
      %v276 = vld [vmem:[%s1 + $0x1a8] sm:$0xff]
      %v277 = vld [vmem:[%s1 + $0x1b0] sm:$0xff]
      %v278 = vld [vmem:[%s1 + $0x1b8] sm:$0xff]
      %v279 = vld [vmem:[%s1 + $0x1c0] sm:$0xff]
      %v280 = vld [vmem:[%s1 + $0x1c8] sm:$0xff]
      %v281 = vld [vmem:[%s1 + $0x1d0] sm:$0xff]
      %v282 = vld [vmem:[%s1 + $0x1d8] sm:$0xff]
      %v283 = vld [vmem:[%s1 + $0x1e0] sm:$0xff]
      %v284 = vld [vmem:[%s1 + $0x1e8] sm:$0xff]
      %v285 = vld [vmem:[%s1 + $0x1f0] sm:$0xff]
      %v286 = vld [vmem:[%s1 + $0x1f8] sm:$0xff]
      %v287 = vld [vmem:[%s1 + $0x200] sm:$0xff]
      %v288 = vld [vmem:[%s1 + $0x208] sm:$0xff]
      %v289 = vld [vmem:[%s1 + $0x210] sm:$0xff]
      %v290 = vld [vmem:[%s1 + $0x218] sm:$0xff]
      %v291 = vld [vmem:[%s1 + $0x220] sm:$0xff]
      %v292 = vld [vmem:[%s1 + $0x228] sm:$0xff]
      %v293 = vld [vmem:[%s1 + $0x230] sm:$0xff]
      %v294 = vld [vmem:[%s1 + $0x238] sm:$0xff]
      %v295 = vld [vmem:[%s1 + $0x240] sm:$0xff]
      %v296 = vld [vmem:[%s1 + $0x248] sm:$0xff]
      %v297 = vld [vmem:[%s1 + $0x250] sm:$0xff]
      %v298 = vld [vmem:[%s1 + $0x258] sm:$0xff]
      %v299 = vld [vmem:[%s1 + $0x260] sm:$0xff]
      %v300 = vld [vmem:[%s1 + $0x268] sm:$0xff]
      %v301 = vld [vmem:[%s1 + $0x270] sm:$0xff]
      %v302 = vld [vmem:[%s1 + $0x278] sm:$0xff]
      %v303 = vld [vmem:[%s1 + $0x280] sm:$0xff]
      %v304 = vld [vmem:[%s1 + $0x288] sm:$0xff]
      %v305 = vld [vmem:[%s1 + $0x290] sm:$0xff]
      %v306 = vld [vmem:[%s1 + $0x298] sm:$0xff]
      %v307 = vld [vmem:[%s1 + $0x2a0] sm:$0xff]
      %v308 = vld [vmem:[%s1 + $0x2a8] sm:$0xff]
      %v309 = vld [vmem:[%s1 + $0x2b0] sm:$0xff]
      %v310 = vld [vmem:[%s1 + $0x2b8] sm:$0xff]
      %v311 = vld [vmem:[%s1 + $0x2c0] sm:$0xff]
      %v312 = vld [vmem:[%s1 + $0x2c8] sm:$0xff]
      %v313 = vld [vmem:[%s1 + $0x2d0] sm:$0xff]
      %v314 = vld [vmem:[%s1 + $0x2d8] sm:$0xff]
      %v315 = vld [vmem:[%s1 + $0x2e0] sm:$0xff]
      %v316 = vld [vmem:[%s1 + $0x2e8] sm:$0xff]
      %v317 = vld [vmem:[%s1 + $0x2f0] sm:$0xff]
      %v318 = vld [vmem:[%s1 + $0x2f8] sm:$0xff]
      %v319 = vld [vmem:[%s1 + $0x300] sm:$0xff]
      %v320 = vld [vmem:[%s1 + $0x308] sm:$0xff]
      %v321 = vld [vmem:[%s1 + $0x310] sm:$0xff]
      %v322 = vld [vmem:[%s1 + $0x318] sm:$0xff]
      %v323 = vld [vmem:[%s1 + $0x320] sm:$0xff]
      %v324 = vld [vmem:[%s1 + $0x328] sm:$0xff]
      %v325 = vld [vmem:[%s1 + $0x330] sm:$0xff]
      %v326 = vld [vmem:[%s1 + $0x338] sm:$0xff]
      %v327 = vld [vmem:[%s1 + $0x340] sm:$0xff]
      %v328 = vld [vmem:[%s1 + $0x348] sm:$0xff]
      %v329 = vld [vmem:[%s1 + $0x350] sm:$0xff]
      %v330 = vld [vmem:[%s1 + $0x358] sm:$0xff]
      %v331 = vld [vmem:[%s1 + $0x360] sm:$0xff]
      %v332 = vld [vmem:[%s1 + $0x368] sm:$0xff]
      %v333 = vld [vmem:[%s1 + $0x370] sm:$0xff]
      %v334 = vld [vmem:[%s1 + $0x378] sm:$0xff]
      %v335 = vld [vmem:[%s1 + $0x380] sm:$0xff]
      %v336 = vld [vmem:[%s1 + $0x388] sm:$0xff]
      %v337 = vld [vmem:[%s1 + $0x390] sm:$0xff]
      %v338 = vld [vmem:[%s1 + $0x398] sm:$0xff]
      %v339 = vld [vmem:[%s1 + $0x3a0] sm:$0xff]
      %v340 = vld [vmem:[%s1 + $0x3a8] sm:$0xff]
      %v341 = vld [vmem:[%s1 + $0x3b0] sm:$0xff]
      %v342 = vld [vmem:[%s1 + $0x3b8] sm:$0xff]
      %v343 = vld [vmem:[%s1 + $0x3c0] sm:$0xff]
      %v344 = vld [vmem:[%s1 + $0x3c8] sm:$0xff]
      %v345 = vld [vmem:[%s1 + $0x3d0] sm:$0xff]
      %v346 = vld [vmem:[%s1 + $0x3d8] sm:$0xff]
      %v347 = vld [vmem:[%s1 + $0x3e0] sm:$0xff]
      %v348 = vld [vmem:[%s1 + $0x3e8] sm:$0xff]
      %v349 = vld [vmem:[%s1 + $0x3f0] sm:$0xff]
      %v350 = vld [vmem:[%s1 + $0x3f8] sm:$0xff]
      %v351 = vld [vmem:[%s1 + $0x400] sm:$0xff]
      %v352 = vld [vmem:[%s1 + $0x408] sm:$0xff]
      %v353 = vld [vmem:[%s1 + $0x410] sm:$0xff]
      %v354 = vld [vmem:[%s1 + $0x418] sm:$0xff]
      %v355 = vld [vmem:[%s1 + $0x420] sm:$0xff]
      %v356 = vld [vmem:[%s1 + $0x428] sm:$0xff]
      %v357 = vld [vmem:[%s1 + $0x430] sm:$0xff]
      %v358 = vld [vmem:[%s1 + $0x438] sm:$0xff]
      %v359 = vld [vmem:[%s1 + $0x440] sm:$0xff]
      %v360 = vld [vmem:[%s1 + $0x448] sm:$0xff]
      %v361 = vld [vmem:[%s1 + $0x450] sm:$0xff]
      %v362 = vld [vmem:[%s1 + $0x458] sm:$0xff]
      %v363 = vld [vmem:[%s1 + $0x460] sm:$0xff]
      %v364 = vld [vmem:[%s1 + $0x468] sm:$0xff]
      %v365 = vld [vmem:[%s1 + $0x470] sm:$0xff]
      %v366 = vld [vmem:[%s1 + $0x478] sm:$0xff]
      %v367 = vld [vmem:[%s1 + $0x480] sm:$0xff]
      %v368 = vld [vmem:[%s1 + $0x488] sm:$0xff]
      %v369 = vld [vmem:[%s1 + $0x490] sm:$0xff]
      %v370 = vld [vmem:[%s1 + $0x498] sm:$0xff]
      %v371 = vld [vmem:[%s1 + $0x4a0] sm:$0xff]
      %v372 = vld [vmem:[%s1 + $0x4a8] sm:$0xff]
      %v373 = vld [vmem:[%s1 + $0x4b0] sm:$0xff]
      %v374 = vld [vmem:[%s1 + $0x4b8] sm:$0xff]
      %v375 = vld [vmem:[%s1 + $0x4c0] sm:$0xff]
      %v376 = vld [vmem:[%s1 + $0x4c8] sm:$0xff]
      %v377 = vld [vmem:[%s1 + $0x4d0] sm:$0xff]
      %v378 = vld [vmem:[%s1 + $0x4d8] sm:$0xff]
      %v379 = vld [vmem:[%s1 + $0x4e0] sm:$0xff]
      %v380 = vld [vmem:[%s1 + $0x4e8] sm:$0xff]
      %v381 = vld [vmem:[%s1 + $0x4f0] sm:$0xff]
      %v382 = vld [vmem:[%s1 + $0x4f8] sm:$0xff]
      %v383 = vld [vmem:[%s1 + $0x500] sm:$0xff]
      %v384 = vld [vmem:[%s1 + $0x508] sm:$0xff]
      %v385 = vld [vmem:[%s1 + $0x510] sm:$0xff]
      %v386 = vld [vmem:[%s1 + $0x518] sm:$0xff]
      %v387 = vld [vmem:[%s1 + $0x520] sm:$0xff]
      %v388 = vld [vmem:[%s1 + $0x528] sm:$0xff]
      %v389 = vld [vmem:[%s1 + $0x530] sm:$0xff]
      %v390 = vld [vmem:[%s1 + $0x538] sm:$0xff]
      %v391 = vld [vmem:[%s1 + $0x540] sm:$0xff]
      %v392 = vld [vmem:[%s1 + $0x548] sm:$0xff]
      %v393 = vld [vmem:[%s1 + $0x550] sm:$0xff]
      %v394 = vld [vmem:[%s1 + $0x558] sm:$0xff]
      %v395 = vld [vmem:[%s1 + $0x560] sm:$0xff]
      %v396 = vld [vmem:[%s1 + $0x568] sm:$0xff]
      %v397 = vld [vmem:[%s1 + $0x570] sm:$0xff]
      %v398 = vld [vmem:[%s1 + $0x578] sm:$0xff]
      %v399 = vld [vmem:[%s1 + $0x580] sm:$0xff]
      %v400 = vld [vmem:[%s1 + $0x588] sm:$0xff]
      %v401 = vld [vmem:[%s1 + $0x590] sm:$0xff]
      %v402 = vld [vmem:[%s1 + $0x598] sm:$0xff]
      %v403 = vld [vmem:[%s1 + $0x5a0] sm:$0xff]
      %v404 = vld [vmem:[%s1 + $0x5a8] sm:$0xff]
      %v405 = vld [vmem:[%s1 + $0x5b0] sm:$0xff]
      %v406 = vld [vmem:[%s1 + $0x5b8] sm:$0xff]
      %v407 = vld [vmem:[%s1 + $0x5c0] sm:$0xff]
      %v408 = vld [vmem:[%s1 + $0x5c8] sm:$0xff]
      %v409 = vld [vmem:[%s1 + $0x5d0] sm:$0xff]
      %v410 = vld [vmem:[%s1 + $0x5d8] sm:$0xff]
      %v411 = vld [vmem:[%s1 + $0x5e0] sm:$0xff]
      %v412 = vld [vmem:[%s1 + $0x5e8] sm:$0xff]
      %v413 = vld [vmem:[%s1 + $0x5f0] sm:$0xff]
      %v414 = vld [vmem:[%s1 + $0x5f8] sm:$0xff]
      %v415 = vld [vmem:[%s1 + $0x600] sm:$0xff]
      %v416 = vld [vmem:[%s1 + $0x608] sm:$0xff]
      %v417 = vld [vmem:[%s1 + $0x610] sm:$0xff]
      %v418 = vld [vmem:[%s1 + $0x618] sm:$0xff]
      %v419 = vld [vmem:[%s1 + $0x620] sm:$0xff]
      %v420 = vld [vmem:[%s1 + $0x628] sm:$0xff]
      %v421 = vld [vmem:[%s1 + $0x630] sm:$0xff]
      %v422 = vld [vmem:[%s1 + $0x638] sm:$0xff]
      %v423 = vld [vmem:[%s1 + $0x640] sm:$0xff]
      %v424 = vld [vmem:[%s1 + $0x648] sm:$0xff]
      %v425 = vld [vmem:[%s1 + $0x650] sm:$0xff]
      %v426 = vld [vmem:[%s1 + $0x658] sm:$0xff]
      %v427 = vld [vmem:[%s1 + $0x660] sm:$0xff]
      %v428 = vld [vmem:[%s1 + $0x668] sm:$0xff]
      %v429 = vld [vmem:[%s1 + $0x670] sm:$0xff]
      %v430 = vld [vmem:[%s1 + $0x678] sm:$0xff]
      %v431 = vld [vmem:[%s1 + $0x680] sm:$0xff]
      %v432 = vld [vmem:[%s1 + $0x688] sm:$0xff]
      %v433 = vld [vmem:[%s1 + $0x690] sm:$0xff]
      %v434 = vld [vmem:[%s1 + $0x698] sm:$0xff]
      %v435 = vld [vmem:[%s1 + $0x6a0] sm:$0xff]
      %v436 = vld [vmem:[%s1 + $0x6a8] sm:$0xff]
      %v437 = vld [vmem:[%s1 + $0x6b0] sm:$0xff]
      %v438 = vld [vmem:[%s1 + $0x6b8] sm:$0xff]
      %v439 = vld [vmem:[%s1 + $0x6c0] sm:$0xff]
      %v440 = vld [vmem:[%s1 + $0x6c8] sm:$0xff]
      %v441 = vld [vmem:[%s1 + $0x6d0] sm:$0xff]
      %v442 = vld [vmem:[%s1 + $0x6d8] sm:$0xff]
      %v443 = vld [vmem:[%s1 + $0x6e0] sm:$0xff]
      %v444 = vld [vmem:[%s1 + $0x6e8] sm:$0xff]
      %v445 = vld [vmem:[%s1 + $0x6f0] sm:$0xff]
      %v446 = vld [vmem:[%s1 + $0x6f8] sm:$0xff]
      %v447 = vld [vmem:[%s1 + $0x700] sm:$0xff]
      %v448 = vld [vmem:[%s1 + $0x708] sm:$0xff]
      %v449 = vld [vmem:[%s1 + $0x710] sm:$0xff]
      %v450 = vld [vmem:[%s1 + $0x718] sm:$0xff]
      %v451 = vld [vmem:[%s1 + $0x720] sm:$0xff]
      %v452 = vld [vmem:[%s1 + $0x728] sm:$0xff]
      %v453 = vld [vmem:[%s1 + $0x730] sm:$0xff]
      %v454 = vld [vmem:[%s1 + $0x738] sm:$0xff]
      %v455 = vld [vmem:[%s1 + $0x740] sm:$0xff]
      %v456 = vld [vmem:[%s1 + $0x748] sm:$0xff]
      %v457 = vld [vmem:[%s1 + $0x750] sm:$0xff]
      %v458 = vld [vmem:[%s1 + $0x758] sm:$0xff]
      %v459 = vld [vmem:[%s1 + $0x760] sm:$0xff]
      %v460 = vld [vmem:[%s1 + $0x768] sm:$0xff]
      %v461 = vld [vmem:[%s1 + $0x770] sm:$0xff]
      %v462 = vld [vmem:[%s1 + $0x778] sm:$0xff]
      %v463 = vld [vmem:[%s1 + $0x780] sm:$0xff]
      %v464 = vld [vmem:[%s1 + $0x788] sm:$0xff]
      %v465 = vld [vmem:[%s1 + $0x790] sm:$0xff]
      %v466 = vld [vmem:[%s1 + $0x798] sm:$0xff]
      %v467 = vld [vmem:[%s1 + $0x7a0] sm:$0xff]
      %v468 = vld [vmem:[%s1 + $0x7a8] sm:$0xff]
      %v469 = vld [vmem:[%s1 + $0x7b0] sm:$0xff]
      %v470 = vld [vmem:[%s1 + $0x7b8] sm:$0xff]
      %v471 = vld [vmem:[%s1 + $0x7c0] sm:$0xff]
      %v472 = vld [vmem:[%s1 + $0x7c8] sm:$0xff]
      %v473 = vld [vmem:[%s1 + $0x7d0] sm:$0xff]
      %v474 = vld [vmem:[%s1 + $0x7d8] sm:$0xff]
      %v475 = vld [vmem:[%s1 + $0x7e0] sm:$0xff]
      %v476 = vld [vmem:[%s1 + $0x7e8] sm:$0xff]
      %v477 = vld [vmem:[%s1 + $0x7f0] sm:$0xff]
      %v478 = vld [vmem:[%s1 + $0x7f8] sm:$0xff]
      %v479 = vld [vmem:[%s1 + $0x800] sm:$0xff]
      %v480 = vld [vmem:[%s1 + $0x808] sm:$0xff]
      %v481 = vld [vmem:[%s1 + $0x810] sm:$0xff]
      %v482 = vld [vmem:[%s1 + $0x818] sm:$0xff]
      %v483 = vld [vmem:[%s1 + $0x820] sm:$0xff]
      %v484 = vld [vmem:[%s1 + $0x828] sm:$0xff]
      %v485 = vld [vmem:[%s1 + $0x830] sm:$0xff]
      %v486 = vld [vmem:[%s1 + $0x838] sm:$0xff]
      %v487 = vld [vmem:[%s1 + $0x840] sm:$0xff]
      %v488 = vld [vmem:[%s1 + $0x848] sm:$0xff]
      %v489 = vld [vmem:[%s1 + $0x850] sm:$0xff]
      %v490 = vld [vmem:[%s1 + $0x858] sm:$0xff]
      %v491 = vld [vmem:[%s1 + $0x860] sm:$0xff]
      %v492 = vld [vmem:[%s1 + $0x868] sm:$0xff]
      %v493 = vld [vmem:[%s1 + $0x870] sm:$0xff]
      %v494 = vld [vmem:[%s1 + $0x878] sm:$0xff]
      %v495 = vld [vmem:[%s1 + $0x880] sm:$0xff]
      %v496 = vld [vmem:[%s1 + $0x888] sm:$0xff]
      %v497 = vld [vmem:[%s1 + $0x890] sm:$0xff]
      %v498 = vld [vmem:[%s1 + $0x898] sm:$0xff]
      %v499 = vld [vmem:[%s1 + $0x8a0] sm:$0xff]
      %v500 = vld [vmem:[%s1 + $0x8a8] sm:$0xff]
      %v501 = vld [vmem:[%s1 + $0x8b0] sm:$0xff]
      %v502 = vld [vmem:[%s1 + $0x8b8] sm:$0xff]
      %v503 = vld [vmem:[%s1 + $0x8c0] sm:$0xff]
      %v504 = vld [vmem:[%s1 + $0x8c8] sm:$0xff]
      %v505 = vld [vmem:[%s1 + $0x8d0] sm:$0xff]
      %v506 = vld [vmem:[%s1 + $0x8d8] sm:$0xff]
      %v507 = vld [vmem:[%s1 + $0x8e0] sm:$0xff]
      %v508 = vld [vmem:[%s1 + $0x8e8] sm:$0xff]
      %v509 = vld [vmem:[%s1 + $0x8f0] sm:$0xff]
      %v510 = vld [vmem:[%s1 + $0x8f8] sm:$0xff]
      %v511 = vld [vmem:[%s1 + $0x900] sm:$0xff]
      %v512 = vld [vmem:[%s1 + $0x908] sm:$0xff]
      %v513 = vld [vmem:[%s1 + $0x910] sm:$0xff]
      %v514 = vld [vmem:[%s1 + $0x918] sm:$0xff]
      %v515 = vld [vmem:[%s1 + $0x920] sm:$0xff]
      %v516 = vld [vmem:[%s1 + $0x928] sm:$0xff]
      %v517 = vld [vmem:[%s1 + $0x930] sm:$0xff]
      %v518 = vld [vmem:[%s1 + $0x938] sm:$0xff]
      %v519 = vld [vmem:[%s1 + $0x940] sm:$0xff]
      %v520 = vld [vmem:[%s1 + $0x948] sm:$0xff]
      %v521 = vld [vmem:[%s1 + $0x950] sm:$0xff]
      %v522 = vld [vmem:[%s1 + $0x958] sm:$0xff]
      %v523 = vld [vmem:[%s1 + $0x960] sm:$0xff]
      %v524 = vld [vmem:[%s1 + $0x968] sm:$0xff]
      %v525 = vld [vmem:[%s1 + $0x970] sm:$0xff]
      %v526 = vld [vmem:[%s1 + $0x978] sm:$0xff]
      %v527 = vld [vmem:[%s1 + $0x980] sm:$0xff]
      %v528 = vld [vmem:[%s1 + $0x988] sm:$0xff]
      %v529 = vld [vmem:[%s1 + $0x990] sm:$0xff]
      %v530 = vld [vmem:[%s1 + $0x998] sm:$0xff]
      %v531 = vld [vmem:[%s1 + $0x9a0] sm:$0xff]
      %v532 = vld [vmem:[%s1 + $0x9a8] sm:$0xff]
      %v533 = vld [vmem:[%s1 + $0x9b0] sm:$0xff]
      %v534 = vld [vmem:[%s1 + $0x9b8] sm:$0xff]
      %v535 = vld [vmem:[%s1 + $0x9c0] sm:$0xff]
      %v536 = vld [vmem:[%s1 + $0x9c8] sm:$0xff]
      %v537 = vld [vmem:[%s1 + $0x9d0] sm:$0xff]
      %v538 = vld [vmem:[%s1 + $0x9d8] sm:$0xff]
      %v539 = vld [vmem:[%s1 + $0x9e0] sm:$0xff]
      %v540 = vld [vmem:[%s1 + $0x9e8] sm:$0xff]
      %v541 = vld [vmem:[%s1 + $0x9f0] sm:$0xff]
      %v542 = vld [vmem:[%s1 + $0x9f8] sm:$0xff]
      %v543 = vld [vmem:[%s1 + $0xa00] sm:$0xff]
      %v544 = vld [vmem:[%s1 + $0xa08] sm:$0xff]
      %v545 = vld [vmem:[%s1 + $0xa10] sm:$0xff]
      %v546 = vld [vmem:[%s1 + $0xa18] sm:$0xff]
      %v547 = vld [vmem:[%s1 + $0xa20] sm:$0xff]
      %v548 = vld [vmem:[%s1 + $0xa28] sm:$0xff]
      %v549 = vld [vmem:[%s1 + $0xa30] sm:$0xff]
      %v550 = vld [vmem:[%s1 + $0xa38] sm:$0xff]
      %v551 = vld [vmem:[%s1 + $0xa40] sm:$0xff]
      %v552 = vld [vmem:[%s1 + $0xa48] sm:$0xff]
      %v553 = vld [vmem:[%s1 + $0xa50] sm:$0xff]
      %v554 = vld [vmem:[%s1 + $0xa58] sm:$0xff]
      %v555 = vld [vmem:[%s1 + $0xa60] sm:$0xff]
      %v556 = vld [vmem:[%s1 + $0xa68] sm:$0xff]
      %v557 = vld [vmem:[%s1 + $0xa70] sm:$0xff]
      %v558 = vld [vmem:[%s1 + $0xa78] sm:$0xff]
      %v559 = vld [vmem:[%s1 + $0xa80] sm:$0xff]
      %v560 = vld [vmem:[%s1 + $0xa88] sm:$0xff]
      %v561 = vld [vmem:[%s1 + $0xa90] sm:$0xff]
      %v562 = vld [vmem:[%s1 + $0xa98] sm:$0xff]
      %v563 = vld [vmem:[%s1 + $0xaa0] sm:$0xff]
      %v564 = vld [vmem:[%s1 + $0xaa8] sm:$0xff]
      %v565 = vld [vmem:[%s1 + $0xab0] sm:$0xff]
      %v566 = vld [vmem:[%s1 + $0xab8] sm:$0xff]
      %v567 = vld [vmem:[%s1 + $0xac0] sm:$0xff]
      %v568 = vld [vmem:[%s1 + $0xac8] sm:$0xff]
      %v569 = vld [vmem:[%s1 + $0xad0] sm:$0xff]
      %v570 = vld [vmem:[%s1 + $0xad8] sm:$0xff]
      %v571 = vld [vmem:[%s1 + $0xae0] sm:$0xff]
      %v572 = vld [vmem:[%s1 + $0xae8] sm:$0xff]
      %v573 = vld [vmem:[%s1 + $0xaf0] sm:$0xff]
      %v574 = vld [vmem:[%s1 + $0xaf8] sm:$0xff]
      %v575 = vld [vmem:[%s1 + $0xb00] sm:$0xff]
      %v576 = vld [vmem:[%s1 + $0xb08] sm:$0xff]
      %v577 = vld [vmem:[%s1 + $0xb10] sm:$0xff]
      %v578 = vld [vmem:[%s1 + $0xb18] sm:$0xff]
      %v579 = vld [vmem:[%s1 + $0xb20] sm:$0xff]
      %v580 = vld [vmem:[%s1 + $0xb28] sm:$0xff]
      %v581 = vld [vmem:[%s1 + $0xb30] sm:$0xff]
      %v582 = vld [vmem:[%s1 + $0xb38] sm:$0xff]
      %v583 = vld [vmem:[%s1 + $0xb40] sm:$0xff]
      %v584 = vld [vmem:[%s1 + $0xb48] sm:$0xff]
      %v585 = vld [vmem:[%s1 + $0xb50] sm:$0xff]
      %v586 = vld [vmem:[%s1 + $0xb58] sm:$0xff]
      %v587 = vld [vmem:[%s1 + $0xb60] sm:$0xff]
      %v588 = vld [vmem:[%s1 + $0xb68] sm:$0xff]
      %v589 = vld [vmem:[%s1 + $0xb70] sm:$0xff]
      %v590 = vld [vmem:[%s1 + $0xb78] sm:$0xff]
      %v591 = vld [vmem:[%s1 + $0xb80] sm:$0xff]
      %v592 = vld [vmem:[%s1 + $0xb88] sm:$0xff]
      %v593 = vld [vmem:[%s1 + $0xb90] sm:$0xff]
      %v594 = vld [vmem:[%s1 + $0xb98] sm:$0xff]
      %v595 = vld [vmem:[%s1 + $0xba0] sm:$0xff]
      %v596 = vld [vmem:[%s1 + $0xba8] sm:$0xff]
      %v597 = vld [vmem:[%s1 + $0xbb0] sm:$0xff]
      %v598 = vld [vmem:[%s1 + $0xbb8] sm:$0xff]
      %v599 = vld [vmem:[%s1 + $0xbc0] sm:$0xff]
      %v600 = vld [vmem:[%s1 + $0xbc8] sm:$0xff]
      %v601 = vld [vmem:[%s1 + $0xbd0] sm:$0xff]
      %v602 = vld [vmem:[%s1 + $0xbd8] sm:$0xff]
      %v603 = vld [vmem:[%s1 + $0xbe0] sm:$0xff]
      %v604 = vld [vmem:[%s1 + $0xbe8] sm:$0xff]
      %v605 = vld [vmem:[%s1 + $0xbf0] sm:$0xff]
      %v606 = vld [vmem:[%s1 + $0xbf8] sm:$0xff]
      %v607 = vld [vmem:[%s1 + $0xc00] sm:$0xff]
      %v608 = vld [vmem:[%s1 + $0xc08] sm:$0xff]
      %v609 = vld [vmem:[%s1 + $0xc10] sm:$0xff]
      %v610 = vld [vmem:[%s1 + $0xc18] sm:$0xff]
      %v611 = vld [vmem:[%s1 + $0xc20] sm:$0xff]
      %v612 = vld [vmem:[%s1 + $0xc28] sm:$0xff]
      %v613 = vld [vmem:[%s1 + $0xc30] sm:$0xff]
      %v614 = vld [vmem:[%s1 + $0xc38] sm:$0xff]
      %v615 = vld [vmem:[%s1 + $0xc40] sm:$0xff]
      %v616 = vld [vmem:[%s1 + $0xc48] sm:$0xff]
      %v617 = vld [vmem:[%s1 + $0xc50] sm:$0xff]
      %v618 = vld [vmem:[%s1 + $0xc58] sm:$0xff]
      %v619 = vld [vmem:[%s1 + $0xc60] sm:$0xff]
      %v620 = vld [vmem:[%s1 + $0xc68] sm:$0xff]
      %v621 = vld [vmem:[%s1 + $0xc70] sm:$0xff]
      %v622 = vld [vmem:[%s1 + $0xc78] sm:$0xff]
      %v636 = vunpack.c.l.b16 %v210
      %v637 = vunpack.c.h.b16 %v210
      %v638 = vunpack.c.l.b16 %v211
      %v639 = vunpack.c.h.b16 %v211
      %v640 = vunpack.c.l.b16 %v212
      %v641 = vunpack.c.h.b16 %v212
      %v642 = vunpack.c.l.b16 %v213
      %v643 = vunpack.c.h.b16 %v213
      %v644 = vunpack.c.l.b16 %v214
      %v645 = vunpack.c.h.b16 %v214
      %v646 = vunpack.c.l.b16 %v215
      %v647 = vunpack.c.h.b16 %v215
      %v648 = vunpack.c.l.b16 %v216
      %v649 = vunpack.c.h.b16 %v216
      %v650 = vunpack.c.l.b16 %v217
      %v651 = vunpack.c.h.b16 %v217
      %v652 = vunpack.c.l.b16 %v218
      %v653 = vunpack.c.h.b16 %v218
      %v654 = vunpack.c.l.b16 %v219
      %v655 = vunpack.c.h.b16 %v219
      %v656 = vunpack.c.l.b16 %v220
      %v657 = vunpack.c.h.b16 %v220
      %v658 = vunpack.c.l.b16 %v221
      %v659 = vunpack.c.h.b16 %v221
      %v660 = vunpack.c.l.b16 %v222
      %v661 = vpack.c.b16 %v636, %v636
      %v662 = vpack.c.b16 %v637, %v637
      %v663 = vpack.c.b16 %v638, %v638
      %v664 = vpack.c.b16 %v639, %v639
      %v665 = vpack.c.b16 %v640, %v640
      %v666 = vpack.c.b16 %v641, %v641
      %v667 = vpack.c.b16 %v642, %v642
      %v668 = vpack.c.b16 %v643, %v643
      %v669 = vpack.c.b16 %v644, %v644
      %v670 = vpack.c.b16 %v645, %v645
      %v671 = vpack.c.b16 %v646, %v646
      %v672 = vpack.c.b16 %v647, %v647
      %v673 = vpack.c.b16 %v648, %v648
      %v674 = vpack.c.b16 %v649, %v649
      %v675 = vpack.c.b16 %v650, %v650
      %v676 = vpack.c.b16 %v651, %v651
      %v677 = vpack.c.b16 %v652, %v652
      %v678 = vpack.c.b16 %v653, %v653
      %v679 = vpack.c.b16 %v654, %v654
      %v680 = vpack.c.b16 %v655, %v655
      %v681 = vpack.c.b16 %v656, %v656
      %v682 = vpack.c.b16 %v657, %v657
      %v683 = vpack.c.b16 %v658, %v658
      %v684 = vpack.c.b16 %v659, %v659
      %v685 = vpack.c.b16 %v660, %v660
      %v1111 = vunpack.c.l.b16 %v223
      %v1112 = vunpack.c.h.b16 %v223
      %v1113 = vunpack.c.l.b16 %v224
      %v1114 = vunpack.c.h.b16 %v224
      %v1115 = vunpack.c.l.b16 %v225
      %v1116 = vunpack.c.h.b16 %v225
      %v1117 = vunpack.c.l.b16 %v226
      %v1118 = vunpack.c.h.b16 %v226
      %v1119 = vunpack.c.l.b16 %v227
      %v1120 = vunpack.c.h.b16 %v227
      %v1121 = vunpack.c.l.b16 %v228
      %v1122 = vunpack.c.h.b16 %v228
      %v1123 = vunpack.c.l.b16 %v229
      %v1124 = vunpack.c.h.b16 %v229
      %v1125 = vunpack.c.l.b16 %v230
      %v1126 = vunpack.c.h.b16 %v230
      %v1127 = vunpack.c.l.b16 %v231
      %v1128 = vunpack.c.h.b16 %v231
      %v1129 = vunpack.c.l.b16 %v232
      %v1130 = vunpack.c.h.b16 %v232
      %v1131 = vunpack.c.l.b16 %v233
      %v1132 = vunpack.c.h.b16 %v233
      %v1133 = vunpack.c.l.b16 %v234
      %v1134 = vunpack.c.h.b16 %v234
      %v1135 = vunpack.c.l.b16 %v235
      %v1136 = vunpack.c.h.b16 %v235
      %v1137 = vunpack.c.l.b16 %v236
      %v1138 = vunpack.c.h.b16 %v236
      %v1139 = vunpack.c.l.b16 %v237
      %v1140 = vunpack.c.h.b16 %v237
      %v1141 = vunpack.c.l.b16 %v238
      %v1142 = vunpack.c.h.b16 %v238
      %v1143 = vunpack.c.l.b16 %v239
      %v1144 = vunpack.c.h.b16 %v239
      %v1145 = vunpack.c.l.b16 %v240
      %v1146 = vunpack.c.h.b16 %v240
      %v1147 = vunpack.c.l.b16 %v241
      %v1148 = vunpack.c.h.b16 %v241
      %v1149 = vunpack.c.l.b16 %v242
      %v1150 = vunpack.c.h.b16 %v242
      %v1151 = vunpack.c.l.b16 %v243
      %v1152 = vunpack.c.h.b16 %v243
      %v1153 = vunpack.c.l.b16 %v244
      %v1154 = vunpack.c.h.b16 %v244
      %v1155 = vunpack.c.l.b16 %v245
      %v1156 = vunpack.c.h.b16 %v245
      %v1157 = vunpack.c.l.b16 %v246
      %v1158 = vunpack.c.h.b16 %v246
      %v1159 = vunpack.c.l.b16 %v247
      %v1160 = vunpack.c.h.b16 %v247
      %v1161 = vunpack.c.l.b16 %v248
      %v1162 = vunpack.c.h.b16 %v248
      %v1163 = vunpack.c.l.b16 %v249
      %v1164 = vunpack.c.h.b16 %v249
      %v1165 = vunpack.c.l.b16 %v250
      %v1166 = vunpack.c.h.b16 %v250
      %v1167 = vunpack.c.l.b16 %v251
      %v1168 = vunpack.c.h.b16 %v251
      %v1169 = vunpack.c.l.b16 %v252
      %v1170 = vunpack.c.h.b16 %v252
      %v1171 = vunpack.c.l.b16 %v253
      %v1172 = vunpack.c.h.b16 %v253
      %v1173 = vunpack.c.l.b16 %v254
      %v1174 = vunpack.c.h.b16 %v254
      %v1175 = vunpack.c.l.b16 %v255
      %v1176 = vunpack.c.h.b16 %v255
      %v1177 = vunpack.c.l.b16 %v256
      %v1178 = vunpack.c.h.b16 %v256
      %v1179 = vunpack.c.l.b16 %v257
      %v1180 = vunpack.c.h.b16 %v257
      %v1181 = vunpack.c.l.b16 %v258
      %v1182 = vunpack.c.h.b16 %v258
      %v1183 = vunpack.c.l.b16 %v259
      %v1184 = vunpack.c.h.b16 %v259
      %v1185 = vunpack.c.l.b16 %v260
      %v1186 = vunpack.c.h.b16 %v260
      %v1187 = vunpack.c.l.b16 %v261
      %v1188 = vunpack.c.h.b16 %v261
      %v1189 = vunpack.c.l.b16 %v262
      %v1190 = vunpack.c.h.b16 %v262
      %v1191 = vunpack.c.l.b16 %v263
      %v1192 = vunpack.c.h.b16 %v263
      %v1193 = vunpack.c.l.b16 %v264
      %v1194 = vunpack.c.h.b16 %v264
      %v1195 = vunpack.c.l.b16 %v265
      %v1196 = vunpack.c.h.b16 %v265
      %v1197 = vunpack.c.l.b16 %v266
      %v1198 = vunpack.c.h.b16 %v266
      %v1199 = vunpack.c.l.b16 %v267
      %v1200 = vunpack.c.h.b16 %v267
      %v1201 = vunpack.c.l.b16 %v268
      %v1202 = vunpack.c.h.b16 %v268
      %v1203 = vunpack.c.l.b16 %v269
      %v1204 = vunpack.c.h.b16 %v269
      %v1205 = vunpack.c.l.b16 %v270
      %v1206 = vunpack.c.h.b16 %v270
      %v1207 = vunpack.c.l.b16 %v271
      %v1208 = vunpack.c.h.b16 %v271
      %v1209 = vunpack.c.l.b16 %v272
      %v1210 = vunpack.c.h.b16 %v272
      %v1211 = vunpack.c.l.b16 %v273
      %v1212 = vunpack.c.h.b16 %v273
      %v1213 = vunpack.c.l.b16 %v274
      %v1214 = vunpack.c.h.b16 %v274
      %v1215 = vunpack.c.l.b16 %v275
      %v1216 = vunpack.c.h.b16 %v275
      %v1217 = vunpack.c.l.b16 %v276
      %v1218 = vunpack.c.h.b16 %v276
      %v1219 = vunpack.c.l.b16 %v277
      %v1220 = vunpack.c.h.b16 %v277
      %v1221 = vunpack.c.l.b16 %v278
      %v1222 = vunpack.c.h.b16 %v278
      %v1223 = vunpack.c.l.b16 %v279
      %v1224 = vunpack.c.h.b16 %v279
      %v1225 = vunpack.c.l.b16 %v280
      %v1226 = vunpack.c.h.b16 %v280
      %v1227 = vunpack.c.l.b16 %v281
      %v1228 = vunpack.c.h.b16 %v281
      %v1229 = vunpack.c.l.b16 %v282
      %v1230 = vunpack.c.h.b16 %v282
      %v1231 = vunpack.c.l.b16 %v283
      %v1232 = vunpack.c.h.b16 %v283
      %v1233 = vunpack.c.l.b16 %v284
      %v1234 = vunpack.c.h.b16 %v284
      %v1235 = vunpack.c.l.b16 %v285
      %v1236 = vunpack.c.h.b16 %v285
      %v1237 = vunpack.c.l.b16 %v286
      %v1238 = vunpack.c.h.b16 %v286
      %v1239 = vunpack.c.l.b16 %v287
      %v1240 = vunpack.c.h.b16 %v287
      %v1241 = vunpack.c.l.b16 %v288
      %v1242 = vunpack.c.h.b16 %v288
      %v1243 = vunpack.c.l.b16 %v289
      %v1244 = vunpack.c.h.b16 %v289
      %v1245 = vunpack.c.l.b16 %v290
      %v1246 = vunpack.c.h.b16 %v290
      %v1247 = vunpack.c.l.b16 %v291
      %v1248 = vunpack.c.h.b16 %v291
      %v1249 = vunpack.c.l.b16 %v292
      %v1250 = vunpack.c.h.b16 %v292
      %v1251 = vunpack.c.l.b16 %v293
      %v1252 = vunpack.c.h.b16 %v293
      %v1253 = vunpack.c.l.b16 %v294
      %v1254 = vunpack.c.h.b16 %v294
      %v1255 = vunpack.c.l.b16 %v295
      %v1256 = vunpack.c.h.b16 %v295
      %v1257 = vunpack.c.l.b16 %v296
      %v1258 = vunpack.c.h.b16 %v296
      %v1259 = vunpack.c.l.b16 %v297
      %v1260 = vunpack.c.h.b16 %v297
      %v1261 = vunpack.c.l.b16 %v298
      %v1262 = vunpack.c.h.b16 %v298
      %v1263 = vunpack.c.l.b16 %v299
      %v1264 = vunpack.c.h.b16 %v299
      %v1265 = vunpack.c.l.b16 %v300
      %v1266 = vunpack.c.h.b16 %v300
      %v1267 = vunpack.c.l.b16 %v301
      %v1268 = vunpack.c.h.b16 %v301
      %v1269 = vunpack.c.l.b16 %v302
      %v1270 = vunpack.c.h.b16 %v302
      %v1271 = vunpack.c.l.b16 %v303
      %v1272 = vunpack.c.h.b16 %v303
      %v1273 = vunpack.c.l.b16 %v304
      %v1274 = vunpack.c.h.b16 %v304
      %v1275 = vunpack.c.l.b16 %v305
      %v1276 = vunpack.c.h.b16 %v305
      %v1277 = vunpack.c.l.b16 %v306
      %v1278 = vunpack.c.h.b16 %v306
      %v1279 = vunpack.c.l.b16 %v307
      %v1280 = vunpack.c.h.b16 %v307
      %v1281 = vunpack.c.l.b16 %v308
      %v1282 = vunpack.c.h.b16 %v308
      %v1283 = vunpack.c.l.b16 %v309
      %v1284 = vunpack.c.h.b16 %v309
      %v1285 = vunpack.c.l.b16 %v310
      %v1286 = vunpack.c.h.b16 %v310
      %v1287 = vunpack.c.l.b16 %v311
      %v1288 = vunpack.c.h.b16 %v311
      %v1289 = vunpack.c.l.b16 %v312
      %v1290 = vunpack.c.h.b16 %v312
      %v1291 = vunpack.c.l.b16 %v313
      %v1292 = vunpack.c.h.b16 %v313
      %v1293 = vunpack.c.l.b16 %v314
      %v1294 = vunpack.c.h.b16 %v314
      %v1295 = vunpack.c.l.b16 %v315
      %v1296 = vunpack.c.h.b16 %v315
      %v1297 = vunpack.c.l.b16 %v316
      %v1298 = vunpack.c.h.b16 %v316
      %v1299 = vunpack.c.l.b16 %v317
      %v1300 = vunpack.c.h.b16 %v317
      %v1301 = vunpack.c.l.b16 %v318
      %v1302 = vunpack.c.h.b16 %v318
      %v1303 = vunpack.c.l.b16 %v319
      %v1304 = vunpack.c.h.b16 %v319
      %v1305 = vunpack.c.l.b16 %v320
      %v1306 = vunpack.c.h.b16 %v320
      %v1307 = vunpack.c.l.b16 %v321
      %v1308 = vunpack.c.h.b16 %v321
      %v1309 = vunpack.c.l.b16 %v322
      %v1310 = vunpack.c.h.b16 %v322
      %v1311 = vunpack.c.l.b16 %v323
      %v1312 = vunpack.c.h.b16 %v323
      %v1313 = vunpack.c.l.b16 %v324
      %v1314 = vunpack.c.h.b16 %v324
      %v1315 = vunpack.c.l.b16 %v325
      %v1316 = vunpack.c.h.b16 %v325
      %v1317 = vunpack.c.l.b16 %v326
      %v1318 = vunpack.c.h.b16 %v326
      %v1319 = vunpack.c.l.b16 %v327
      %v1320 = vunpack.c.h.b16 %v327
      %v1321 = vunpack.c.l.b16 %v328
      %v1322 = vunpack.c.h.b16 %v328
      %v1323 = vunpack.c.l.b16 %v329
      %v1324 = vunpack.c.h.b16 %v329
      %v1325 = vunpack.c.l.b16 %v330
      %v1326 = vunpack.c.h.b16 %v330
      %v1327 = vunpack.c.l.b16 %v331
      %v1328 = vunpack.c.h.b16 %v331
      %v1329 = vunpack.c.l.b16 %v332
      %v1330 = vunpack.c.h.b16 %v332
      %v1331 = vunpack.c.l.b16 %v333
      %v1332 = vunpack.c.h.b16 %v333
      %v1333 = vunpack.c.l.b16 %v334
      %v1334 = vunpack.c.h.b16 %v334
      %v1335 = vunpack.c.l.b16 %v335
      %v1336 = vunpack.c.h.b16 %v335
      %v1337 = vunpack.c.l.b16 %v336
      %v1338 = vunpack.c.h.b16 %v336
      %v1339 = vunpack.c.l.b16 %v337
      %v1340 = vunpack.c.h.b16 %v337
      %v1341 = vunpack.c.l.b16 %v338
      %v1342 = vunpack.c.h.b16 %v338
      %v1343 = vunpack.c.l.b16 %v339
      %v1344 = vunpack.c.h.b16 %v339
      %v1345 = vunpack.c.l.b16 %v340
      %v1346 = vunpack.c.h.b16 %v340
      %v1347 = vunpack.c.l.b16 %v341
      %v1348 = vunpack.c.h.b16 %v341
      %v1349 = vunpack.c.l.b16 %v342
      %v1350 = vunpack.c.h.b16 %v342
      %v1351 = vunpack.c.l.b16 %v343
      %v1352 = vunpack.c.h.b16 %v343
      %v1353 = vunpack.c.l.b16 %v344
      %v1354 = vunpack.c.h.b16 %v344
      %v1355 = vunpack.c.l.b16 %v345
      %v1356 = vunpack.c.h.b16 %v345
      %v1357 = vunpack.c.l.b16 %v346
      %v1358 = vunpack.c.h.b16 %v346
      %v1359 = vunpack.c.l.b16 %v347
      %v1360 = vunpack.c.h.b16 %v347
      %v1361 = vunpack.c.l.b16 %v348
      %v1362 = vunpack.c.h.b16 %v348
      %v1363 = vunpack.c.l.b16 %v349
      %v1364 = vunpack.c.h.b16 %v349
      %v1365 = vunpack.c.l.b16 %v350
      %v1366 = vunpack.c.h.b16 %v350
      %v1367 = vunpack.c.l.b16 %v351
      %v1368 = vunpack.c.h.b16 %v351
      %v1369 = vunpack.c.l.b16 %v352
      %v1370 = vunpack.c.h.b16 %v352
      %v1371 = vunpack.c.l.b16 %v353
      %v1372 = vunpack.c.h.b16 %v353
      %v1373 = vunpack.c.l.b16 %v354
      %v1374 = vunpack.c.h.b16 %v354
      %v1375 = vunpack.c.l.b16 %v355
      %v1376 = vunpack.c.h.b16 %v355
      %v1377 = vunpack.c.l.b16 %v356
      %v1378 = vunpack.c.h.b16 %v356
      %v1379 = vunpack.c.l.b16 %v357
      %v1380 = vunpack.c.h.b16 %v357
      %v1381 = vunpack.c.l.b16 %v358
      %v1382 = vunpack.c.h.b16 %v358
      %v1383 = vunpack.c.l.b16 %v359
      %v1384 = vunpack.c.h.b16 %v359
      %v1385 = vunpack.c.l.b16 %v360
      %v1386 = vunpack.c.h.b16 %v360
      %v1387 = vunpack.c.l.b16 %v361
      %v1388 = vunpack.c.h.b16 %v361
      %v1389 = vunpack.c.l.b16 %v362
      %v1390 = vunpack.c.h.b16 %v362
      %v1391 = vunpack.c.l.b16 %v363
      %v1392 = vunpack.c.h.b16 %v363
      %v1393 = vunpack.c.l.b16 %v364
      %v1394 = vunpack.c.h.b16 %v364
      %v1395 = vunpack.c.l.b16 %v365
      %v1396 = vunpack.c.h.b16 %v365
      %v1397 = vunpack.c.l.b16 %v366
      %v1398 = vunpack.c.h.b16 %v366
      %v1399 = vunpack.c.l.b16 %v367
      %v1400 = vunpack.c.h.b16 %v367
      %v1401 = vunpack.c.l.b16 %v368
      %v1402 = vunpack.c.h.b16 %v368
      %v1403 = vunpack.c.l.b16 %v369
      %v1404 = vunpack.c.h.b16 %v369
      %v1405 = vunpack.c.l.b16 %v370
      %v1406 = vunpack.c.h.b16 %v370
      %v1407 = vunpack.c.l.b16 %v371
      %v1408 = vunpack.c.h.b16 %v371
      %v1409 = vunpack.c.l.b16 %v372
      %v1410 = vunpack.c.h.b16 %v372
      %v1411 = vunpack.c.l.b16 %v373
      %v1412 = vunpack.c.h.b16 %v373
      %v1413 = vunpack.c.l.b16 %v374
      %v1414 = vunpack.c.h.b16 %v374
      %v1415 = vunpack.c.l.b16 %v375
      %v1416 = vunpack.c.h.b16 %v375
      %v1417 = vunpack.c.l.b16 %v376
      %v1418 = vunpack.c.h.b16 %v376
      %v1419 = vunpack.c.l.b16 %v377
      %v1420 = vunpack.c.h.b16 %v377
      %v1421 = vunpack.c.l.b16 %v378
      %v1422 = vunpack.c.h.b16 %v378
      %v1423 = vunpack.c.l.b16 %v379
      %v1424 = vunpack.c.h.b16 %v379
      %v1425 = vunpack.c.l.b16 %v380
      %v1426 = vunpack.c.h.b16 %v380
      %v1427 = vunpack.c.l.b16 %v381
      %v1428 = vunpack.c.h.b16 %v381
      %v1429 = vunpack.c.l.b16 %v382
      %v1430 = vunpack.c.h.b16 %v382
      %v1431 = vunpack.c.l.b16 %v383
      %v1432 = vunpack.c.h.b16 %v383
      %v1433 = vunpack.c.l.b16 %v384
      %v1434 = vunpack.c.h.b16 %v384
      %v1435 = vunpack.c.l.b16 %v385
      %v1436 = vunpack.c.h.b16 %v385
      %v1437 = vunpack.c.l.b16 %v386
      %v1438 = vunpack.c.h.b16 %v386
      %v1439 = vunpack.c.l.b16 %v387
      %v1440 = vunpack.c.h.b16 %v387
      %v1441 = vunpack.c.l.b16 %v388
      %v1442 = vunpack.c.h.b16 %v388
      %v1443 = vunpack.c.l.b16 %v389
      %v1444 = vunpack.c.h.b16 %v389
      %v1445 = vunpack.c.l.b16 %v390
      %v1446 = vunpack.c.h.b16 %v390
      %v1447 = vunpack.c.l.b16 %v391
      %v1448 = vunpack.c.h.b16 %v391
      %v1449 = vunpack.c.l.b16 %v392
      %v1450 = vunpack.c.h.b16 %v392
      %v1451 = vunpack.c.l.b16 %v393
      %v1452 = vunpack.c.h.b16 %v393
      %v1453 = vunpack.c.l.b16 %v394
      %v1454 = vunpack.c.h.b16 %v394
      %v1455 = vunpack.c.l.b16 %v395
      %v1456 = vunpack.c.h.b16 %v395
      %v1457 = vunpack.c.l.b16 %v396
      %v1458 = vunpack.c.h.b16 %v396
      %v1459 = vunpack.c.l.b16 %v397
      %v1460 = vunpack.c.h.b16 %v397
      %v1461 = vunpack.c.l.b16 %v398
      %v1462 = vunpack.c.h.b16 %v398
      %v1463 = vunpack.c.l.b16 %v399
      %v1464 = vunpack.c.h.b16 %v399
      %v1465 = vunpack.c.l.b16 %v400
      %v1466 = vunpack.c.h.b16 %v400
      %v1467 = vunpack.c.l.b16 %v401
      %v1468 = vunpack.c.h.b16 %v401
      %v1469 = vunpack.c.l.b16 %v402
      %v1470 = vunpack.c.h.b16 %v402
      %v1471 = vunpack.c.l.b16 %v403
      %v1472 = vunpack.c.h.b16 %v403
      %v1473 = vunpack.c.l.b16 %v404
      %v1474 = vunpack.c.h.b16 %v404
      %v1475 = vunpack.c.l.b16 %v405
      %v1476 = vunpack.c.h.b16 %v405
      %v1477 = vunpack.c.l.b16 %v406
      %v1478 = vunpack.c.h.b16 %v406
      %v1479 = vunpack.c.l.b16 %v407
      %v1480 = vunpack.c.h.b16 %v407
      %v1481 = vunpack.c.l.b16 %v408
      %v1482 = vunpack.c.h.b16 %v408
      %v1483 = vunpack.c.l.b16 %v409
      %v1484 = vunpack.c.h.b16 %v409
      %v1485 = vunpack.c.l.b16 %v410
      %v1486 = vunpack.c.h.b16 %v410
      %v1487 = vunpack.c.l.b16 %v411
      %v1488 = vunpack.c.h.b16 %v411
      %v1489 = vunpack.c.l.b16 %v412
      %v1490 = vunpack.c.h.b16 %v412
      %v1491 = vunpack.c.l.b16 %v413
      %v1492 = vunpack.c.h.b16 %v413
      %v1493 = vunpack.c.l.b16 %v414
      %v1494 = vunpack.c.h.b16 %v414
      %v1495 = vunpack.c.l.b16 %v415
      %v1496 = vunpack.c.h.b16 %v415
      %v1497 = vunpack.c.l.b16 %v416
      %v1498 = vunpack.c.h.b16 %v416
      %v1499 = vunpack.c.l.b16 %v417
      %v1500 = vunpack.c.h.b16 %v417
      %v1501 = vunpack.c.l.b16 %v418
      %v1502 = vunpack.c.h.b16 %v418
      %v1503 = vunpack.c.l.b16 %v419
      %v1504 = vunpack.c.h.b16 %v419
      %v1505 = vunpack.c.l.b16 %v420
      %v1506 = vunpack.c.h.b16 %v420
      %v1507 = vunpack.c.l.b16 %v421
      %v1508 = vunpack.c.h.b16 %v421
      %v1509 = vunpack.c.l.b16 %v422
      %v1510 = vunpack.c.h.b16 %v422
      %v1511 = vunpack.c.l.b16 %v423
      %v1512 = vunpack.c.h.b16 %v423
      %v1513 = vunpack.c.l.b16 %v424
      %v1514 = vunpack.c.h.b16 %v424
      %v1515 = vunpack.c.l.b16 %v425
      %v1516 = vunpack.c.h.b16 %v425
      %v1517 = vunpack.c.l.b16 %v426
      %v1518 = vunpack.c.h.b16 %v426
      %v1519 = vunpack.c.l.b16 %v427
      %v1520 = vunpack.c.h.b16 %v427
      %v1521 = vunpack.c.l.b16 %v428
      %v1522 = vunpack.c.h.b16 %v428
      %v1523 = vunpack.c.l.b16 %v429
      %v1524 = vunpack.c.h.b16 %v429
      %v1525 = vunpack.c.l.b16 %v430
      %v1526 = vunpack.c.h.b16 %v430
      %v1527 = vunpack.c.l.b16 %v431
      %v1528 = vunpack.c.h.b16 %v431
      %v1529 = vunpack.c.l.b16 %v432
      %v1530 = vunpack.c.h.b16 %v432
      %v1531 = vunpack.c.l.b16 %v433
      %v1532 = vunpack.c.h.b16 %v433
      %v1533 = vunpack.c.l.b16 %v434
      %v1534 = vunpack.c.h.b16 %v434
      %v1535 = vunpack.c.l.b16 %v435
      %v1536 = vunpack.c.h.b16 %v435
      %v1537 = vunpack.c.l.b16 %v436
      %v1538 = vunpack.c.h.b16 %v436
      %v1539 = vunpack.c.l.b16 %v437
      %v1540 = vunpack.c.h.b16 %v437
      %v1541 = vunpack.c.l.b16 %v438
      %v1542 = vunpack.c.h.b16 %v438
      %v1543 = vunpack.c.l.b16 %v439
      %v1544 = vunpack.c.h.b16 %v439
      %v1545 = vunpack.c.l.b16 %v440
      %v1546 = vunpack.c.h.b16 %v440
      %v1547 = vunpack.c.l.b16 %v441
      %v1548 = vunpack.c.h.b16 %v441
      %v1549 = vunpack.c.l.b16 %v442
      %v1550 = vunpack.c.h.b16 %v442
      %v1551 = vunpack.c.l.b16 %v443
      %v1552 = vunpack.c.h.b16 %v443
      %v1553 = vunpack.c.l.b16 %v444
      %v1554 = vunpack.c.h.b16 %v444
      %v1555 = vunpack.c.l.b16 %v445
      %v1556 = vunpack.c.h.b16 %v445
      %v1557 = vunpack.c.l.b16 %v446
      %v1558 = vunpack.c.h.b16 %v446
      %v1559 = vunpack.c.l.b16 %v447
      %v1560 = vunpack.c.h.b16 %v447
      %v1561 = vunpack.c.l.b16 %v448
      %v1562 = vunpack.c.h.b16 %v448
      %v1563 = vunpack.c.l.b16 %v449
      %v1564 = vunpack.c.h.b16 %v449
      %v1565 = vunpack.c.l.b16 %v450
      %v1566 = vunpack.c.h.b16 %v450
      %v1567 = vunpack.c.l.b16 %v451
      %v1568 = vunpack.c.h.b16 %v451
      %v1569 = vunpack.c.l.b16 %v452
      %v1570 = vunpack.c.h.b16 %v452
      %v1571 = vunpack.c.l.b16 %v453
      %v1572 = vunpack.c.h.b16 %v453
      %v1573 = vunpack.c.l.b16 %v454
      %v1574 = vunpack.c.h.b16 %v454
      %v1575 = vunpack.c.l.b16 %v455
      %v1576 = vunpack.c.h.b16 %v455
      %v1577 = vunpack.c.l.b16 %v456
      %v1578 = vunpack.c.h.b16 %v456
      %v1579 = vunpack.c.l.b16 %v457
      %v1580 = vunpack.c.h.b16 %v457
      %v1581 = vunpack.c.l.b16 %v458
      %v1582 = vunpack.c.h.b16 %v458
      %v1583 = vunpack.c.l.b16 %v459
      %v1584 = vunpack.c.h.b16 %v459
      %v1585 = vunpack.c.l.b16 %v460
      %v1586 = vunpack.c.h.b16 %v460
      %v1587 = vunpack.c.l.b16 %v461
      %v1588 = vunpack.c.h.b16 %v461
      %v1589 = vunpack.c.l.b16 %v462
      %v1590 = vunpack.c.h.b16 %v462
      %v1591 = vunpack.c.l.b16 %v463
      %v1592 = vunpack.c.h.b16 %v463
      %v1593 = vunpack.c.l.b16 %v464
      %v1594 = vunpack.c.h.b16 %v464
      %v1595 = vunpack.c.l.b16 %v465
      %v1596 = vunpack.c.h.b16 %v465
      %v1597 = vunpack.c.l.b16 %v466
      %v1598 = vunpack.c.h.b16 %v466
      %v1599 = vunpack.c.l.b16 %v467
      %v1600 = vunpack.c.h.b16 %v467
      %v1601 = vunpack.c.l.b16 %v468
      %v1602 = vunpack.c.h.b16 %v468
      %v1603 = vunpack.c.l.b16 %v469
      %v1604 = vunpack.c.h.b16 %v469
      %v1605 = vunpack.c.l.b16 %v470
      %v1606 = vunpack.c.h.b16 %v470
      %v1607 = vunpack.c.l.b16 %v471
      %v1608 = vunpack.c.h.b16 %v471
      %v1609 = vunpack.c.l.b16 %v472
      %v1610 = vunpack.c.h.b16 %v472
      %v1611 = vunpack.c.l.b16 %v473
      %v1612 = vunpack.c.h.b16 %v473
      %v1613 = vunpack.c.l.b16 %v474
      %v1614 = vunpack.c.h.b16 %v474
      %v1615 = vunpack.c.l.b16 %v475
      %v1616 = vunpack.c.h.b16 %v475
      %v1617 = vunpack.c.l.b16 %v476
      %v1618 = vunpack.c.h.b16 %v476
      %v1619 = vunpack.c.l.b16 %v477
      %v1620 = vunpack.c.h.b16 %v477
      %v1621 = vunpack.c.l.b16 %v478
      %v1622 = vunpack.c.h.b16 %v478
      %v1623 = vunpack.c.l.b16 %v479
      %v1624 = vunpack.c.h.b16 %v479
      %v1625 = vunpack.c.l.b16 %v480
      %v1626 = vunpack.c.h.b16 %v480
      %v1627 = vunpack.c.l.b16 %v481
      %v1628 = vunpack.c.h.b16 %v481
      %v1629 = vunpack.c.l.b16 %v482
      %v1630 = vunpack.c.h.b16 %v482
      %v1631 = vunpack.c.l.b16 %v483
      %v1632 = vunpack.c.h.b16 %v483
      %v1633 = vunpack.c.l.b16 %v484
      %v1634 = vunpack.c.h.b16 %v484
      %v1635 = vunpack.c.l.b16 %v485
      %v1636 = vunpack.c.h.b16 %v485
      %v1637 = vunpack.c.l.b16 %v486
      %v1638 = vunpack.c.h.b16 %v486
      %v1639 = vunpack.c.l.b16 %v487
      %v1640 = vunpack.c.h.b16 %v487
      %v1641 = vunpack.c.l.b16 %v488
      %v1642 = vunpack.c.h.b16 %v488
      %v1643 = vunpack.c.l.b16 %v489
      %v1644 = vunpack.c.h.b16 %v489
      %v1645 = vunpack.c.l.b16 %v490
      %v1646 = vunpack.c.h.b16 %v490
      %v1647 = vunpack.c.l.b16 %v491
      %v1648 = vunpack.c.h.b16 %v491
      %v1649 = vunpack.c.l.b16 %v492
      %v1650 = vunpack.c.h.b16 %v492
      %v1651 = vunpack.c.l.b16 %v493
      %v1652 = vunpack.c.h.b16 %v493
      %v1653 = vunpack.c.l.b16 %v494
      %v1654 = vunpack.c.h.b16 %v494
      %v1655 = vunpack.c.l.b16 %v495
      %v1656 = vunpack.c.h.b16 %v495
      %v1657 = vunpack.c.l.b16 %v496
      %v1658 = vunpack.c.h.b16 %v496
      %v1659 = vunpack.c.l.b16 %v497
      %v1660 = vunpack.c.h.b16 %v497
      %v1661 = vunpack.c.l.b16 %v498
      %v1662 = vunpack.c.h.b16 %v498
      %v1663 = vunpack.c.l.b16 %v499
      %v1664 = vunpack.c.h.b16 %v499
      %v1665 = vunpack.c.l.b16 %v500
      %v1666 = vunpack.c.h.b16 %v500
      %v1667 = vunpack.c.l.b16 %v501
      %v1668 = vunpack.c.h.b16 %v501
      %v1669 = vunpack.c.l.b16 %v502
      %v1670 = vunpack.c.h.b16 %v502
      %v1671 = vunpack.c.l.b16 %v503
      %v1672 = vunpack.c.h.b16 %v503
      %v1673 = vunpack.c.l.b16 %v504
      %v1674 = vunpack.c.h.b16 %v504
      %v1675 = vunpack.c.l.b16 %v505
      %v1676 = vunpack.c.h.b16 %v505
      %v1677 = vunpack.c.l.b16 %v506
      %v1678 = vunpack.c.h.b16 %v506
      %v1679 = vunpack.c.l.b16 %v507
      %v1680 = vunpack.c.h.b16 %v507
      %v1681 = vunpack.c.l.b16 %v508
      %v1682 = vunpack.c.h.b16 %v508
      %v1683 = vunpack.c.l.b16 %v509
      %v1684 = vunpack.c.h.b16 %v509
      %v1685 = vunpack.c.l.b16 %v510
      %v1686 = vunpack.c.h.b16 %v510
      %v1687 = vunpack.c.l.b16 %v511
      %v1688 = vunpack.c.h.b16 %v511
      %v1689 = vunpack.c.l.b16 %v512
      %v1690 = vunpack.c.h.b16 %v512
      %v1691 = vunpack.c.l.b16 %v513
      %v1692 = vunpack.c.h.b16 %v513
      %v1693 = vunpack.c.l.b16 %v514
      %v1694 = vunpack.c.h.b16 %v514
      %v1695 = vunpack.c.l.b16 %v515
      %v1696 = vunpack.c.h.b16 %v515
      %v1697 = vunpack.c.l.b16 %v516
      %v1698 = vunpack.c.h.b16 %v516
      %v1699 = vunpack.c.l.b16 %v517
      %v1700 = vunpack.c.h.b16 %v517
      %v1701 = vunpack.c.l.b16 %v518
      %v1702 = vunpack.c.h.b16 %v518
      %v1703 = vunpack.c.l.b16 %v519
      %v1704 = vunpack.c.h.b16 %v519
      %v1705 = vunpack.c.l.b16 %v520
      %v1706 = vunpack.c.h.b16 %v520
      %v1707 = vunpack.c.l.b16 %v521
      %v1708 = vunpack.c.h.b16 %v521
      %v1709 = vunpack.c.l.b16 %v522
      %v1710 = vunpack.c.h.b16 %v522
      %v1711 = vunpack.c.l.b16 %v523
      %v1712 = vunpack.c.h.b16 %v523
      %v1713 = vunpack.c.l.b16 %v524
      %v1714 = vunpack.c.h.b16 %v524
      %v1715 = vunpack.c.l.b16 %v525
      %v1716 = vunpack.c.h.b16 %v525
      %v1717 = vunpack.c.l.b16 %v526
      %v1718 = vunpack.c.h.b16 %v526
      %v1719 = vunpack.c.l.b16 %v527
      %v1720 = vunpack.c.h.b16 %v527
      %v1721 = vunpack.c.l.b16 %v528
      %v1722 = vunpack.c.h.b16 %v528
      %v1723 = vunpack.c.l.b16 %v529
      %v1724 = vunpack.c.h.b16 %v529
      %v1725 = vunpack.c.l.b16 %v530
      %v1726 = vunpack.c.h.b16 %v530
      %v1727 = vunpack.c.l.b16 %v531
      %v1728 = vunpack.c.h.b16 %v531
      %v1729 = vunpack.c.l.b16 %v532
      %v1730 = vunpack.c.h.b16 %v532
      %v1731 = vunpack.c.l.b16 %v533
      %v1732 = vunpack.c.h.b16 %v533
      %v1733 = vunpack.c.l.b16 %v534
      %v1734 = vunpack.c.h.b16 %v534
      %v1735 = vunpack.c.l.b16 %v535
      %v1736 = vunpack.c.h.b16 %v535
      %v1737 = vunpack.c.l.b16 %v536
      %v1738 = vunpack.c.h.b16 %v536
      %v1739 = vunpack.c.l.b16 %v537
      %v1740 = vunpack.c.h.b16 %v537
      %v1741 = vunpack.c.l.b16 %v538
      %v1742 = vunpack.c.h.b16 %v538
      %v1743 = vunpack.c.l.b16 %v539
      %v1744 = vunpack.c.h.b16 %v539
      %v1745 = vunpack.c.l.b16 %v540
      %v1746 = vunpack.c.h.b16 %v540
      %v1747 = vunpack.c.l.b16 %v541
      %v1748 = vunpack.c.h.b16 %v541
      %v1749 = vunpack.c.l.b16 %v542
      %v1750 = vunpack.c.h.b16 %v542
      %v1751 = vunpack.c.l.b16 %v543
      %v1752 = vunpack.c.h.b16 %v543
      %v1753 = vunpack.c.l.b16 %v544
      %v1754 = vunpack.c.h.b16 %v544
      %v1755 = vunpack.c.l.b16 %v545
      %v1756 = vunpack.c.h.b16 %v545
      %v1757 = vunpack.c.l.b16 %v546
      %v1758 = vunpack.c.h.b16 %v546
      %v1759 = vunpack.c.l.b16 %v547
      %v1760 = vunpack.c.h.b16 %v547
      %v1761 = vunpack.c.l.b16 %v548
      %v1762 = vunpack.c.h.b16 %v548
      %v1763 = vunpack.c.l.b16 %v549
      %v1764 = vunpack.c.h.b16 %v549
      %v1765 = vunpack.c.l.b16 %v550
      %v1766 = vunpack.c.h.b16 %v550
      %v1767 = vunpack.c.l.b16 %v551
      %v1768 = vunpack.c.h.b16 %v551
      %v1769 = vunpack.c.l.b16 %v552
      %v1770 = vunpack.c.h.b16 %v552
      %v1771 = vunpack.c.l.b16 %v553
      %v1772 = vunpack.c.h.b16 %v553
      %v1773 = vunpack.c.l.b16 %v554
      %v1774 = vunpack.c.h.b16 %v554
      %v1775 = vunpack.c.l.b16 %v555
      %v1776 = vunpack.c.h.b16 %v555
      %v1777 = vunpack.c.l.b16 %v556
      %v1778 = vunpack.c.h.b16 %v556
      %v1779 = vunpack.c.l.b16 %v557
      %v1780 = vunpack.c.h.b16 %v557
      %v1781 = vunpack.c.l.b16 %v558
      %v1782 = vunpack.c.h.b16 %v558
      %v1783 = vunpack.c.l.b16 %v559
      %v1784 = vunpack.c.h.b16 %v559
      %v1785 = vunpack.c.l.b16 %v560
      %v1786 = vunpack.c.h.b16 %v560
      %v1787 = vunpack.c.l.b16 %v561
      %v1788 = vunpack.c.h.b16 %v561
      %v1789 = vunpack.c.l.b16 %v562
      %v1790 = vunpack.c.h.b16 %v562
      %v1791 = vunpack.c.l.b16 %v563
      %v1792 = vunpack.c.h.b16 %v563
      %v1793 = vunpack.c.l.b16 %v564
      %v1794 = vunpack.c.h.b16 %v564
      %v1795 = vunpack.c.l.b16 %v565
      %v1796 = vunpack.c.h.b16 %v565
      %v1797 = vunpack.c.l.b16 %v566
      %v1798 = vunpack.c.h.b16 %v566
      %v1799 = vunpack.c.l.b16 %v567
      %v1800 = vunpack.c.h.b16 %v567
      %v1801 = vunpack.c.l.b16 %v568
      %v1802 = vunpack.c.h.b16 %v568
      %v1803 = vunpack.c.l.b16 %v569
      %v1804 = vunpack.c.h.b16 %v569
      %v1805 = vunpack.c.l.b16 %v570
      %v1806 = vunpack.c.h.b16 %v570
      %v1807 = vunpack.c.l.b16 %v571
      %v1808 = vunpack.c.h.b16 %v571
      %v1809 = vunpack.c.l.b16 %v572
      %v1810 = vunpack.c.h.b16 %v572
      %v1811 = vunpack.c.l.b16 %v573
      %v1812 = vunpack.c.h.b16 %v573
      %v1813 = vunpack.c.l.b16 %v574
      %v1814 = vunpack.c.h.b16 %v574
      %v1815 = vunpack.c.l.b16 %v575
      %v1816 = vunpack.c.h.b16 %v575
      %v1817 = vunpack.c.l.b16 %v576
      %v1818 = vunpack.c.h.b16 %v576
      %v1819 = vunpack.c.l.b16 %v577
      %v1820 = vunpack.c.h.b16 %v577
      %v1821 = vunpack.c.l.b16 %v578
      %v1822 = vunpack.c.h.b16 %v578
      %v1823 = vunpack.c.l.b16 %v579
      %v1824 = vunpack.c.h.b16 %v579
      %v1825 = vunpack.c.l.b16 %v580
      %v1826 = vunpack.c.h.b16 %v580
      %v1827 = vunpack.c.l.b16 %v581
      %v1828 = vunpack.c.h.b16 %v581
      %v1829 = vunpack.c.l.b16 %v582
      %v1830 = vunpack.c.h.b16 %v582
      %v1831 = vunpack.c.l.b16 %v583
      %v1832 = vunpack.c.h.b16 %v583
      %v1833 = vunpack.c.l.b16 %v584
      %v1834 = vunpack.c.h.b16 %v584
      %v1835 = vunpack.c.l.b16 %v585
      %v1836 = vunpack.c.h.b16 %v585
      %v1837 = vunpack.c.l.b16 %v586
      %v1838 = vunpack.c.h.b16 %v586
      %v1839 = vunpack.c.l.b16 %v587
      %v1840 = vunpack.c.h.b16 %v587
      %v1841 = vunpack.c.l.b16 %v588
      %v1842 = vunpack.c.h.b16 %v588
      %v1843 = vunpack.c.l.b16 %v589
      %v1844 = vunpack.c.h.b16 %v589
      %v1845 = vunpack.c.l.b16 %v590
      %v1846 = vunpack.c.h.b16 %v590
      %v1847 = vunpack.c.l.b16 %v591
      %v1848 = vunpack.c.h.b16 %v591
      %v1849 = vunpack.c.l.b16 %v592
      %v1850 = vunpack.c.h.b16 %v592
      %v1851 = vunpack.c.l.b16 %v593
      %v1852 = vunpack.c.h.b16 %v593
      %v1853 = vunpack.c.l.b16 %v594
      %v1854 = vunpack.c.h.b16 %v594
      %v1855 = vunpack.c.l.b16 %v595
      %v1856 = vunpack.c.h.b16 %v595
      %v1857 = vunpack.c.l.b16 %v596
      %v1858 = vunpack.c.h.b16 %v596
      %v1859 = vunpack.c.l.b16 %v597
      %v1860 = vunpack.c.h.b16 %v597
      %v1861 = vunpack.c.l.b16 %v598
      %v1862 = vunpack.c.h.b16 %v598
      %v1863 = vunpack.c.l.b16 %v599
      %v1864 = vunpack.c.h.b16 %v599
      %v1865 = vunpack.c.l.b16 %v600
      %v1866 = vunpack.c.h.b16 %v600
      %v1867 = vunpack.c.l.b16 %v601
      %v1868 = vunpack.c.h.b16 %v601
      %v1869 = vunpack.c.l.b16 %v602
      %v1870 = vunpack.c.h.b16 %v602
      %v1871 = vunpack.c.l.b16 %v603
      %v1872 = vunpack.c.h.b16 %v603
      %v1873 = vunpack.c.l.b16 %v604
      %v1874 = vunpack.c.h.b16 %v604
      %v1875 = vunpack.c.l.b16 %v605
      %v1876 = vunpack.c.h.b16 %v605
      %v1877 = vunpack.c.l.b16 %v606
      %v1878 = vunpack.c.h.b16 %v606
      %v1879 = vunpack.c.l.b16 %v607
      %v1880 = vunpack.c.h.b16 %v607
      %v1881 = vunpack.c.l.b16 %v608
      %v1882 = vunpack.c.h.b16 %v608
      %v1883 = vunpack.c.l.b16 %v609
      %v1884 = vunpack.c.h.b16 %v609
      %v1885 = vunpack.c.l.b16 %v610
      %v1886 = vunpack.c.h.b16 %v610
      %v1887 = vunpack.c.l.b16 %v611
      %v1888 = vunpack.c.h.b16 %v611
      %v1889 = vunpack.c.l.b16 %v612
      %v1890 = vunpack.c.h.b16 %v612
      %v1891 = vunpack.c.l.b16 %v613
      %v1892 = vunpack.c.h.b16 %v613
      %v1893 = vunpack.c.l.b16 %v614
      %v1894 = vunpack.c.h.b16 %v614
      %v1895 = vunpack.c.l.b16 %v615
      %v1896 = vunpack.c.h.b16 %v615
      %v1897 = vunpack.c.l.b16 %v616
      %v1898 = vunpack.c.h.b16 %v616
      %v1899 = vunpack.c.l.b16 %v617
      %v1900 = vunpack.c.h.b16 %v617
      %v1901 = vunpack.c.l.b16 %v618
      %v1902 = vunpack.c.h.b16 %v618
      %v1903 = vunpack.c.l.b16 %v619
      %v1904 = vunpack.c.h.b16 %v619
      %v1905 = vunpack.c.l.b16 %v620
      %v1906 = vunpack.c.h.b16 %v620
      %v1907 = vunpack.c.l.b16 %v621
      %v1908 = vunpack.c.h.b16 %v621
      %v1909 = vunpack.c.l.b16 %v622
      %v1910 = vunpack.c.h.b16 %v622
      %v1911 = vpack.c.b16 %v1113, %v1111
      %v1912 = vpack.c.b16 %v1114, %v1112
      %v1913 = vpack.c.b16 %v1117, %v1115
      %v1914 = vpack.c.b16 %v1118, %v1116
      %v1915 = vpack.c.b16 %v1121, %v1119
      %v1916 = vpack.c.b16 %v1122, %v1120
      %v1917 = vpack.c.b16 %v1125, %v1123
      %v1918 = vpack.c.b16 %v1126, %v1124
      %v1919 = vpack.c.b16 %v1129, %v1127
      %v1920 = vpack.c.b16 %v1130, %v1128
      %v1921 = vpack.c.b16 %v1133, %v1131
      %v1922 = vpack.c.b16 %v1134, %v1132
      %v1923 = vpack.c.b16 %v1137, %v1135
      %v1924 = vpack.c.b16 %v1138, %v1136
      %v1925 = vpack.c.b16 %v1141, %v1139
      %v1926 = vpack.c.b16 %v1142, %v1140
      %v1927 = vpack.c.b16 %v1145, %v1143
      %v1928 = vpack.c.b16 %v1146, %v1144
      %v1929 = vpack.c.b16 %v1149, %v1147
      %v1930 = vpack.c.b16 %v1150, %v1148
      %v1931 = vpack.c.b16 %v1153, %v1151
      %v1932 = vpack.c.b16 %v1154, %v1152
      %v1933 = vpack.c.b16 %v1157, %v1155
      %v1934 = vpack.c.b16 %v1158, %v1156
      %v1935 = vpack.c.b16 %v1161, %v1159
      %v1936 = vpack.c.b16 %v1162, %v1160
      %v1937 = vpack.c.b16 %v1165, %v1163
      %v1938 = vpack.c.b16 %v1166, %v1164
      %v1939 = vpack.c.b16 %v1169, %v1167
      %v1940 = vpack.c.b16 %v1170, %v1168
      %v1941 = vpack.c.b16 %v1173, %v1171
      %v1942 = vpack.c.b16 %v1174, %v1172
      %v1943 = vpack.c.b16 %v1177, %v1175
      %v1944 = vpack.c.b16 %v1178, %v1176
      %v1945 = vpack.c.b16 %v1181, %v1179
      %v1946 = vpack.c.b16 %v1182, %v1180
      %v1947 = vpack.c.b16 %v1185, %v1183
      %v1948 = vpack.c.b16 %v1186, %v1184
      %v1949 = vpack.c.b16 %v1189, %v1187
      %v1950 = vpack.c.b16 %v1190, %v1188
      %v1951 = vpack.c.b16 %v1193, %v1191
      %v1952 = vpack.c.b16 %v1194, %v1192
      %v1953 = vpack.c.b16 %v1197, %v1195
      %v1954 = vpack.c.b16 %v1198, %v1196
      %v1955 = vpack.c.b16 %v1201, %v1199
      %v1956 = vpack.c.b16 %v1202, %v1200
      %v1957 = vpack.c.b16 %v1205, %v1203
      %v1958 = vpack.c.b16 %v1206, %v1204
      %v1959 = vpack.c.b16 %v1209, %v1207
      %v1960 = vpack.c.b16 %v1210, %v1208
      %v1961 = vpack.c.b16 %v1213, %v1211
      %v1962 = vpack.c.b16 %v1214, %v1212
      %v1963 = vpack.c.b16 %v1217, %v1215
      %v1964 = vpack.c.b16 %v1218, %v1216
      %v1965 = vpack.c.b16 %v1221, %v1219
      %v1966 = vpack.c.b16 %v1222, %v1220
      %v1967 = vpack.c.b16 %v1225, %v1223
      %v1968 = vpack.c.b16 %v1226, %v1224
      %v1969 = vpack.c.b16 %v1229, %v1227
      %v1970 = vpack.c.b16 %v1230, %v1228
      %v1971 = vpack.c.b16 %v1233, %v1231
      %v1972 = vpack.c.b16 %v1234, %v1232
      %v1973 = vpack.c.b16 %v1237, %v1235
      %v1974 = vpack.c.b16 %v1238, %v1236
      %v1975 = vpack.c.b16 %v1241, %v1239
      %v1976 = vpack.c.b16 %v1242, %v1240
      %v1977 = vpack.c.b16 %v1245, %v1243
      %v1978 = vpack.c.b16 %v1246, %v1244
      %v1979 = vpack.c.b16 %v1249, %v1247
      %v1980 = vpack.c.b16 %v1250, %v1248
      %v1981 = vpack.c.b16 %v1253, %v1251
      %v1982 = vpack.c.b16 %v1254, %v1252
      %v1983 = vpack.c.b16 %v1257, %v1255
      %v1984 = vpack.c.b16 %v1258, %v1256
      %v1985 = vpack.c.b16 %v1261, %v1259
      %v1986 = vpack.c.b16 %v1262, %v1260
      %v1987 = vpack.c.b16 %v1265, %v1263
      %v1988 = vpack.c.b16 %v1266, %v1264
      %v1989 = vpack.c.b16 %v1269, %v1267
      %v1990 = vpack.c.b16 %v1270, %v1268
      %v1991 = vpack.c.b16 %v1273, %v1271
      %v1992 = vpack.c.b16 %v1274, %v1272
      %v1993 = vpack.c.b16 %v1277, %v1275
      %v1994 = vpack.c.b16 %v1278, %v1276
      %v1995 = vpack.c.b16 %v1281, %v1279
      %v1996 = vpack.c.b16 %v1282, %v1280
      %v1997 = vpack.c.b16 %v1285, %v1283
      %v1998 = vpack.c.b16 %v1286, %v1284
      %v1999 = vpack.c.b16 %v1289, %v1287
      %v2000 = vpack.c.b16 %v1290, %v1288
      %v2001 = vpack.c.b16 %v1293, %v1291
      %v2002 = vpack.c.b16 %v1294, %v1292
      %v2003 = vpack.c.b16 %v1297, %v1295
      %v2004 = vpack.c.b16 %v1298, %v1296
      %v2005 = vpack.c.b16 %v1301, %v1299
      %v2006 = vpack.c.b16 %v1302, %v1300
      %v2007 = vpack.c.b16 %v1305, %v1303
      %v2008 = vpack.c.b16 %v1306, %v1304
      %v2009 = vpack.c.b16 %v1309, %v1307
      %v2010 = vpack.c.b16 %v1310, %v1308
      %v2011 = vpack.c.b16 %v1313, %v1311
      %v2012 = vpack.c.b16 %v1314, %v1312
      %v2013 = vpack.c.b16 %v1317, %v1315
      %v2014 = vpack.c.b16 %v1318, %v1316
      %v2015 = vpack.c.b16 %v1321, %v1319
      %v2016 = vpack.c.b16 %v1322, %v1320
      %v2017 = vpack.c.b16 %v1325, %v1323
      %v2018 = vpack.c.b16 %v1326, %v1324
      %v2019 = vpack.c.b16 %v1329, %v1327
      %v2020 = vpack.c.b16 %v1330, %v1328
      %v2021 = vpack.c.b16 %v1333, %v1331
      %v2022 = vpack.c.b16 %v1334, %v1332
      %v2023 = vpack.c.b16 %v1337, %v1335
      %v2024 = vpack.c.b16 %v1338, %v1336
      %v2025 = vpack.c.b16 %v1341, %v1339
      %v2026 = vpack.c.b16 %v1342, %v1340
      %v2027 = vpack.c.b16 %v1345, %v1343
      %v2028 = vpack.c.b16 %v1346, %v1344
      %v2029 = vpack.c.b16 %v1349, %v1347
      %v2030 = vpack.c.b16 %v1350, %v1348
      %v2031 = vpack.c.b16 %v1353, %v1351
      %v2032 = vpack.c.b16 %v1354, %v1352
      %v2033 = vpack.c.b16 %v1357, %v1355
      %v2034 = vpack.c.b16 %v1358, %v1356
      %v2035 = vpack.c.b16 %v1361, %v1359
      %v2036 = vpack.c.b16 %v1362, %v1360
      %v2037 = vpack.c.b16 %v1365, %v1363
      %v2038 = vpack.c.b16 %v1366, %v1364
      %v2039 = vpack.c.b16 %v1369, %v1367
      %v2040 = vpack.c.b16 %v1370, %v1368
      %v2041 = vpack.c.b16 %v1373, %v1371
      %v2042 = vpack.c.b16 %v1374, %v1372
      %v2043 = vpack.c.b16 %v1377, %v1375
      %v2044 = vpack.c.b16 %v1378, %v1376
      %v2045 = vpack.c.b16 %v1381, %v1379
      %v2046 = vpack.c.b16 %v1382, %v1380
      %v2047 = vpack.c.b16 %v1385, %v1383
      %v2048 = vpack.c.b16 %v1386, %v1384
      %v2049 = vpack.c.b16 %v1389, %v1387
      %v2050 = vpack.c.b16 %v1390, %v1388
      %v2051 = vpack.c.b16 %v1393, %v1391
      %v2052 = vpack.c.b16 %v1394, %v1392
      %v2053 = vpack.c.b16 %v1397, %v1395
      %v2054 = vpack.c.b16 %v1398, %v1396
      %v2055 = vpack.c.b16 %v1401, %v1399
      %v2056 = vpack.c.b16 %v1402, %v1400
      %v2057 = vpack.c.b16 %v1405, %v1403
      %v2058 = vpack.c.b16 %v1406, %v1404
      %v2059 = vpack.c.b16 %v1409, %v1407
      %v2060 = vpack.c.b16 %v1410, %v1408
      %v2061 = vpack.c.b16 %v1413, %v1411
      %v2062 = vpack.c.b16 %v1414, %v1412
      %v2063 = vpack.c.b16 %v1417, %v1415
      %v2064 = vpack.c.b16 %v1418, %v1416
      %v2065 = vpack.c.b16 %v1421, %v1419
      %v2066 = vpack.c.b16 %v1422, %v1420
      %v2067 = vpack.c.b16 %v1425, %v1423
      %v2068 = vpack.c.b16 %v1426, %v1424
      %v2069 = vpack.c.b16 %v1429, %v1427
      %v2070 = vpack.c.b16 %v1430, %v1428
      %v2071 = vpack.c.b16 %v1433, %v1431
      %v2072 = vpack.c.b16 %v1434, %v1432
      %v2073 = vpack.c.b16 %v1437, %v1435
      %v2074 = vpack.c.b16 %v1438, %v1436
      %v2075 = vpack.c.b16 %v1441, %v1439
      %v2076 = vpack.c.b16 %v1442, %v1440
      %v2077 = vpack.c.b16 %v1445, %v1443
      %v2078 = vpack.c.b16 %v1446, %v1444
      %v2079 = vpack.c.b16 %v1449, %v1447
      %v2080 = vpack.c.b16 %v1450, %v1448
      %v2081 = vpack.c.b16 %v1453, %v1451
      %v2082 = vpack.c.b16 %v1454, %v1452
      %v2083 = vpack.c.b16 %v1457, %v1455
      %v2084 = vpack.c.b16 %v1458, %v1456
      %v2085 = vpack.c.b16 %v1461, %v1459
      %v2086 = vpack.c.b16 %v1462, %v1460
      %v2087 = vpack.c.b16 %v1465, %v1463
      %v2088 = vpack.c.b16 %v1466, %v1464
      %v2089 = vpack.c.b16 %v1469, %v1467
      %v2090 = vpack.c.b16 %v1470, %v1468
      %v2091 = vpack.c.b16 %v1473, %v1471
      %v2092 = vpack.c.b16 %v1474, %v1472
      %v2093 = vpack.c.b16 %v1477, %v1475
      %v2094 = vpack.c.b16 %v1478, %v1476
      %v2095 = vpack.c.b16 %v1481, %v1479
      %v2096 = vpack.c.b16 %v1482, %v1480
      %v2097 = vpack.c.b16 %v1485, %v1483
      %v2098 = vpack.c.b16 %v1486, %v1484
      %v2099 = vpack.c.b16 %v1489, %v1487
      %v2100 = vpack.c.b16 %v1490, %v1488
      %v2101 = vpack.c.b16 %v1493, %v1491
      %v2102 = vpack.c.b16 %v1494, %v1492
      %v2103 = vpack.c.b16 %v1497, %v1495
      %v2104 = vpack.c.b16 %v1498, %v1496
      %v2105 = vpack.c.b16 %v1501, %v1499
      %v2106 = vpack.c.b16 %v1502, %v1500
      %v2107 = vpack.c.b16 %v1505, %v1503
      %v2108 = vpack.c.b16 %v1506, %v1504
      %v2109 = vpack.c.b16 %v1509, %v1507
      %v2110 = vpack.c.b16 %v1510, %v1508
      %v2111 = vpack.c.b16 %v1513, %v1511
      %v2112 = vpack.c.b16 %v1514, %v1512
      %v2113 = vpack.c.b16 %v1517, %v1515
      %v2114 = vpack.c.b16 %v1518, %v1516
      %v2115 = vpack.c.b16 %v1521, %v1519
      %v2116 = vpack.c.b16 %v1522, %v1520
      %v2117 = vpack.c.b16 %v1525, %v1523
      %v2118 = vpack.c.b16 %v1526, %v1524
      %v2119 = vpack.c.b16 %v1529, %v1527
      %v2120 = vpack.c.b16 %v1530, %v1528
      %v2121 = vpack.c.b16 %v1533, %v1531
      %v2122 = vpack.c.b16 %v1534, %v1532
      %v2123 = vpack.c.b16 %v1537, %v1535
      %v2124 = vpack.c.b16 %v1538, %v1536
      %v2125 = vpack.c.b16 %v1541, %v1539
      %v2126 = vpack.c.b16 %v1542, %v1540
      %v2127 = vpack.c.b16 %v1545, %v1543
      %v2128 = vpack.c.b16 %v1546, %v1544
      %v2129 = vpack.c.b16 %v1549, %v1547
      %v2130 = vpack.c.b16 %v1550, %v1548
      %v2131 = vpack.c.b16 %v1553, %v1551
      %v2132 = vpack.c.b16 %v1554, %v1552
      %v2133 = vpack.c.b16 %v1557, %v1555
      %v2134 = vpack.c.b16 %v1558, %v1556
      %v2135 = vpack.c.b16 %v1561, %v1559
      %v2136 = vpack.c.b16 %v1562, %v1560
      %v2137 = vpack.c.b16 %v1565, %v1563
      %v2138 = vpack.c.b16 %v1566, %v1564
      %v2139 = vpack.c.b16 %v1569, %v1567
      %v2140 = vpack.c.b16 %v1570, %v1568
      %v2141 = vpack.c.b16 %v1573, %v1571
      %v2142 = vpack.c.b16 %v1574, %v1572
      %v2143 = vpack.c.b16 %v1577, %v1575
      %v2144 = vpack.c.b16 %v1578, %v1576
      %v2145 = vpack.c.b16 %v1581, %v1579
      %v2146 = vpack.c.b16 %v1582, %v1580
      %v2147 = vpack.c.b16 %v1585, %v1583
      %v2148 = vpack.c.b16 %v1586, %v1584
      %v2149 = vpack.c.b16 %v1589, %v1587
      %v2150 = vpack.c.b16 %v1590, %v1588
      %v2151 = vpack.c.b16 %v1593, %v1591
      %v2152 = vpack.c.b16 %v1594, %v1592
      %v2153 = vpack.c.b16 %v1597, %v1595
      %v2154 = vpack.c.b16 %v1598, %v1596
      %v2155 = vpack.c.b16 %v1601, %v1599
      %v2156 = vpack.c.b16 %v1602, %v1600
      %v2157 = vpack.c.b16 %v1605, %v1603
      %v2158 = vpack.c.b16 %v1606, %v1604
      %v2159 = vpack.c.b16 %v1609, %v1607
      %v2160 = vpack.c.b16 %v1610, %v1608
      %v2161 = vpack.c.b16 %v1613, %v1611
      %v2162 = vpack.c.b16 %v1614, %v1612
      %v2163 = vpack.c.b16 %v1617, %v1615
      %v2164 = vpack.c.b16 %v1618, %v1616
      %v2165 = vpack.c.b16 %v1621, %v1619
      %v2166 = vpack.c.b16 %v1622, %v1620
      %v2167 = vpack.c.b16 %v1625, %v1623
      %v2168 = vpack.c.b16 %v1626, %v1624
      %v2169 = vpack.c.b16 %v1629, %v1627
      %v2170 = vpack.c.b16 %v1630, %v1628
      %v2171 = vpack.c.b16 %v1633, %v1631
      %v2172 = vpack.c.b16 %v1634, %v1632
      %v2173 = vpack.c.b16 %v1637, %v1635
      %v2174 = vpack.c.b16 %v1638, %v1636
      %v2175 = vpack.c.b16 %v1641, %v1639
      %v2176 = vpack.c.b16 %v1642, %v1640
      %v2177 = vpack.c.b16 %v1645, %v1643
      %v2178 = vpack.c.b16 %v1646, %v1644
      %v2179 = vpack.c.b16 %v1649, %v1647
      %v2180 = vpack.c.b16 %v1650, %v1648
      %v2181 = vpack.c.b16 %v1653, %v1651
      %v2182 = vpack.c.b16 %v1654, %v1652
      %v2183 = vpack.c.b16 %v1657, %v1655
      %v2184 = vpack.c.b16 %v1658, %v1656
      %v2185 = vpack.c.b16 %v1661, %v1659
      %v2186 = vpack.c.b16 %v1662, %v1660
      %v2187 = vpack.c.b16 %v1665, %v1663
      %v2188 = vpack.c.b16 %v1666, %v1664
      %v2189 = vpack.c.b16 %v1669, %v1667
      %v2190 = vpack.c.b16 %v1670, %v1668
      %v2191 = vpack.c.b16 %v1673, %v1671
      %v2192 = vpack.c.b16 %v1674, %v1672
      %v2193 = vpack.c.b16 %v1677, %v1675
      %v2194 = vpack.c.b16 %v1678, %v1676
      %v2195 = vpack.c.b16 %v1681, %v1679
      %v2196 = vpack.c.b16 %v1682, %v1680
      %v2197 = vpack.c.b16 %v1685, %v1683
      %v2198 = vpack.c.b16 %v1686, %v1684
      %v2199 = vpack.c.b16 %v1689, %v1687
      %v2200 = vpack.c.b16 %v1690, %v1688
      %v2201 = vpack.c.b16 %v1693, %v1691
      %v2202 = vpack.c.b16 %v1694, %v1692
      %v2203 = vpack.c.b16 %v1697, %v1695
      %v2204 = vpack.c.b16 %v1698, %v1696
      %v2205 = vpack.c.b16 %v1701, %v1699
      %v2206 = vpack.c.b16 %v1702, %v1700
      %v2207 = vpack.c.b16 %v1705, %v1703
      %v2208 = vpack.c.b16 %v1706, %v1704
      %v2209 = vpack.c.b16 %v1709, %v1707
      %v2210 = vpack.c.b16 %v1710, %v1708
      %v2211 = vpack.c.b16 %v1713, %v1711
      %v2212 = vpack.c.b16 %v1714, %v1712
      %v2213 = vpack.c.b16 %v1717, %v1715
      %v2214 = vpack.c.b16 %v1718, %v1716
      %v2215 = vpack.c.b16 %v1721, %v1719
      %v2216 = vpack.c.b16 %v1722, %v1720
      %v2217 = vpack.c.b16 %v1725, %v1723
      %v2218 = vpack.c.b16 %v1726, %v1724
      %v2219 = vpack.c.b16 %v1729, %v1727
      %v2220 = vpack.c.b16 %v1730, %v1728
      %v2221 = vpack.c.b16 %v1733, %v1731
      %v2222 = vpack.c.b16 %v1734, %v1732
      %v2223 = vpack.c.b16 %v1737, %v1735
      %v2224 = vpack.c.b16 %v1738, %v1736
      %v2225 = vpack.c.b16 %v1741, %v1739
      %v2226 = vpack.c.b16 %v1742, %v1740
      %v2227 = vpack.c.b16 %v1745, %v1743
      %v2228 = vpack.c.b16 %v1746, %v1744
      %v2229 = vpack.c.b16 %v1749, %v1747
      %v2230 = vpack.c.b16 %v1750, %v1748
      %v2231 = vpack.c.b16 %v1753, %v1751
      %v2232 = vpack.c.b16 %v1754, %v1752
      %v2233 = vpack.c.b16 %v1757, %v1755
      %v2234 = vpack.c.b16 %v1758, %v1756
      %v2235 = vpack.c.b16 %v1761, %v1759
      %v2236 = vpack.c.b16 %v1762, %v1760
      %v2237 = vpack.c.b16 %v1765, %v1763
      %v2238 = vpack.c.b16 %v1766, %v1764
      %v2239 = vpack.c.b16 %v1769, %v1767
      %v2240 = vpack.c.b16 %v1770, %v1768
      %v2241 = vpack.c.b16 %v1773, %v1771
      %v2242 = vpack.c.b16 %v1774, %v1772
      %v2243 = vpack.c.b16 %v1777, %v1775
      %v2244 = vpack.c.b16 %v1778, %v1776
      %v2245 = vpack.c.b16 %v1781, %v1779
      %v2246 = vpack.c.b16 %v1782, %v1780
      %v2247 = vpack.c.b16 %v1785, %v1783
      %v2248 = vpack.c.b16 %v1786, %v1784
      %v2249 = vpack.c.b16 %v1789, %v1787
      %v2250 = vpack.c.b16 %v1790, %v1788
      %v2251 = vpack.c.b16 %v1793, %v1791
      %v2252 = vpack.c.b16 %v1794, %v1792
      %v2253 = vpack.c.b16 %v1797, %v1795
      %v2254 = vpack.c.b16 %v1798, %v1796
      %v2255 = vpack.c.b16 %v1801, %v1799
      %v2256 = vpack.c.b16 %v1802, %v1800
      %v2257 = vpack.c.b16 %v1805, %v1803
      %v2258 = vpack.c.b16 %v1806, %v1804
      %v2259 = vpack.c.b16 %v1809, %v1807
      %v2260 = vpack.c.b16 %v1810, %v1808
      %v2261 = vpack.c.b16 %v1813, %v1811
      %v2262 = vpack.c.b16 %v1814, %v1812
      %v2263 = vpack.c.b16 %v1817, %v1815
      %v2264 = vpack.c.b16 %v1818, %v1816
      %v2265 = vpack.c.b16 %v1821, %v1819
      %v2266 = vpack.c.b16 %v1822, %v1820
      %v2267 = vpack.c.b16 %v1825, %v1823
      %v2268 = vpack.c.b16 %v1826, %v1824
      %v2269 = vpack.c.b16 %v1829, %v1827
      %v2270 = vpack.c.b16 %v1830, %v1828
      %v2271 = vpack.c.b16 %v1833, %v1831
      %v2272 = vpack.c.b16 %v1834, %v1832
      %v2273 = vpack.c.b16 %v1837, %v1835
      %v2274 = vpack.c.b16 %v1838, %v1836
      %v2275 = vpack.c.b16 %v1841, %v1839
      %v2276 = vpack.c.b16 %v1842, %v1840
      %v2277 = vpack.c.b16 %v1845, %v1843
      %v2278 = vpack.c.b16 %v1846, %v1844
      %v2279 = vpack.c.b16 %v1849, %v1847
      %v2280 = vpack.c.b16 %v1850, %v1848
      %v2281 = vpack.c.b16 %v1853, %v1851
      %v2282 = vpack.c.b16 %v1854, %v1852
      %v2283 = vpack.c.b16 %v1857, %v1855
      %v2284 = vpack.c.b16 %v1858, %v1856
      %v2285 = vpack.c.b16 %v1861, %v1859
      %v2286 = vpack.c.b16 %v1862, %v1860
      %v2287 = vpack.c.b16 %v1865, %v1863
      %v2288 = vpack.c.b16 %v1866, %v1864
      %v2289 = vpack.c.b16 %v1869, %v1867
      %v2290 = vpack.c.b16 %v1870, %v1868
      %v2291 = vpack.c.b16 %v1873, %v1871
      %v2292 = vpack.c.b16 %v1874, %v1872
      %v2293 = vpack.c.b16 %v1877, %v1875
      %v2294 = vpack.c.b16 %v1878, %v1876
      %v2295 = vpack.c.b16 %v1881, %v1879
      %v2296 = vpack.c.b16 %v1882, %v1880
      %v2297 = vpack.c.b16 %v1885, %v1883
      %v2298 = vpack.c.b16 %v1886, %v1884
      %v2299 = vpack.c.b16 %v1889, %v1887
      %v2300 = vpack.c.b16 %v1890, %v1888
      %v2301 = vpack.c.b16 %v1893, %v1891
      %v2302 = vpack.c.b16 %v1894, %v1892
      %v2303 = vpack.c.b16 %v1897, %v1895
      %v2304 = vpack.c.b16 %v1898, %v1896
      %v2305 = vpack.c.b16 %v1901, %v1899
      %v2306 = vpack.c.b16 %v1902, %v1900
      %v2307 = vpack.c.b16 %v1905, %v1903
      %v2308 = vpack.c.b16 %v1906, %v1904
      %v2309 = vpack.c.b16 %v1909, %v1907
      %v2310 = vpack.c.b16 %v1910, %v1908
      %2711 = vmatpush.bf16.msra.mxu0 %v1925
      %2712 = vmatpush.bf16.msra.mxu0 %v1923
      %2713 = vmatpush.bf16.msra.mxu0 %v1921
      %2714 = vmatpush.bf16.msra.mxu0 %v1919
      %2715 = vmatpush.bf16.msra.mxu0 %v1917
      %2716 = vmatpush.bf16.msra.mxu0 %v1915
      %2717 = vmatpush.bf16.msra.mxu0 %v1913
      %2718 = vmatpush.bf16.msra.mxu0 %v1911
      %2719 = vmatmul.bf16.gmra.mxu0 %v661
      %v2720 = vpop.f32.mrf.mxu0
      %v2721 = vadd.f32 0.0, %v2720
      %v2722 = vpop.f32.mrf.mxu0
      %2723 = vdwg.mxu0
      %2724 = vmatpush.bf16.msra.mxu0 %v1941
      %2725 = vmatpush.bf16.msra.mxu0 %v1939
      %2726 = vmatpush.bf16.msra.mxu0 %v1937
      %2727 = vmatpush.bf16.msra.mxu0 %v1935
      %2728 = vmatpush.bf16.msra.mxu0 %v1933
      %2729 = vmatpush.bf16.msra.mxu0 %v1931
      %2730 = vmatpush.bf16.msra.mxu0 %v1929
      %2731 = vmatpush.bf16.msra.mxu0 %v1927
      %2732 = vmatmul.bf16.gmra.mxu0 %v662
      %v2733 = vpop.f32.mrf.mxu0
      %v2734 = vadd.f32 %v2721, %v2733
      %v2735 = vpop.f32.mrf.mxu0
      %2736 = vdwg.mxu0
      %2737 = vmatpush.bf16.msra.mxu0 %v1957
      %2738 = vmatpush.bf16.msra.mxu0 %v1955
      %2739 = vmatpush.bf16.msra.mxu0 %v1953
      %2740 = vmatpush.bf16.msra.mxu0 %v1951
      %2741 = vmatpush.bf16.msra.mxu0 %v1949
      %2742 = vmatpush.bf16.msra.mxu0 %v1947
      %2743 = vmatpush.bf16.msra.mxu0 %v1945
      %2744 = vmatpush.bf16.msra.mxu0 %v1943
      %2745 = vmatmul.bf16.gmra.mxu0 %v663
      %v2746 = vpop.f32.mrf.mxu0
      %v2747 = vadd.f32 %v2734, %v2746
      %v2748 = vpop.f32.mrf.mxu0
      %2749 = vdwg.mxu0
      %2750 = vmatpush.bf16.msra.mxu0 %v1973
      %2751 = vmatpush.bf16.msra.mxu0 %v1971
      %2752 = vmatpush.bf16.msra.mxu0 %v1969
      %2753 = vmatpush.bf16.msra.mxu0 %v1967
      %2754 = vmatpush.bf16.msra.mxu0 %v1965
      %2755 = vmatpush.bf16.msra.mxu0 %v1963
      %2756 = vmatpush.bf16.msra.mxu0 %v1961
      %2757 = vmatpush.bf16.msra.mxu0 %v1959
      %2758 = vmatmul.bf16.gmra.mxu0 %v664
      %v2759 = vpop.f32.mrf.mxu0
      %v2760 = vadd.f32 %v2747, %v2759
      %v2761 = vpop.f32.mrf.mxu0
      %2762 = vdwg.mxu0
      %2763 = vmatpush.bf16.msra.mxu0 %v1989
      %2764 = vmatpush.bf16.msra.mxu0 %v1987
      %2765 = vmatpush.bf16.msra.mxu0 %v1985
      %2766 = vmatpush.bf16.msra.mxu0 %v1983
      %2767 = vmatpush.bf16.msra.mxu0 %v1981
      %2768 = vmatpush.bf16.msra.mxu0 %v1979
      %2769 = vmatpush.bf16.msra.mxu0 %v1977
      %2770 = vmatpush.bf16.msra.mxu0 %v1975
      %2771 = vmatmul.bf16.gmra.mxu0 %v665
      %v2772 = vpop.f32.mrf.mxu0
      %v2773 = vadd.f32 %v2760, %v2772
      %v2774 = vpop.f32.mrf.mxu0
      %2775 = vdwg.mxu0
      %2776 = vmatpush.bf16.msra.mxu0 %v2005
      %2777 = vmatpush.bf16.msra.mxu0 %v2003
      %2778 = vmatpush.bf16.msra.mxu0 %v2001
      %2779 = vmatpush.bf16.msra.mxu0 %v1999
      %2780 = vmatpush.bf16.msra.mxu0 %v1997
      %2781 = vmatpush.bf16.msra.mxu0 %v1995
      %2782 = vmatpush.bf16.msra.mxu0 %v1993
      %2783 = vmatpush.bf16.msra.mxu0 %v1991
      %2784 = vmatmul.bf16.gmra.mxu0 %v666
      %v2785 = vpop.f32.mrf.mxu0
      %v2786 = vadd.f32 %v2773, %v2785
      %v2787 = vpop.f32.mrf.mxu0
      %2788 = vdwg.mxu0
      %2789 = vmatpush.bf16.msra.mxu0 %v2021
      %2790 = vmatpush.bf16.msra.mxu0 %v2019
      %2791 = vmatpush.bf16.msra.mxu0 %v2017
      %2792 = vmatpush.bf16.msra.mxu0 %v2015
      %2793 = vmatpush.bf16.msra.mxu0 %v2013
      %2794 = vmatpush.bf16.msra.mxu0 %v2011
      %2795 = vmatpush.bf16.msra.mxu0 %v2009
      %2796 = vmatpush.bf16.msra.mxu0 %v2007
      %2797 = vmatmul.bf16.gmra.mxu0 %v667
      %v2798 = vpop.f32.mrf.mxu0
      %v2799 = vadd.f32 %v2786, %v2798
      %v2800 = vpop.f32.mrf.mxu0
      %2801 = vdwg.mxu0
      %2802 = vmatpush.bf16.msra.mxu0 %v2037
      %2803 = vmatpush.bf16.msra.mxu0 %v2035
      %2804 = vmatpush.bf16.msra.mxu0 %v2033
      %2805 = vmatpush.bf16.msra.mxu0 %v2031
      %2806 = vmatpush.bf16.msra.mxu0 %v2029
      %2807 = vmatpush.bf16.msra.mxu0 %v2027
      %2808 = vmatpush.bf16.msra.mxu0 %v2025
      %2809 = vmatpush.bf16.msra.mxu0 %v2023
      %2810 = vmatmul.bf16.gmra.mxu0 %v668
      %v2811 = vpop.f32.mrf.mxu0
      %v2812 = vadd.f32 %v2799, %v2811
      %v2813 = vpop.f32.mrf.mxu0
      %2814 = vdwg.mxu0
      %2815 = vmatpush.bf16.msra.mxu0 %v2053
      %2816 = vmatpush.bf16.msra.mxu0 %v2051
      %2817 = vmatpush.bf16.msra.mxu0 %v2049
      %2818 = vmatpush.bf16.msra.mxu0 %v2047
      %2819 = vmatpush.bf16.msra.mxu0 %v2045
      %2820 = vmatpush.bf16.msra.mxu0 %v2043
      %2821 = vmatpush.bf16.msra.mxu0 %v2041
      %2822 = vmatpush.bf16.msra.mxu0 %v2039
      %2823 = vmatmul.bf16.gmra.mxu0 %v669
      %v2824 = vpop.f32.mrf.mxu0
      %v2825 = vadd.f32 %v2812, %v2824
      %v2826 = vpop.f32.mrf.mxu0
      %2827 = vdwg.mxu0
      %2828 = vmatpush.bf16.msra.mxu0 %v2069
      %2829 = vmatpush.bf16.msra.mxu0 %v2067
      %2830 = vmatpush.bf16.msra.mxu0 %v2065
      %2831 = vmatpush.bf16.msra.mxu0 %v2063
      %2832 = vmatpush.bf16.msra.mxu0 %v2061
      %2833 = vmatpush.bf16.msra.mxu0 %v2059
      %2834 = vmatpush.bf16.msra.mxu0 %v2057
      %2835 = vmatpush.bf16.msra.mxu0 %v2055
      %2836 = vmatmul.bf16.gmra.mxu0 %v670
      %v2837 = vpop.f32.mrf.mxu0
      %v2838 = vadd.f32 %v2825, %v2837
      %v2839 = vpop.f32.mrf.mxu0
      %2840 = vdwg.mxu0
      %2841 = vmatpush.bf16.msra.mxu0 %v2085
      %2842 = vmatpush.bf16.msra.mxu0 %v2083
      %2843 = vmatpush.bf16.msra.mxu0 %v2081
      %2844 = vmatpush.bf16.msra.mxu0 %v2079
      %2845 = vmatpush.bf16.msra.mxu0 %v2077
      %2846 = vmatpush.bf16.msra.mxu0 %v2075
      %2847 = vmatpush.bf16.msra.mxu0 %v2073
      %2848 = vmatpush.bf16.msra.mxu0 %v2071
      %2849 = vmatmul.bf16.gmra.mxu0 %v671
      %v2850 = vpop.f32.mrf.mxu0
      %v2851 = vadd.f32 %v2838, %v2850
      %v2852 = vpop.f32.mrf.mxu0
      %2853 = vdwg.mxu0
      %2854 = vmatpush.bf16.msra.mxu0 %v2101
      %2855 = vmatpush.bf16.msra.mxu0 %v2099
      %2856 = vmatpush.bf16.msra.mxu0 %v2097
      %2857 = vmatpush.bf16.msra.mxu0 %v2095
      %2858 = vmatpush.bf16.msra.mxu0 %v2093
      %2859 = vmatpush.bf16.msra.mxu0 %v2091
      %2860 = vmatpush.bf16.msra.mxu0 %v2089
      %2861 = vmatpush.bf16.msra.mxu0 %v2087
      %2862 = vmatmul.bf16.gmra.mxu0 %v672
      %v2863 = vpop.f32.mrf.mxu0
      %v2864 = vadd.f32 %v2851, %v2863
      %v2865 = vpop.f32.mrf.mxu0
      %2866 = vdwg.mxu0
      %2867 = vmatpush.bf16.msra.mxu0 %v2117
      %2868 = vmatpush.bf16.msra.mxu0 %v2115
      %2869 = vmatpush.bf16.msra.mxu0 %v2113
      %2870 = vmatpush.bf16.msra.mxu0 %v2111
      %2871 = vmatpush.bf16.msra.mxu0 %v2109
      %2872 = vmatpush.bf16.msra.mxu0 %v2107
      %2873 = vmatpush.bf16.msra.mxu0 %v2105
      %2874 = vmatpush.bf16.msra.mxu0 %v2103
      %2875 = vmatmul.bf16.gmra.mxu0 %v673
      %v2876 = vpop.f32.mrf.mxu0
      %v2877 = vadd.f32 %v2864, %v2876
      %v2878 = vpop.f32.mrf.mxu0
      %2879 = vdwg.mxu0
      %2880 = vmatpush.bf16.msra.mxu0 %v2133
      %2881 = vmatpush.bf16.msra.mxu0 %v2131
      %2882 = vmatpush.bf16.msra.mxu0 %v2129
      %2883 = vmatpush.bf16.msra.mxu0 %v2127
      %2884 = vmatpush.bf16.msra.mxu0 %v2125
      %2885 = vmatpush.bf16.msra.mxu0 %v2123
      %2886 = vmatpush.bf16.msra.mxu0 %v2121
      %2887 = vmatpush.bf16.msra.mxu0 %v2119
      %2888 = vmatmul.bf16.gmra.mxu0 %v674
      %v2889 = vpop.f32.mrf.mxu0
      %v2890 = vadd.f32 %v2877, %v2889
      %v2891 = vpop.f32.mrf.mxu0
      %2892 = vdwg.mxu0
      %2893 = vmatpush.bf16.msra.mxu0 %v2149
      %2894 = vmatpush.bf16.msra.mxu0 %v2147
      %2895 = vmatpush.bf16.msra.mxu0 %v2145
      %2896 = vmatpush.bf16.msra.mxu0 %v2143
      %2897 = vmatpush.bf16.msra.mxu0 %v2141
      %2898 = vmatpush.bf16.msra.mxu0 %v2139
      %2899 = vmatpush.bf16.msra.mxu0 %v2137
      %2900 = vmatpush.bf16.msra.mxu0 %v2135
      %2901 = vmatmul.bf16.gmra.mxu0 %v675
      %v2902 = vpop.f32.mrf.mxu0
      %v2903 = vadd.f32 %v2890, %v2902
      %v2904 = vpop.f32.mrf.mxu0
      %2905 = vdwg.mxu0
      %2906 = vmatpush.bf16.msra.mxu0 %v2165
      %2907 = vmatpush.bf16.msra.mxu0 %v2163
      %2908 = vmatpush.bf16.msra.mxu0 %v2161
      %2909 = vmatpush.bf16.msra.mxu0 %v2159
      %2910 = vmatpush.bf16.msra.mxu0 %v2157
      %2911 = vmatpush.bf16.msra.mxu0 %v2155
      %2912 = vmatpush.bf16.msra.mxu0 %v2153
      %2913 = vmatpush.bf16.msra.mxu0 %v2151
      %2914 = vmatmul.bf16.gmra.mxu0 %v676
      %v2915 = vpop.f32.mrf.mxu0
      %v2916 = vadd.f32 %v2903, %v2915
      %v2917 = vpop.f32.mrf.mxu0
      %2918 = vdwg.mxu0
      %2919 = vmatpush.bf16.msra.mxu0 %v2181
      %2920 = vmatpush.bf16.msra.mxu0 %v2179
      %2921 = vmatpush.bf16.msra.mxu0 %v2177
      %2922 = vmatpush.bf16.msra.mxu0 %v2175
      %2923 = vmatpush.bf16.msra.mxu0 %v2173
      %2924 = vmatpush.bf16.msra.mxu0 %v2171
      %2925 = vmatpush.bf16.msra.mxu0 %v2169
      %2926 = vmatpush.bf16.msra.mxu0 %v2167
      %2927 = vmatmul.bf16.gmra.mxu0 %v677
      %v2928 = vpop.f32.mrf.mxu0
      %v2929 = vadd.f32 %v2916, %v2928
      %v2930 = vpop.f32.mrf.mxu0
      %2931 = vdwg.mxu0
      %2932 = vmatpush.bf16.msra.mxu0 %v2197
      %2933 = vmatpush.bf16.msra.mxu0 %v2195
      %2934 = vmatpush.bf16.msra.mxu0 %v2193
      %2935 = vmatpush.bf16.msra.mxu0 %v2191
      %2936 = vmatpush.bf16.msra.mxu0 %v2189
      %2937 = vmatpush.bf16.msra.mxu0 %v2187
      %2938 = vmatpush.bf16.msra.mxu0 %v2185
      %2939 = vmatpush.bf16.msra.mxu0 %v2183
      %2940 = vmatmul.bf16.gmra.mxu0 %v678
      %v2941 = vpop.f32.mrf.mxu0
      %v2942 = vadd.f32 %v2929, %v2941
      %v2943 = vpop.f32.mrf.mxu0
      %2944 = vdwg.mxu0
      %2945 = vmatpush.bf16.msra.mxu0 %v2213
      %2946 = vmatpush.bf16.msra.mxu0 %v2211
      %2947 = vmatpush.bf16.msra.mxu0 %v2209
      %2948 = vmatpush.bf16.msra.mxu0 %v2207
      %2949 = vmatpush.bf16.msra.mxu0 %v2205
      %2950 = vmatpush.bf16.msra.mxu0 %v2203
      %2951 = vmatpush.bf16.msra.mxu0 %v2201
      %2952 = vmatpush.bf16.msra.mxu0 %v2199
      %2953 = vmatmul.bf16.gmra.mxu0 %v679
      %v2954 = vpop.f32.mrf.mxu0
      %v2955 = vadd.f32 %v2942, %v2954
      %v2956 = vpop.f32.mrf.mxu0
      %2957 = vdwg.mxu0
      %2958 = vmatpush.bf16.msra.mxu0 %v2229
      %2959 = vmatpush.bf16.msra.mxu0 %v2227
      %2960 = vmatpush.bf16.msra.mxu0 %v2225
      %2961 = vmatpush.bf16.msra.mxu0 %v2223
      %2962 = vmatpush.bf16.msra.mxu0 %v2221
      %2963 = vmatpush.bf16.msra.mxu0 %v2219
      %2964 = vmatpush.bf16.msra.mxu0 %v2217
      %2965 = vmatpush.bf16.msra.mxu0 %v2215
      %2966 = vmatmul.bf16.gmra.mxu0 %v680
      %v2967 = vpop.f32.mrf.mxu0
      %v2968 = vadd.f32 %v2955, %v2967
      %v2969 = vpop.f32.mrf.mxu0
      %2970 = vdwg.mxu0
      %2971 = vmatpush.bf16.msra.mxu0 %v2245
      %2972 = vmatpush.bf16.msra.mxu0 %v2243
      %2973 = vmatpush.bf16.msra.mxu0 %v2241
      %2974 = vmatpush.bf16.msra.mxu0 %v2239
      %2975 = vmatpush.bf16.msra.mxu0 %v2237
      %2976 = vmatpush.bf16.msra.mxu0 %v2235
      %2977 = vmatpush.bf16.msra.mxu0 %v2233
      %2978 = vmatpush.bf16.msra.mxu0 %v2231
      %2979 = vmatmul.bf16.gmra.mxu0 %v681
      %v2980 = vpop.f32.mrf.mxu0
      %v2981 = vadd.f32 %v2968, %v2980
      %v2982 = vpop.f32.mrf.mxu0
      %2983 = vdwg.mxu0
      %2984 = vmatpush.bf16.msra.mxu0 %v2261
      %2985 = vmatpush.bf16.msra.mxu0 %v2259
      %2986 = vmatpush.bf16.msra.mxu0 %v2257
      %2987 = vmatpush.bf16.msra.mxu0 %v2255
      %2988 = vmatpush.bf16.msra.mxu0 %v2253
      %2989 = vmatpush.bf16.msra.mxu0 %v2251
      %2990 = vmatpush.bf16.msra.mxu0 %v2249
      %2991 = vmatpush.bf16.msra.mxu0 %v2247
      %2992 = vmatmul.bf16.gmra.mxu0 %v682
      %v2993 = vpop.f32.mrf.mxu0
      %v2994 = vadd.f32 %v2981, %v2993
      %v2995 = vpop.f32.mrf.mxu0
      %2996 = vdwg.mxu0
      %2997 = vmatpush.bf16.msra.mxu0 %v2277
      %2998 = vmatpush.bf16.msra.mxu0 %v2275
      %2999 = vmatpush.bf16.msra.mxu0 %v2273
      %3000 = vmatpush.bf16.msra.mxu0 %v2271
      %3001 = vmatpush.bf16.msra.mxu0 %v2269
      %3002 = vmatpush.bf16.msra.mxu0 %v2267
      %3003 = vmatpush.bf16.msra.mxu0 %v2265
      %3004 = vmatpush.bf16.msra.mxu0 %v2263
      %3005 = vmatmul.bf16.gmra.mxu0 %v683
      %v3006 = vpop.f32.mrf.mxu0
      %v3007 = vadd.f32 %v2994, %v3006
      %v3008 = vpop.f32.mrf.mxu0
      %3009 = vdwg.mxu0
      %3010 = vmatpush.bf16.msra.mxu0 %v2293
      %3011 = vmatpush.bf16.msra.mxu0 %v2291
      %3012 = vmatpush.bf16.msra.mxu0 %v2289
      %3013 = vmatpush.bf16.msra.mxu0 %v2287
      %3014 = vmatpush.bf16.msra.mxu0 %v2285
      %3015 = vmatpush.bf16.msra.mxu0 %v2283
      %3016 = vmatpush.bf16.msra.mxu0 %v2281
      %3017 = vmatpush.bf16.msra.mxu0 %v2279
      %3018 = vmatmul.bf16.gmra.mxu0 %v684
      %v3019 = vpop.f32.mrf.mxu0
      %v3020 = vadd.f32 %v3007, %v3019
      %v3021 = vpop.f32.mrf.mxu0
      %3022 = vdwg.mxu0
      %3023 = vmatpush.bf16.msra.mxu0 %v2309
      %3024 = vmatpush.bf16.msra.mxu0 %v2307
      %3025 = vmatpush.bf16.msra.mxu0 %v2305
      %3026 = vmatpush.bf16.msra.mxu0 %v2303
      %3027 = vmatpush.bf16.msra.mxu0 %v2301
      %3028 = vmatpush.bf16.msra.mxu0 %v2299
      %3029 = vmatpush.bf16.msra.mxu0 %v2297
      %3030 = vmatpush.bf16.msra.mxu0 %v2295
      %3031 = vmatmul.bf16.gmra.mxu0 %v685
      %v3032 = vpop.f32.mrf.mxu0
      %v3033 = vadd.f32 %v3020, %v3032
      %v3034 = vpop.f32.mrf.mxu0
      %3035 = vdwg.mxu0
      %3036 = vmatpush.bf16.msra.mxu0 %v1926
      %3037 = vmatpush.bf16.msra.mxu0 %v1924
      %3038 = vmatpush.bf16.msra.mxu0 %v1922
      %3039 = vmatpush.bf16.msra.mxu0 %v1920
      %3040 = vmatpush.bf16.msra.mxu0 %v1918
      %3041 = vmatpush.bf16.msra.mxu0 %v1916
      %3042 = vmatpush.bf16.msra.mxu0 %v1914
      %3043 = vmatpush.bf16.msra.mxu0 %v1912
      %3044 = vmatmul.bf16.gmra.mxu0 %v661
      %v3045 = vpop.f32.mrf.mxu0
      %v3046 = vadd.f32 0.0, %v3045
      %v3047 = vpop.f32.mrf.mxu0
      %3048 = vdwg.mxu0
      %3049 = vmatpush.bf16.msra.mxu0 %v1942
      %3050 = vmatpush.bf16.msra.mxu0 %v1940
      %3051 = vmatpush.bf16.msra.mxu0 %v1938
      %3052 = vmatpush.bf16.msra.mxu0 %v1936
      %3053 = vmatpush.bf16.msra.mxu0 %v1934
      %3054 = vmatpush.bf16.msra.mxu0 %v1932
      %3055 = vmatpush.bf16.msra.mxu0 %v1930
      %3056 = vmatpush.bf16.msra.mxu0 %v1928
      %3057 = vmatmul.bf16.gmra.mxu0 %v662
      %v3058 = vpop.f32.mrf.mxu0
      %v3059 = vadd.f32 %v3046, %v3058
      %v3060 = vpop.f32.mrf.mxu0
      %3061 = vdwg.mxu0
      %3062 = vmatpush.bf16.msra.mxu0 %v1958
      %3063 = vmatpush.bf16.msra.mxu0 %v1956
      %3064 = vmatpush.bf16.msra.mxu0 %v1954
      %3065 = vmatpush.bf16.msra.mxu0 %v1952
      %3066 = vmatpush.bf16.msra.mxu0 %v1950
      %3067 = vmatpush.bf16.msra.mxu0 %v1948
      %3068 = vmatpush.bf16.msra.mxu0 %v1946
      %3069 = vmatpush.bf16.msra.mxu0 %v1944
      %3070 = vmatmul.bf16.gmra.mxu0 %v663
      %v3071 = vpop.f32.mrf.mxu0
      %v3072 = vadd.f32 %v3059, %v3071
      %v3073 = vpop.f32.mrf.mxu0
      %3074 = vdwg.mxu0
      %3075 = vmatpush.bf16.msra.mxu0 %v1974
      %3076 = vmatpush.bf16.msra.mxu0 %v1972
      %3077 = vmatpush.bf16.msra.mxu0 %v1970
      %3078 = vmatpush.bf16.msra.mxu0 %v1968
      %3079 = vmatpush.bf16.msra.mxu0 %v1966
      %3080 = vmatpush.bf16.msra.mxu0 %v1964
      %3081 = vmatpush.bf16.msra.mxu0 %v1962
      %3082 = vmatpush.bf16.msra.mxu0 %v1960
      %3083 = vmatmul.bf16.gmra.mxu0 %v664
      %v3084 = vpop.f32.mrf.mxu0
      %v3085 = vadd.f32 %v3072, %v3084
      %v3086 = vpop.f32.mrf.mxu0
      %3087 = vdwg.mxu0
      %3088 = vmatpush.bf16.msra.mxu0 %v1990
      %3089 = vmatpush.bf16.msra.mxu0 %v1988
      %3090 = vmatpush.bf16.msra.mxu0 %v1986
      %3091 = vmatpush.bf16.msra.mxu0 %v1984
      %3092 = vmatpush.bf16.msra.mxu0 %v1982
      %3093 = vmatpush.bf16.msra.mxu0 %v1980
      %3094 = vmatpush.bf16.msra.mxu0 %v1978
      %3095 = vmatpush.bf16.msra.mxu0 %v1976
      %3096 = vmatmul.bf16.gmra.mxu0 %v665
      %v3097 = vpop.f32.mrf.mxu0
      %v3098 = vadd.f32 %v3085, %v3097
      %v3099 = vpop.f32.mrf.mxu0
      %3100 = vdwg.mxu0
      %3101 = vmatpush.bf16.msra.mxu0 %v2006
      %3102 = vmatpush.bf16.msra.mxu0 %v2004
      %3103 = vmatpush.bf16.msra.mxu0 %v2002
      %3104 = vmatpush.bf16.msra.mxu0 %v2000
      %3105 = vmatpush.bf16.msra.mxu0 %v1998
      %3106 = vmatpush.bf16.msra.mxu0 %v1996
      %3107 = vmatpush.bf16.msra.mxu0 %v1994
      %3108 = vmatpush.bf16.msra.mxu0 %v1992
      %3109 = vmatmul.bf16.gmra.mxu0 %v666
      %v3110 = vpop.f32.mrf.mxu0
      %v3111 = vadd.f32 %v3098, %v3110
      %v3112 = vpop.f32.mrf.mxu0
      %3113 = vdwg.mxu0
      %3114 = vmatpush.bf16.msra.mxu0 %v2022
      %3115 = vmatpush.bf16.msra.mxu0 %v2020
      %3116 = vmatpush.bf16.msra.mxu0 %v2018
      %3117 = vmatpush.bf16.msra.mxu0 %v2016
      %3118 = vmatpush.bf16.msra.mxu0 %v2014
      %3119 = vmatpush.bf16.msra.mxu0 %v2012
      %3120 = vmatpush.bf16.msra.mxu0 %v2010
      %3121 = vmatpush.bf16.msra.mxu0 %v2008
      %3122 = vmatmul.bf16.gmra.mxu0 %v667
      %v3123 = vpop.f32.mrf.mxu0
      %v3124 = vadd.f32 %v3111, %v3123
      %v3125 = vpop.f32.mrf.mxu0
      %3126 = vdwg.mxu0
      %3127 = vmatpush.bf16.msra.mxu0 %v2038
      %3128 = vmatpush.bf16.msra.mxu0 %v2036
      %3129 = vmatpush.bf16.msra.mxu0 %v2034
      %3130 = vmatpush.bf16.msra.mxu0 %v2032
      %3131 = vmatpush.bf16.msra.mxu0 %v2030
      %3132 = vmatpush.bf16.msra.mxu0 %v2028
      %3133 = vmatpush.bf16.msra.mxu0 %v2026
      %3134 = vmatpush.bf16.msra.mxu0 %v2024
      %3135 = vmatmul.bf16.gmra.mxu0 %v668
      %v3136 = vpop.f32.mrf.mxu0
      %v3137 = vadd.f32 %v3124, %v3136
      %v3138 = vpop.f32.mrf.mxu0
      %3139 = vdwg.mxu0
      %3140 = vmatpush.bf16.msra.mxu0 %v2054
      %3141 = vmatpush.bf16.msra.mxu0 %v2052
      %3142 = vmatpush.bf16.msra.mxu0 %v2050
      %3143 = vmatpush.bf16.msra.mxu0 %v2048
      %3144 = vmatpush.bf16.msra.mxu0 %v2046
      %3145 = vmatpush.bf16.msra.mxu0 %v2044
      %3146 = vmatpush.bf16.msra.mxu0 %v2042
      %3147 = vmatpush.bf16.msra.mxu0 %v2040
      %3148 = vmatmul.bf16.gmra.mxu0 %v669
      %v3149 = vpop.f32.mrf.mxu0
      %v3150 = vadd.f32 %v3137, %v3149
      %v3151 = vpop.f32.mrf.mxu0
      %3152 = vdwg.mxu0
      %3153 = vmatpush.bf16.msra.mxu0 %v2070
      %3154 = vmatpush.bf16.msra.mxu0 %v2068
      %3155 = vmatpush.bf16.msra.mxu0 %v2066
      %3156 = vmatpush.bf16.msra.mxu0 %v2064
      %3157 = vmatpush.bf16.msra.mxu0 %v2062
      %3158 = vmatpush.bf16.msra.mxu0 %v2060
      %3159 = vmatpush.bf16.msra.mxu0 %v2058
      %3160 = vmatpush.bf16.msra.mxu0 %v2056
      %3161 = vmatmul.bf16.gmra.mxu0 %v670
      %v3162 = vpop.f32.mrf.mxu0
      %v3163 = vadd.f32 %v3150, %v3162
      %v3164 = vpop.f32.mrf.mxu0
      %3165 = vdwg.mxu0
      %3166 = vmatpush.bf16.msra.mxu0 %v2086
      %3167 = vmatpush.bf16.msra.mxu0 %v2084
      %3168 = vmatpush.bf16.msra.mxu0 %v2082
      %3169 = vmatpush.bf16.msra.mxu0 %v2080
      %3170 = vmatpush.bf16.msra.mxu0 %v2078
      %3171 = vmatpush.bf16.msra.mxu0 %v2076
      %3172 = vmatpush.bf16.msra.mxu0 %v2074
      %3173 = vmatpush.bf16.msra.mxu0 %v2072
      %3174 = vmatmul.bf16.gmra.mxu0 %v671
      %v3175 = vpop.f32.mrf.mxu0
      %v3176 = vadd.f32 %v3163, %v3175
      %v3177 = vpop.f32.mrf.mxu0
      %3178 = vdwg.mxu0
      %3179 = vmatpush.bf16.msra.mxu0 %v2102
      %3180 = vmatpush.bf16.msra.mxu0 %v2100
      %3181 = vmatpush.bf16.msra.mxu0 %v2098
      %3182 = vmatpush.bf16.msra.mxu0 %v2096
      %3183 = vmatpush.bf16.msra.mxu0 %v2094
      %3184 = vmatpush.bf16.msra.mxu0 %v2092
      %3185 = vmatpush.bf16.msra.mxu0 %v2090
      %3186 = vmatpush.bf16.msra.mxu0 %v2088
      %3187 = vmatmul.bf16.gmra.mxu0 %v672
      %v3188 = vpop.f32.mrf.mxu0
      %v3189 = vadd.f32 %v3176, %v3188
      %v3190 = vpop.f32.mrf.mxu0
      %3191 = vdwg.mxu0
      %3192 = vmatpush.bf16.msra.mxu0 %v2118
      %3193 = vmatpush.bf16.msra.mxu0 %v2116
      %3194 = vmatpush.bf16.msra.mxu0 %v2114
      %3195 = vmatpush.bf16.msra.mxu0 %v2112
      %3196 = vmatpush.bf16.msra.mxu0 %v2110
      %3197 = vmatpush.bf16.msra.mxu0 %v2108
      %3198 = vmatpush.bf16.msra.mxu0 %v2106
      %3199 = vmatpush.bf16.msra.mxu0 %v2104
      %3200 = vmatmul.bf16.gmra.mxu0 %v673
      %v3201 = vpop.f32.mrf.mxu0
      %v3202 = vadd.f32 %v3189, %v3201
      %v3203 = vpop.f32.mrf.mxu0
      %3204 = vdwg.mxu0
      %3205 = vmatpush.bf16.msra.mxu0 %v2134
      %3206 = vmatpush.bf16.msra.mxu0 %v2132
      %3207 = vmatpush.bf16.msra.mxu0 %v2130
      %3208 = vmatpush.bf16.msra.mxu0 %v2128
      %3209 = vmatpush.bf16.msra.mxu0 %v2126
      %3210 = vmatpush.bf16.msra.mxu0 %v2124
      %3211 = vmatpush.bf16.msra.mxu0 %v2122
      %3212 = vmatpush.bf16.msra.mxu0 %v2120
      %3213 = vmatmul.bf16.gmra.mxu0 %v674
      %v3214 = vpop.f32.mrf.mxu0
      %v3215 = vadd.f32 %v3202, %v3214
      %v3216 = vpop.f32.mrf.mxu0
      %3217 = vdwg.mxu0
      %3218 = vmatpush.bf16.msra.mxu0 %v2150
      %3219 = vmatpush.bf16.msra.mxu0 %v2148
      %3220 = vmatpush.bf16.msra.mxu0 %v2146
      %3221 = vmatpush.bf16.msra.mxu0 %v2144
      %3222 = vmatpush.bf16.msra.mxu0 %v2142
      %3223 = vmatpush.bf16.msra.mxu0 %v2140
      %3224 = vmatpush.bf16.msra.mxu0 %v2138
      %3225 = vmatpush.bf16.msra.mxu0 %v2136
      %3226 = vmatmul.bf16.gmra.mxu0 %v675
      %v3227 = vpop.f32.mrf.mxu0
      %v3228 = vadd.f32 %v3215, %v3227
      %v3229 = vpop.f32.mrf.mxu0
      %3230 = vdwg.mxu0
      %3231 = vmatpush.bf16.msra.mxu0 %v2166
      %3232 = vmatpush.bf16.msra.mxu0 %v2164
      %3233 = vmatpush.bf16.msra.mxu0 %v2162
      %3234 = vmatpush.bf16.msra.mxu0 %v2160
      %3235 = vmatpush.bf16.msra.mxu0 %v2158
      %3236 = vmatpush.bf16.msra.mxu0 %v2156
      %3237 = vmatpush.bf16.msra.mxu0 %v2154
      %3238 = vmatpush.bf16.msra.mxu0 %v2152
      %3239 = vmatmul.bf16.gmra.mxu0 %v676
      %v3240 = vpop.f32.mrf.mxu0
      %v3241 = vadd.f32 %v3228, %v3240
      %v3242 = vpop.f32.mrf.mxu0
      %3243 = vdwg.mxu0
      %3244 = vmatpush.bf16.msra.mxu0 %v2182
      %3245 = vmatpush.bf16.msra.mxu0 %v2180
      %3246 = vmatpush.bf16.msra.mxu0 %v2178
      %3247 = vmatpush.bf16.msra.mxu0 %v2176
      %3248 = vmatpush.bf16.msra.mxu0 %v2174
      %3249 = vmatpush.bf16.msra.mxu0 %v2172
      %3250 = vmatpush.bf16.msra.mxu0 %v2170
      %3251 = vmatpush.bf16.msra.mxu0 %v2168
      %3252 = vmatmul.bf16.gmra.mxu0 %v677
      %v3253 = vpop.f32.mrf.mxu0
      %v3254 = vadd.f32 %v3241, %v3253
      %v3255 = vpop.f32.mrf.mxu0
      %3256 = vdwg.mxu0
      %3257 = vmatpush.bf16.msra.mxu0 %v2198
      %3258 = vmatpush.bf16.msra.mxu0 %v2196
      %3259 = vmatpush.bf16.msra.mxu0 %v2194
      %3260 = vmatpush.bf16.msra.mxu0 %v2192
      %3261 = vmatpush.bf16.msra.mxu0 %v2190
      %3262 = vmatpush.bf16.msra.mxu0 %v2188
      %3263 = vmatpush.bf16.msra.mxu0 %v2186
      %3264 = vmatpush.bf16.msra.mxu0 %v2184
      %3265 = vmatmul.bf16.gmra.mxu0 %v678
      %v3266 = vpop.f32.mrf.mxu0
      %v3267 = vadd.f32 %v3254, %v3266
      %v3268 = vpop.f32.mrf.mxu0
      %3269 = vdwg.mxu0
      %3270 = vmatpush.bf16.msra.mxu0 %v2214
      %3271 = vmatpush.bf16.msra.mxu0 %v2212
      %3272 = vmatpush.bf16.msra.mxu0 %v2210
      %3273 = vmatpush.bf16.msra.mxu0 %v2208
      %3274 = vmatpush.bf16.msra.mxu0 %v2206
      %3275 = vmatpush.bf16.msra.mxu0 %v2204
      %3276 = vmatpush.bf16.msra.mxu0 %v2202
      %3277 = vmatpush.bf16.msra.mxu0 %v2200
      %3278 = vmatmul.bf16.gmra.mxu0 %v679
      %v3279 = vpop.f32.mrf.mxu0
      %v3280 = vadd.f32 %v3267, %v3279
      %v3281 = vpop.f32.mrf.mxu0
      %3282 = vdwg.mxu0
      %3283 = vmatpush.bf16.msra.mxu0 %v2230
      %3284 = vmatpush.bf16.msra.mxu0 %v2228
      %3285 = vmatpush.bf16.msra.mxu0 %v2226
      %3286 = vmatpush.bf16.msra.mxu0 %v2224
      %3287 = vmatpush.bf16.msra.mxu0 %v2222
      %3288 = vmatpush.bf16.msra.mxu0 %v2220
      %3289 = vmatpush.bf16.msra.mxu0 %v2218
      %3290 = vmatpush.bf16.msra.mxu0 %v2216
      %3291 = vmatmul.bf16.gmra.mxu0 %v680
      %v3292 = vpop.f32.mrf.mxu0
      %v3293 = vadd.f32 %v3280, %v3292
      %v3294 = vpop.f32.mrf.mxu0
      %3295 = vdwg.mxu0
      %3296 = vmatpush.bf16.msra.mxu0 %v2246
      %3297 = vmatpush.bf16.msra.mxu0 %v2244
      %3298 = vmatpush.bf16.msra.mxu0 %v2242
      %3299 = vmatpush.bf16.msra.mxu0 %v2240
      %3300 = vmatpush.bf16.msra.mxu0 %v2238
      %3301 = vmatpush.bf16.msra.mxu0 %v2236
      %3302 = vmatpush.bf16.msra.mxu0 %v2234
      %3303 = vmatpush.bf16.msra.mxu0 %v2232
      %3304 = vmatmul.bf16.gmra.mxu0 %v681
      %v3305 = vpop.f32.mrf.mxu0
      %v3306 = vadd.f32 %v3293, %v3305
      %v3307 = vpop.f32.mrf.mxu0
      %3308 = vdwg.mxu0
      %3309 = vmatpush.bf16.msra.mxu0 %v2262
      %3310 = vmatpush.bf16.msra.mxu0 %v2260
      %3311 = vmatpush.bf16.msra.mxu0 %v2258
      %3312 = vmatpush.bf16.msra.mxu0 %v2256
      %3313 = vmatpush.bf16.msra.mxu0 %v2254
      %3314 = vmatpush.bf16.msra.mxu0 %v2252
      %3315 = vmatpush.bf16.msra.mxu0 %v2250
      %3316 = vmatpush.bf16.msra.mxu0 %v2248
      %3317 = vmatmul.bf16.gmra.mxu0 %v682
      %v3318 = vpop.f32.mrf.mxu0
      %v3319 = vadd.f32 %v3306, %v3318
      %v3320 = vpop.f32.mrf.mxu0
      %3321 = vdwg.mxu0
      %3322 = vmatpush.bf16.msra.mxu0 %v2278
      %3323 = vmatpush.bf16.msra.mxu0 %v2276
      %3324 = vmatpush.bf16.msra.mxu0 %v2274
      %3325 = vmatpush.bf16.msra.mxu0 %v2272
      %3326 = vmatpush.bf16.msra.mxu0 %v2270
      %3327 = vmatpush.bf16.msra.mxu0 %v2268
      %3328 = vmatpush.bf16.msra.mxu0 %v2266
      %3329 = vmatpush.bf16.msra.mxu0 %v2264
      %3330 = vmatmul.bf16.gmra.mxu0 %v683
      %v3331 = vpop.f32.mrf.mxu0
      %v3332 = vadd.f32 %v3319, %v3331
      %v3333 = vpop.f32.mrf.mxu0
      %3334 = vdwg.mxu0
      %3335 = vmatpush.bf16.msra.mxu0 %v2294
      %3336 = vmatpush.bf16.msra.mxu0 %v2292
      %3337 = vmatpush.bf16.msra.mxu0 %v2290
      %3338 = vmatpush.bf16.msra.mxu0 %v2288
      %3339 = vmatpush.bf16.msra.mxu0 %v2286
      %3340 = vmatpush.bf16.msra.mxu0 %v2284
      %3341 = vmatpush.bf16.msra.mxu0 %v2282
      %3342 = vmatpush.bf16.msra.mxu0 %v2280
      %3343 = vmatmul.bf16.gmra.mxu0 %v684
      %v3344 = vpop.f32.mrf.mxu0
      %v3345 = vadd.f32 %v3332, %v3344
      %v3346 = vpop.f32.mrf.mxu0
      %3347 = vdwg.mxu0
      %3348 = vmatpush.bf16.msra.mxu0 %v2310
      %3349 = vmatpush.bf16.msra.mxu0 %v2308
      %3350 = vmatpush.bf16.msra.mxu0 %v2306
      %3351 = vmatpush.bf16.msra.mxu0 %v2304
      %3352 = vmatpush.bf16.msra.mxu0 %v2302
      %3353 = vmatpush.bf16.msra.mxu0 %v2300
      %3354 = vmatpush.bf16.msra.mxu0 %v2298
      %3355 = vmatpush.bf16.msra.mxu0 %v2296
      %3356 = vmatmul.bf16.gmra.mxu0 %v685
      %v3357 = vpop.f32.mrf.mxu0
      %v3358 = vadd.f32 %v3345, %v3357
      %v3359 = vpop.f32.mrf.mxu0
      %3360 = vdwg.mxu0
      %p3361 = scmp.eq.s32.totalorder %s19, 0
      %p3362 = scmp.eq.s32.totalorder %s20, 0
      %p3363 = pnand %p3361, %p3362
      %p3364 = pneg %p3363
      // Predicated region
      $region37: #{discriminator_forward.6} parent=35 // pred_check
        _
      $region38: #{discriminator_forward.6} parent=35 // pred_check_branch
        %3366 = sbr.rel (%p3363) target = $region40
      $region39: #{discriminator_forward.6} parent=35 // pred_region
        %v3367 = vlaneseq
        %vm3368 = vcmp.ge.s32.totalorder %v3367, 0
        %vm3369 = vcmp.lt.s32.totalorder %v3367, 256
        %vm3370 = vmand %vm3368, %vm3369
        %3371 = vst.msk [vmem:[#allocation2] sm:$0x3] %vm3370, 0.0
        %3372 = vst.msk [vmem:[#allocation3] sm:$0x3] %vm3370, 0.0
      $region40: #{discriminator_forward.6} parent=35 // pred_fallthru
        _
      // Predicated region
      $region41: #{discriminator_forward.6} parent=35 // pred_check
        %p3373 = pneg %p3361
      $region42: #{discriminator_forward.6} parent=35 // pred_check_branch
        %3375 = sbr.rel (%p3373) target = $region44
      $region43: #{discriminator_forward.6} parent=35 // pred_region
        %v3376 = vld [vmem:[#allocation2] sm:$0x3]
        %v3377 = vrot.slane %v3033, 4
        %v3378 = vadd.f32 %v3033, %v3377
        %v3379 = vrot.slane %v3378, 2
        %v3380 = vadd.f32 %v3378, %v3379
        %v3381 = vrot.slane %v3380, 1
        %v3382 = vadd.f32 %v3380, %v3381
        %v3383 = vrot.slane %v3358, 4
        %v3384 = vadd.f32 %v3358, %v3383
        %v3385 = vrot.slane %v3384, 2
        %v3386 = vadd.f32 %v3384, %v3385
        %v3387 = vrot.slane %v3386, 1
        %v3388 = vadd.f32 %v3386, %v3387
        %v3391 = vrot.slane %v3388, 7
        %vm3392 = vcmask 1040384
        %v3393 = vsel %vm3392, %v3382, %v3391
        %v3395 = vadd.f32 %v3376, %v3393
        %v3396 = vlaneseq
        %vm3397 = vcmp.ge.s32.totalorder %v3396, 0
        %vm3398 = vcmp.lt.s32.totalorder %v3396, 256
        %vm3399 = vmand %vm3397, %vm3398
        %3400 = vst.msk [vmem:[#allocation2] sm:$0x3] %vm3399, %v3395
        %v3401 = vld [vmem:[#allocation3] sm:$0x3]
        %v3402 = vmul.f32 %v3033, %v3033
        %v3403 = vmul.f32 %v3358, %v3358
        %v3404 = vrot.slane %v3402, 4
        %v3405 = vadd.f32 %v3402, %v3404
        %v3406 = vrot.slane %v3405, 2
        %v3407 = vadd.f32 %v3405, %v3406
        %v3408 = vrot.slane %v3407, 1
        %v3409 = vadd.f32 %v3407, %v3408
        %v3410 = vrot.slane %v3403, 4
        %v3411 = vadd.f32 %v3403, %v3410
        %v3412 = vrot.slane %v3411, 2
        %v3413 = vadd.f32 %v3411, %v3412
        %v3414 = vrot.slane %v3413, 1
        %v3415 = vadd.f32 %v3413, %v3414
        %v3418 = vrot.slane %v3415, 7
        %v3419 = vsel %vm3392, %v3409, %v3418
        %v3421 = vadd.f32 %v3401, %v3419
        %3422 = vst.msk [vmem:[#allocation3] sm:$0x3] %vm3399, %v3421
        %3423 = vst [vmem:[%s209] sm:$0xff] 0.0
        %3424 = vst [vmem:[%s209 + $0x8] sm:$0xff] 0.0
      $region44: #{discriminator_forward.6} parent=35 // pred_fallthru
        _
      %p3425 = scmp.eq.s32.totalorder %s19, 1
      // Predicated region
      $region45: #{discriminator_forward.6} parent=35 // pred_check
        %p3426 = pneg %p3425
      $region46: #{discriminator_forward.6} parent=35 // pred_check_branch
        %3428 = sbr.rel (%p3426) target = $region48
      $region47: #{discriminator_forward.6} parent=35 // pred_region
        %v3429 = vld [vmem:[#allocation2] sm:$0x3]
        %v3430 = vmul.f32 %v3429, 0.125
        %v3431 = vld [vmem:[#allocation3] sm:$0x3]
        %v3432 = vmul.f32 %v3431, 0.125
        %v3433 = vmul.f32 %v3430, %v3430
        %v3434 = vsub.f32 %v3432, %v3433
        %v3435 = vmax.f32 %v3434, 0.0
        %v3436 = vadd.f32 %v3435, 1e-05
        %v3437 = vrsqrt.pop %v3436
        %v3438 = vmul.f32 %v3437, %v3436
        %v3439 = vmul.f32 %v3438, %v3437
        %v3440 = vmul.f32 0.5, %v3439
        %v3441 = vsub.f32 1.5, %v3440
        %v3442 = vmul.f32 %v3437, %v3441
        %vm3443 = vweird.f32 %v3436
        %vm3444 = vweird.f32 %v3437
        %vm3445 = vmor %vm3443, %vm3444
        %v3446 = vsel %vm3445, %v3437, %v3442
        %v3448 = vperm.slane %v3430, 0
        %v3449 = vperm.slane %v3430, 1
        %v3452 = vsub.f32 %v3033, %v3448
        %v3453 = vsub.f32 %v3358, %v3449
        %v3454 = vld [vmem:[%s2] sm:$0x3]
        %v3455 = vmul.f32 %v3446, %v3454
        %v3457 = vperm.slane %v3455, 0
        %v3458 = vperm.slane %v3455, 1
        %v3461 = vmul.f32 %v3452, %v3457
        %v3462 = vmul.f32 %v3453, %v3458
        %v3463 = vld [vmem:[%s3] sm:$0x3]
        %v3465 = vperm.slane %v3463, 0
        %v3466 = vperm.slane %v3463, 1
        %v3469 = vadd.f32 %v3461, %v3465
        %v3470 = vadd.f32 %v3462, %v3466
        %v3471 = vmax.f32 %v3469, 0.0
        %v3472 = vmax.f32 %v3470, 0.0
        %3473 = vst [vmem:[%s209] sm:$0xff] %v3471
        %3474 = vst [vmem:[%s209 + $0x8] sm:$0xff] %v3472
      $region48: #{discriminator_forward.6} parent=35 // pred_fallthru
        _
      %p3475 = scmp.lt.s32.totalorder %s20, 0
      %s3476 = scalar_select %p3475, %s20, 0
      %s3477 = smul.addr %s3476, 2
      %s3478 = smul.addr %s3477, 8
      %s3479 = scalar_lea.vmem %s4, %s3478
      // Predicated region
      $region49: #{discriminator_forward.6} parent=35 // pred_check
        %p3480 = pneg %p134
      $region50: #{discriminator_forward.6} parent=35 // pred_check_branch
        %3482 = sbr.rel (%p3480) target = $region52
      $region51: #{discriminator_forward.6} parent=35 // pred_region
        _
      $region52: #{discriminator_forward.6} parent=35 // pred_fallthru
        _
      // Predicated region
      $region53: #{discriminator_forward.6} parent=35 // pred_check
        %p3483 = pneg %p134
      $region54: #{discriminator_forward.6} parent=35 // pred_check_branch
        %3485 = sbr.rel (%p3483) target = $region56
      $region55: #{discriminator_forward.6} parent=35 // pred_region
        %p3486 = scmp.lt.s32.totalorder %s20, 0
        %s3487 = scalar_select %p3486, %s20, 0
        %s3488 = smul.addr %s3487, 2
        %s3489 = smul.addr %s3488, 8
        %s3490 = scalar_lea.vmem %s4, %s3489
      $region56: #{discriminator_forward.6} parent=35 // pred_fallthru
        _
    $region36: #{discriminator_forward.6} parent=5 // pred_fallthru
      _
    %p3491 = scmp.le.s32.totalorder 2, %s10
    // Predicated region
    $region57: #{discriminator_forward.6} parent=5 // pred_check
      %p3492 = pneg %p3491
    $region58: #{discriminator_forward.6} parent=5 // pred_check_branch
      %3494 = sbr.rel (%p3492) target = $region60
    $region59: #{discriminator_forward.6} parent=5 // pred_region
      %s3495 = ssub.s32 %s10, 2
    $region60: #{discriminator_forward.6} parent=5 // pred_fallthru
      _
  $region6: #{discriminator_forward.6} parent=0 // loop_footer
    %s14 = sadd.s32 1, %s10
  $region7: #{discriminator_forward.6} parent=0 // loop_footer_branch
    %9 = sbr.rel target = $region3
  $region8: #{discriminator_forward.6} parent=0 // loop_exit
    _

</llo_original>
